<compile_context>
chip_gen: v5e
topology: v5e:2x2
jax: 0.10.0
libtpu: 0.0.40
codegen_flags: <defaults>
</compile_context>

<pallas_src>
import numpy as np
import jax
import jax.numpy as jnp
from jax import lax
from jax.experimental import pallas as pl
from jax.experimental.pallas import tpu as pltpu


# ------------------------------ fused kernel --------------------------------

def lenet_fused_kernel(x_ref,      # (TB*32, 128)  rows = b*32+h, lanes = ci*32+w (96 valid)
                       t1_ref,     # (640, 256)    conv1 Toeplitz, kh folded into K, parity on N
                       t2_ref,     # (640, 256)    conv2 Toeplitz
                       w1_ref,     # (640, 128)    fc1 (torch NCHW flatten order pre-permuted)
                       sp_ref,     # (264, 128)    packed small params (biases, fc2, fc3.fc4)
                       o_ref,      # (TB, 4)
                       zbuf_ref):  # (TB*32, 128)  VMEM scratch for the pooled conv2 output
    f32 = jnp.float32
    H = x_ref.shape[0]             # TB * 32
    TB = o_ref.shape[0]

    # ---- conv1 + bias + ReLU + 2x2 width-pool: ONE MXU matmul (K=640, N=256) ----
    M1 = H - 4
    lhs1 = jnp.concatenate([x_ref[kh:kh + M1, :] for kh in range(5)], axis=1)    # (M1, 640)
    acc1 = jnp.dot(lhs1, t1_ref[...], preferred_element_type=f32)                # (M1, 256)
    be1 = sp_ref[0:1, :]
    zw1 = jnp.maximum(jnp.maximum(acc1[:, :128], acc1[:, 128:]) + be1, 0.0)      # (M1, 128)

    # ---- height-pool 1: pooled value lives at rows b*32 + 2*hp ------------------
    M1p = M1 - 1
    z1p = jnp.maximum(zw1[0:M1p, :], zw1[1:M1p + 1, :])                           # (H-5, 128)

    # ---- conv2 + bias + ReLU + 2x2 width-pool: ONE MXU matmul ------------------
    M2 = M1p - 8
    lhs2 = jnp.concatenate([z1p[2 * k:2 * k + M2, :] for k in range(5)], axis=1)  # (M2, 640)
    acc2 = jnp.dot(lhs2, t2_ref[...], preferred_element_type=f32)                 # (M2, 256)
    be2 = sp_ref[1:2, :]
    zw2 = jnp.maximum(jnp.maximum(acc2[:, :128], acc2[:, 128:]) + be2, 0.0)       # (M2, 128)

    # ---- height-pool 2: pooled value lives at rows b*32 + 4*hp2 -----------------
    M2p = M2 - 2
    z2p = jnp.maximum(zw2[0:M2p, :], zw2[2:M2p + 2, :])                            # (H-15, 128)

    # ---- gather the 5 valid rows per image (stride 32) into a dense (TB, 640) ---
    zbuf_ref[0:M2p, :] = z2p
    zflat = jnp.concatenate(
        [zbuf_ref[pl.ds(4 * hp, TB, stride=32), :] for hp in range(5)], axis=1)   # (TB, 640)

    # ---- batched FC stack (fc3 and fc4 fused offline) ---------------------------
    b1 = sp_ref[2:3, :]
    h = jnp.maximum(jnp.dot(zflat, w1_ref[...], preferred_element_type=f32) + b1, 0.0)
    w2 = sp_ref[8:136, :]
    b2 = sp_ref[3:4, :]
    h = jnp.maximum(jnp.dot(h, w2, preferred_element_type=f32) + b2, 0.0)
    w34 = sp_ref[136:264, :]
    b34 = sp_ref[4:5, :]
    y = jnp.dot(h, w34, preferred_element_type=f32) + b34                          # (TB, 128)
    o_ref[...] = y[:, 0:4]


# ----------------------- one-time weight transforms --------------------------

def _conv_toeplitz(w_oihw, w_in, n_wp, row_order):
    """Packed Toeplitz conv matrix of shape (5*128, 256).

    rows : kh*128 + r, r = ci*w_in + w ('cw') or w*cin + ci ('wc'); pad rows zero.
    cols : parity*128 + (wp*cout + co); pad cols zero.
    value: w_oihw[co, ci, kh, w - (2*wp + parity)] (0 outside the 5-tap kernel).
    A matmul of the h-shifted input rows against this computes conv + width-pool
    parities in one shot.
    """
    cout, cin, kh_n, kw_n = w_oihw.shape
    kw_idx = (np.arange(w_in)[:, None, None]
              - (2 * np.arange(n_wp)[None, None, :] + np.arange(2)[None, :, None]))
    valid = (kw_idx >= 0) & (kw_idx < kw_n)                        # (w_in, 2, n_wp)
    wt = jnp.transpose(w_oihw, (2, 1, 3, 0))                       # (KH, Cin, KW, Cout)
    t = wt[:, :, np.clip(kw_idx, 0, kw_n - 1), :]                  # (KH,Cin,W,2,n_wp,Cout)
    t = t * jnp.asarray(valid, jnp.float32)[None, None, :, :, :, None]
    if row_order == "wc":
        t = jnp.transpose(t, (0, 2, 1, 3, 4, 5))                   # (KH, W, Cin, ...)
    t = t.reshape(kh_n, cin * w_in, 2, n_wp * cout)
    full = jnp.zeros((kh_n, 128, 2, 128), jnp.float32)
    full = full.at[:, :cin * w_in, :, :n_wp * cout].set(t)
    return full.reshape(kh_n * 128, 256)


def build_fused_params(params):
    f32 = jnp.float32
    t1 = _conv_toeplitz(params["conv1_w"], 32, 14, "cw")           # (640, 256)
    t2 = _conv_toeplitz(params["conv2_w"], 14, 5, "wc")            # (640, 256)

    # fc1: permute columns once to the kernel's (hp2, wp2, c2) lane order so the
    # torch NCHW view(-1, 400) needs no activation transpose; pad to 128 lanes.
    w1 = params["fc1_w"].T.reshape(16, 5, 5, 120)                  # (c2, hp2, wp2, j)
    w1 = jnp.transpose(w1, (1, 2, 0, 3)).reshape(5, 80, 120)
    w1f = jnp.zeros((5, 128, 128), f32).at[:, :80, :120].set(w1).reshape(640, 128)

    # fc3 . fc4 fused offline (no ReLU between them).
    w34 = params["fc3_w"].T @ params["fc4_w"].T                    # (84, 4)
    b34 = params["fc3_b"] @ params["fc4_w"].T + params["fc4_b"]    # (4,)

    w2f = jnp.zeros((128, 128), f32).at[:120, :84].set(params["fc2_w"].T)
    w34f = jnp.zeros((128, 128), f32).at[:84, :4].set(w34)

    # Pack all the small parameters into a single lane-dense array.
    sp = jnp.zeros((264, 128), f32)
    sp = sp.at[0, :84].set(jnp.tile(params["conv1_b"], 14))
    sp = sp.at[1, :80].set(jnp.tile(params["conv2_b"], 5))
    sp = sp.at[2, :120].set(params["fc1_b"])
    sp = sp.at[3, :84].set(params["fc2_b"])
    sp = sp.at[4, :4].set(b34)
    sp = sp.at[8:136, :].set(w2f)
    sp = sp.at[136:264, :].set(w34f)
    return t1, t2, w1f, sp


# --------------------------------- wrapper -----------------------------------

def lenet_pallas_forward(x_nchw, params):
    B = x_nchw.shape[0]
    TB = 32 if B >= 64 else 8           # images per grid step (>=2 steps when possible)
    B_pad = ((B + TB - 1) // TB) * TB
    H = TB * 32

    t1, t2, w1f, sp = build_fused_params(params)

    xp = x_nchw
    if B_pad != B:
        xp = jnp.pad(xp, ((0, B_pad - B), (0, 0), (0, 0), (0, 0)))
    # NCHW -> rows (b*32 + h), lanes (ci*32 + w), lane-padded 96 -> 128.
    xl = jnp.transpose(xp, (0, 2, 1, 3)).reshape(B_pad * 32, 96)
    xl = jnp.pad(xl, ((0, 0), (0, 32)))

    out = pl.pallas_call(
        lenet_fused_kernel,
        out_shape=jax.ShapeDtypeStruct((B_pad, 4), jnp.float32),
        grid=(B_pad // TB,),
        in_specs=[
            pl.BlockSpec((H, 128), lambda i: (i, 0)),
            pl.BlockSpec((640, 256), lambda i: (0, 0)),
            pl.BlockSpec((640, 256), lambda i: (0, 0)),
            pl.BlockSpec((640, 128), lambda i: (0, 0)),
            pl.BlockSpec((264, 128), lambda i: (0, 0)),
        ],
        out_specs=pl.BlockSpec((TB, 4), lambda i: (i, 0)),
        scratch_shapes=[pltpu.VMEM((H, 128), jnp.float32)],
        compiler_params=pltpu.CompilerParams(
            dimension_semantics=("parallel",),
            vmem_limit_bytes=48 * 1024 * 1024),
    )(xl, t1, t2, w1f, sp)
    return out[:B]


# -------------------------- reference (plain JAX) -----------------------------

def lenet_reference(x_nchw, params):
    dn = ("NCHW", "OIHW", "NCHW")
    y = lax.conv_general_dilated(x_nchw, params["conv1_w"], (1, 1), "VALID",
                                 dimension_numbers=dn)
    y = jnp.maximum(y + params["conv1_b"][None, :, None, None], 0.0)
    y = lax.reduce_window(y, -jnp.inf, lax.max, (1, 1, 2, 2), (1, 1, 2, 2), "VALID")
    y = lax.conv_general_dilated(y, params["conv2_w"], (1, 1), "VALID",
                                 dimension_numbers=dn)
    y = jnp.maximum(y + params["conv2_b"][None, :, None, None], 0.0)
    y = lax.reduce_window(y, -jnp.inf, lax.max, (1, 1, 2, 2), (1, 1, 2, 2), "VALID")
    y = y.reshape(y.shape[0], -1)
    y = jnp.maximum(y @ params["fc1_w"].T + params["fc1_b"], 0.0)
    y = jnp.maximum(y @ params["fc2_w"].T + params["fc2_b"], 0.0)
    y = y @ params["fc3_w"].T + params["fc3_b"]
    y = y @ params["fc4_w"].T + params["fc4_b"]
    return y


def init_params(key):
    ks = jax.random.split(key, 12)
    f32 = jnp.float32
    return {
        "conv1_w": 0.10 * jax.random.normal(ks[0], (6, 3, 5, 5), f32),
        "conv1_b": 0.10 * jax.random.normal(ks[1], (6,), f32),
        "conv2_w": 0.08 * jax.random.normal(ks[2], (16, 6, 5, 5), f32),
        "conv2_b": 0.10 * jax.random.normal(ks[3], (16,), f32),
        "fc1_w": 0.05 * jax.random.normal(ks[4], (120, 400), f32),
        "fc1_b": 0.10 * jax.random.normal(ks[5], (120,), f32),
        "fc2_w": 0.08 * jax.random.normal(ks[6], (84, 120), f32),
        "fc2_b": 0.10 * jax.random.normal(ks[7], (84,), f32),
        "fc3_w": 0.10 * jax.random.normal(ks[8], (10, 84), f32),
        "fc3_b": 0.10 * jax.random.normal(ks[9], (10,), f32),
        "fc4_w": 0.20 * jax.random.normal(ks[10], (4, 10), f32),
        "fc4_b": 0.10 * jax.random.normal(ks[11], (4,), f32),
    }


if __name__ == "__main__":
    key = jax.random.PRNGKey(0)
    k_in, k_p = jax.random.split(key)
    # 16*5*5 flatten implies 32x32 RGB inputs (CIFAR-like); batch=16 -> grid of 2.
    B = 16
    x = jax.random.normal(k_in, (B, 3, 32, 32), jnp.float32)
    params = init_params(k_p)

    fwd = jax.jit(lenet_pallas_forward)
    out = jax.block_until_ready(fwd(x, params))
    ref = jax.block_until_ready(lenet_reference(x, params))

    assert out.shape == (B, 4)
    assert jnp.allclose(out, ref, rtol=1e-3, atol=2e-3), \
        float(jnp.max(jnp.abs(out - ref)))
    print("KERNEL_OK")
</pallas_src>

<mosaic_0001>
module attributes {stable_mosaic.version = 11 : i64} {
  func.func @lenet_fused_kernel(%arg0: i32, %arg1: memref<256x128xf32, #tpu.memory_space<vmem>>, %arg2: memref<640x256xf32, #tpu.memory_space<vmem>>, %arg3: memref<640x256xf32, #tpu.memory_space<vmem>>, %arg4: memref<640x128xf32, #tpu.memory_space<vmem>>, %arg5: memref<264x128xf32, #tpu.memory_space<vmem>>, %arg6: memref<8x4xf32, #tpu.memory_space<vmem>>, %arg7: memref<256x128xf32, #tpu.memory_space<vmem>>) attributes {dimension_semantics = [#tpu.dimension_semantics<parallel>], iteration_bounds = array<i64: 2>, scalar_prefetch = 0 : i64, scratch_operands = 1 : i64, tpu.core_type = #tpu.core_type<tc>, window_params = [{transform_indices = @transform_0, window_bounds = array<i64: 256, 128>}, {pipeline_mode = #tpu.pipeline_mode<synchronous>, transform_indices = @transform_1, window_bounds = array<i64: 640, 256>}, {pipeline_mode = #tpu.pipeline_mode<synchronous>, transform_indices = @transform_2, window_bounds = array<i64: 640, 256>}, {pipeline_mode = #tpu.pipeline_mode<synchronous>, transform_indices = @transform_3, window_bounds = array<i64: 640, 128>}, {pipeline_mode = #tpu.pipeline_mode<synchronous>, transform_indices = @transform_4, window_bounds = array<i64: 264, 128>}, {transform_indices = @transform_5, window_bounds = array<i64: 8, 4>}]} {
    %c0 = arith.constant 0 : index
    %c0_0 = arith.constant 0 : index
    %0 = vector.load %arg1[%c0, %c0_0] : memref<256x128xf32, #tpu.memory_space<vmem>>, vector<252x128xf32>
    %c1 = arith.constant 1 : index
    %c0_1 = arith.constant 0 : index
    %1 = vector.load %arg1[%c1, %c0_1] : memref<256x128xf32, #tpu.memory_space<vmem>>, vector<252x128xf32>
    %c2 = arith.constant 2 : index
    %c0_2 = arith.constant 0 : index
    %2 = vector.load %arg1[%c2, %c0_2] : memref<256x128xf32, #tpu.memory_space<vmem>>, vector<252x128xf32>
    %c3 = arith.constant 3 : index
    %c0_3 = arith.constant 0 : index
    %3 = vector.load %arg1[%c3, %c0_3] : memref<256x128xf32, #tpu.memory_space<vmem>>, vector<252x128xf32>
    %c4 = arith.constant 4 : index
    %c0_4 = arith.constant 0 : index
    %4 = vector.load %arg1[%c4, %c0_4] : memref<256x128xf32, #tpu.memory_space<vmem>>, vector<252x128xf32>
    %5 = tpu.concatenate %0, %1, %2, %3, %4 in 1 : vector<252x128xf32>, vector<252x128xf32>, vector<252x128xf32>, vector<252x128xf32>, vector<252x128xf32> -> vector<252x640xf32>
    %c0_5 = arith.constant 0 : index
    %c0_6 = arith.constant 0 : index
    %6 = vector.load %arg2[%c0_5, %c0_6] : memref<640x256xf32, #tpu.memory_space<vmem>>, vector<640x256xf32>
    %cst = arith.constant dense<0.000000e+00> : vector<252x256xf32>
    %7 = tpu.matmul %5, %6, %cst {dimension_numbers = #tpu.dot_dimension_numbers<[1], [0], [0], [1], [0, 0, 1, 1], [], []>} : vector<252x640xf32>, vector<640x256xf32>, vector<252x256xf32> -> vector<252x256xf32>
    %c0_7 = arith.constant 0 : index
    %c0_8 = arith.constant 0 : index
    %8 = vector.load %arg5[%c0_7, %c0_8] : memref<264x128xf32, #tpu.memory_space<vmem>>, vector<1x128xf32>
    %9 = vector.extract_strided_slice %7 {offsets = [0, 0], sizes = [252, 128], strides = [1, 1]} : vector<252x256xf32> to vector<252x128xf32>
    %10 = vector.extract_strided_slice %7 {offsets = [0, 128], sizes = [252, 128], strides = [1, 1]} : vector<252x256xf32> to vector<252x128xf32>
    %11 = arith.maximumf %9, %10 : vector<252x128xf32>
    %12 = vector.broadcast %8 : vector<1x128xf32> to vector<252x128xf32>
    %13 = arith.addf %11, %12 : vector<252x128xf32>
    %cst_9 = arith.constant 0.000000e+00 : f32
    %14 = vector.broadcast %cst_9 : f32 to vector<252x128xf32>
    %15 = arith.maximumf %13, %14 : vector<252x128xf32>
    %16 = vector.extract_strided_slice %15 {offsets = [0, 0], sizes = [251, 128], strides = [1, 1]} : vector<252x128xf32> to vector<251x128xf32>
    %17 = vector.extract_strided_slice %15 {offsets = [1, 0], sizes = [251, 128], strides = [1, 1]} : vector<252x128xf32> to vector<251x128xf32>
    %18 = arith.maximumf %16, %17 : vector<251x128xf32>
    %19 = vector.extract_strided_slice %18 {offsets = [0, 0], sizes = [243, 128], strides = [1, 1]} : vector<251x128xf32> to vector<243x128xf32>
    %20 = vector.extract_strided_slice %18 {offsets = [2, 0], sizes = [243, 128], strides = [1, 1]} : vector<251x128xf32> to vector<243x128xf32>
    %21 = vector.extract_strided_slice %18 {offsets = [4, 0], sizes = [243, 128], strides = [1, 1]} : vector<251x128xf32> to vector<243x128xf32>
    %22 = vector.extract_strided_slice %18 {offsets = [6, 0], sizes = [243, 128], strides = [1, 1]} : vector<251x128xf32> to vector<243x128xf32>
    %23 = vector.extract_strided_slice %18 {offsets = [8, 0], sizes = [243, 128], strides = [1, 1]} : vector<251x128xf32> to vector<243x128xf32>
    %24 = tpu.concatenate %19, %20, %21, %22, %23 in 1 : vector<243x128xf32>, vector<243x128xf32>, vector<243x128xf32>, vector<243x128xf32>, vector<243x128xf32> -> vector<243x640xf32>
    %c0_10 = arith.constant 0 : index
    %c0_11 = arith.constant 0 : index
    %25 = vector.load %arg3[%c0_10, %c0_11] : memref<640x256xf32, #tpu.memory_space<vmem>>, vector<640x256xf32>
    %cst_12 = arith.constant dense<0.000000e+00> : vector<243x256xf32>
    %26 = tpu.matmul %24, %25, %cst_12 {dimension_numbers = #tpu.dot_dimension_numbers<[1], [0], [0], [1], [0, 0, 1, 1], [], []>} : vector<243x640xf32>, vector<640x256xf32>, vector<243x256xf32> -> vector<243x256xf32>
    %c1_13 = arith.constant 1 : index
    %c0_14 = arith.constant 0 : index
    %27 = vector.load %arg5[%c1_13, %c0_14] : memref<264x128xf32, #tpu.memory_space<vmem>>, vector<1x128xf32>
    %28 = vector.extract_strided_slice %26 {offsets = [0, 0], sizes = [243, 128], strides = [1, 1]} : vector<243x256xf32> to vector<243x128xf32>
    %29 = vector.extract_strided_slice %26 {offsets = [0, 128], sizes = [243, 128], strides = [1, 1]} : vector<243x256xf32> to vector<243x128xf32>
    %30 = arith.maximumf %28, %29 : vector<243x128xf32>
    %31 = vector.broadcast %27 : vector<1x128xf32> to vector<243x128xf32>
    %32 = arith.addf %30, %31 : vector<243x128xf32>
    %cst_15 = arith.constant 0.000000e+00 : f32
    %33 = vector.broadcast %cst_15 : f32 to vector<243x128xf32>
    %34 = arith.maximumf %32, %33 : vector<243x128xf32>
    %35 = vector.extract_strided_slice %34 {offsets = [0, 0], sizes = [241, 128], strides = [1, 1]} : vector<243x128xf32> to vector<241x128xf32>
    %36 = vector.extract_strided_slice %34 {offsets = [2, 0], sizes = [241, 128], strides = [1, 1]} : vector<243x128xf32> to vector<241x128xf32>
    %37 = arith.maximumf %35, %36 : vector<241x128xf32>
    %c0_16 = arith.constant 0 : index
    %c0_17 = arith.constant 0 : index
    %38 = vector.load %arg7[%c0_16, %c0_17] : memref<256x128xf32, #tpu.memory_space<vmem>>, vector<241x128xf32>
    tpu.vector_store %arg7[%c0_16, %c0_17], %37 {strides = array<i32>} : memref<256x128xf32, #tpu.memory_space<vmem>>, vector<241x128xf32>,
    %c0_18 = arith.constant 0 : index
    %c0_19 = arith.constant 0 : index
    %39 = tpu.strided_load %arg7[%c0_18, %c0_19] {strides = array<i32: 32, 1>} : memref<256x128xf32, #tpu.memory_space<vmem>>, vector<8x128xf32>
    %c4_20 = arith.constant 4 : index
    %c0_21 = arith.constant 0 : index
    %40 = tpu.strided_load %arg7[%c4_20, %c0_21] {strides = array<i32: 32, 1>} : memref<256x128xf32, #tpu.memory_space<vmem>>, vector<8x128xf32>
    %c8 = arith.constant 8 : index
    %c0_22 = arith.constant 0 : index
    %41 = tpu.strided_load %arg7[%c8, %c0_22] {strides = array<i32: 32, 1>} : memref<256x128xf32, #tpu.memory_space<vmem>>, vector<8x128xf32>
    %c12 = arith.constant 12 : index
    %c0_23 = arith.constant 0 : index
    %42 = tpu.strided_load %arg7[%c12, %c0_23] {strides = array<i32: 32, 1>} : memref<256x128xf32, #tpu.memory_space<vmem>>, vector<8x128xf32>
    %c16 = arith.constant 16 : index
    %c0_24 = arith.constant 0 : index
    %43 = tpu.strided_load %arg7[%c16, %c0_24] {strides = array<i32: 32, 1>} : memref<256x128xf32, #tpu.memory_space<vmem>>, vector<8x128xf32>
    %44 = tpu.concatenate %39, %40, %41, %42, %43 in 1 : vector<8x128xf32>, vector<8x128xf32>, vector<8x128xf32>, vector<8x128xf32>, vector<8x128xf32> -> vector<8x640xf32>
    %c2_25 = arith.constant 2 : index
    %c0_26 = arith.constant 0 : index
    %45 = vector.load %arg5[%c2_25, %c0_26] : memref<264x128xf32, #tpu.memory_space<vmem>>, vector<1x128xf32>
    %c0_27 = arith.constant 0 : index
    %c0_28 = arith.constant 0 : index
    %46 = vector.load %arg4[%c0_27, %c0_28] : memref<640x128xf32, #tpu.memory_space<vmem>>, vector<640x128xf32>
    %cst_29 = arith.constant dense<0.000000e+00> : vector<8x128xf32>
    %47 = tpu.matmul %44, %46, %cst_29 {dimension_numbers = #tpu.dot_dimension_numbers<[1], [0], [0], [1], [0, 0, 1, 1], [], []>} : vector<8x640xf32>, vector<640x128xf32>, vector<8x128xf32> -> vector<8x128xf32>
    %48 = vector.broadcast %45 : vector<1x128xf32> to vector<8x128xf32>
    %49 = arith.addf %47, %48 : vector<8x128xf32>
    %cst_30 = arith.constant 0.000000e+00 : f32
    %50 = vector.broadcast %cst_30 : f32 to vector<8x128xf32>
    %51 = arith.maximumf %49, %50 : vector<8x128xf32>
    %c8_31 = arith.constant 8 : index
    %c0_32 = arith.constant 0 : index
    %52 = vector.load %arg5[%c8_31, %c0_32] : memref<264x128xf32, #tpu.memory_space<vmem>>, vector<128x128xf32>
    %c3_33 = arith.constant 3 : index
    %c0_34 = arith.constant 0 : index
    %53 = vector.load %arg5[%c3_33, %c0_34] : memref<264x128xf32, #tpu.memory_space<vmem>>, vector<1x128xf32>
    %cst_35 = arith.constant dense<0.000000e+00> : vector<8x128xf32>
    %54 = tpu.matmul %51, %52, %cst_35 {dimension_numbers = #tpu.dot_dimension_numbers<[1], [0], [0], [1], [0, 0, 1, 1], [], []>} : vector<8x128xf32>, vector<128x128xf32>, vector<8x128xf32> -> vector<8x128xf32>
    %55 = vector.broadcast %53 : vector<1x128xf32> to vector<8x128xf32>
    %56 = arith.addf %54, %55 : vector<8x128xf32>
    %cst_36 = arith.constant 0.000000e+00 : f32
    %57 = vector.broadcast %cst_36 : f32 to vector<8x128xf32>
    %58 = arith.maximumf %56, %57 : vector<8x128xf32>
    %c136 = arith.constant 136 : index
    %c0_37 = arith.constant 0 : index
    %59 = vector.load %arg5[%c136, %c0_37] : memref<264x128xf32, #tpu.memory_space<vmem>>, vector<128x128xf32>
    %c4_38 = arith.constant 4 : index
    %c0_39 = arith.constant 0 : index
    %60 = vector.load %arg5[%c4_38, %c0_39] : memref<264x128xf32, #tpu.memory_space<vmem>>, vector<1x128xf32>
    %cst_40 = arith.constant dense<0.000000e+00> : vector<8x128xf32>
    %61 = tpu.matmul %58, %59, %cst_40 {dimension_numbers = #tpu.dot_dimension_numbers<[1], [0], [0], [1], [0, 0, 1, 1], [], []>} : vector<8x128xf32>, vector<128x128xf32>, vector<8x128xf32> -> vector<8x128xf32>
    %62 = vector.broadcast %60 : vector<1x128xf32> to vector<8x128xf32>
    %63 = arith.addf %61, %62 : vector<8x128xf32>
    %64 = vector.extract_strided_slice %63 {offsets = [0, 0], sizes = [8, 4], strides = [1, 1]} : vector<8x128xf32> to vector<8x4xf32>
    %c0_41 = arith.constant 0 : index
    %c0_42 = arith.constant 0 : index
    %65 = vector.load %arg6[%c0_41, %c0_42] : memref<8x4xf32, #tpu.memory_space<vmem>>, vector<8x4xf32>
    tpu.vector_store %arg6[%c0_41, %c0_42], %64 {strides = array<i32>} : memref<8x4xf32, #tpu.memory_space<vmem>>, vector<8x4xf32>,
    return
  }
  func.func @transform_0(%arg0: i32) -> (i32, i32) {
    %c0_i32 = arith.constant 0 : i32
    %c0_i32_0 = arith.constant 0 : i32
    return %arg0, %c0_i32 : i32, i32
  }
  func.func @transform_1(%arg0: i32) -> (i32, i32) {
    %c0_i32 = arith.constant 0 : i32
    %c0_i32_0 = arith.constant 0 : i32
    %c0_i32_1 = arith.constant 0 : i32
    return %c0_i32, %c0_i32_0 : i32, i32
  }
  func.func @transform_2(%arg0: i32) -> (i32, i32) {
    %c0_i32 = arith.constant 0 : i32
    %c0_i32_0 = arith.constant 0 : i32
    %c0_i32_1 = arith.constant 0 : i32
    return %c0_i32, %c0_i32_0 : i32, i32
  }
  func.func @transform_3(%arg0: i32) -> (i32, i32) {
    %c0_i32 = arith.constant 0 : i32
    %c0_i32_0 = arith.constant 0 : i32
    %c0_i32_1 = arith.constant 0 : i32
    return %c0_i32, %c0_i32_0 : i32, i32
  }
  func.func @transform_4(%arg0: i32) -> (i32, i32) {
    %c0_i32 = arith.constant 0 : i32
    %c0_i32_0 = arith.constant 0 : i32
    %c0_i32_1 = arith.constant 0 : i32
    return %c0_i32, %c0_i32_0 : i32, i32
  }
  func.func @transform_5(%arg0: i32) -> (i32, i32) {
    %c0_i32 = arith.constant 0 : i32
    %c0_i32_0 = arith.constant 0 : i32
    return %arg0, %c0_i32 : i32, i32
  }
}

</mosaic_0001>

<llo_original>
// kernel: tile.13
$region0: #{tile.13}
  #allocation0 [shape = 's32[1]{0}', space=sflag, size = 0x4, scoped, tag = 'scoped memory for tile.13']
  %s0 = inlined_call_operand.vmem [shape: f32[6], index: 0, kind: input, shape index: {}]
  %s1 = inlined_call_operand.vmem [shape: f32[14,6], index: 1, kind: output, shape index: {}]
  // Predicated region
  $region2: #{tile.13} parent=0 // pred_check
    _
  $region3: #{tile.13} parent=0 // pred_check_branch
    %3 = sbr.rel (0) target = $region5
  $region4: #{tile.13} parent=0 // pred_region
    _
  $region5: #{tile.13} parent=0 // pred_fallthru
    _
  %v4 = vld [vmem:[%s0] ss:$0 sm:$0xff]
  %5 = vst [vmem:[%s1] sm:$0xff] %v4
  %s6 = scalar_lea.vmem %s1, 8
  %7 = vst [vmem:[%s6] sm:$0xff] %v4

// kernel: tile.18
$region0: #{tile.18}
  #allocation0 [shape = 's32[1]{0}', space=sflag, size = 0x4, scoped, tag = 'scoped memory for tile.18']
  %s0 = inlined_call_operand.vmem [shape: f32[16], index: 0, kind: input, shape index: {}]
  %s1 = inlined_call_operand.vmem [shape: f32[5,16], index: 1, kind: output, shape index: {}]
  // Predicated region
  $region2: #{tile.18} parent=0 // pred_check
    _
  $region3: #{tile.18} parent=0 // pred_check_branch
    %3 = sbr.rel (0) target = $region5
  $region4: #{tile.18} parent=0 // pred_region
    _
  $region5: #{tile.18} parent=0 // pred_fallthru
    _
  %v4 = vld [vmem:[%s0] ss:$0 sm:$0xff]
  %5 = vst [vmem:[%s1] sm:$0xff] %v4

// kernel: lenet_pallas_forward.1
$region0: #{lenet_pallas_forward.1}
  #allocation0 [shape = 'u32[]', space=smem, size = 0x4, offset = 0x4, fixed_abs, tag = 'smem constant byte address 0x4 - core index']
  #allocation1 [shape = 'u32[72,128]{1,0:T(1,128)}', space=vmem, size = 0x9000, scoped, tag = 'internal scratch']
  #allocation2 [shape = 'f32[256,128]{1,0:T(8,128)}', space=vmem, size = 0x20000, scoped, tag = 'scratch operand']
  %s0 = inlined_call_operand.vmem [shape: f32[512,128], index: 0, kind: input, shape index: {}]
  %s1 = inlined_call_operand.vmem [shape: f32[640,256], index: 1, kind: input, shape index: {}]
  %s2 = inlined_call_operand.vmem [shape: f32[640,256], index: 2, kind: input, shape index: {}]
  %s3 = inlined_call_operand.vmem [shape: f32[640,128], index: 3, kind: input, shape index: {}]
  %s4 = inlined_call_operand.vmem [shape: f32[264,128], index: 4, kind: input, shape index: {}]
  %s5 = inlined_call_operand.vmem [shape: f32[16,4], index: 5, kind: output, shape index: {}]
  %s6 = sld [smem:[#allocation0]]
  $region53: #{lenet_pallas_forward.1} parent=0
    _
  %s8 = ssub.s32 1, %s6
  %s9 = scalar_select 0, %s8, %s6
  loop: start=0, step=1, limit=4
  $region2: #{lenet_pallas_forward.1} parent=0 // loop_pre_header
    _
  $region3: #{lenet_pallas_forward.1} parent=0 // loop_header
    %s11 = sphi 0, %s15
    %p12 = scmp.ge.s32.totalorder %s11, 4
    %s21 = sphi 0, %s23
    %s24 = sphi 0, %s21
    %s25 = sphi 0, %s24
    %s41 = sphi 0, %s25
    %s45 = sphi 0, %s45
    %s47 = sphi 0, %s45
    %s48 = sphi 0, %s47
    %s62 = sphi 0, %s48
    %s66 = sphi 0, %s66
    %s68 = sphi 0, %s66
    %s69 = sphi 0, %s68
    %s83 = sphi 0, %s69
    %s87 = sphi 0, %s87
    %s89 = sphi 0, %s87
    %s90 = sphi 0, %s89
    %s104 = sphi 0, %s90
    %s108 = sphi 0, %s108
    %s110 = sphi 0, %s108
    %s111 = sphi 0, %s110
    %s125 = sphi 0, %s111
    %s131 = sphi 0, %s133
    %s134 = sphi 0, %s131
    %s135 = sphi 0, %s134
    %s151 = sphi 0, %s135
  $region4: #{lenet_pallas_forward.1} parent=0 // loop_header_branch
    %14 = sbr.rel (%p12) target = $region8
  $region5: #{lenet_pallas_forward.1} parent=0 // loop_body
    %s16 = ssub.s32 %s11, 1
    %s17 = ssub.s32 %s11, 2
    %s18 = sadd.s32 %s11, 1
    %s19 = ssub.s32 %s11, %s18
    %p20 = scmp.eq.s32.totalorder %s19, 0
    %s22 = sadd.s32 %s21, 1
    %s23 = scalar_select %p20, %s21, %s22
    %p26 = pneg %p20
    %p27 = scmp.eq.s32.totalorder %s11, 1
    %p28 = por %p26, %p27
    %p29 = scmp.ne.s32.totalorder %s21, %s24
    %p30 = scmp.eq.s32.totalorder %s11, 0
    %p31 = por %p29, %p30
    %p32 = scmp.ne.s32.totalorder %s21, %s24
    %p33 = scmp.eq.s32.totalorder %s16, 1
    %p34 = por %p32, %p33
    %p35 = scmp.ne.s32.totalorder %s24, %s25
    %p36 = scmp.eq.s32.totalorder %s16, 0
    %p37 = por %p35, %p36
    %p38 = scmp.ne.s32.totalorder %s24, %s25
    %p39 = scmp.eq.s32.totalorder %s17, 1
    %p40 = por %p38, %p39
    %p42 = scmp.ne.s32.totalorder %s25, %s41
    %p43 = scmp.eq.s32.totalorder %s17, 0
    %p44 = por %p42, %p43
    %s46 = sadd.s32 %s45, 1
    %p49 = scmp.eq.s32.totalorder %s11, 1
    %p50 = scmp.ne.s32.totalorder %s45, %s47
    %p51 = scmp.eq.s32.totalorder %s11, 0
    %p52 = por %p50, %p51
    %p53 = scmp.ne.s32.totalorder %s45, %s47
    %p54 = scmp.eq.s32.totalorder %s16, 1
    %p55 = por %p53, %p54
    %p56 = scmp.ne.s32.totalorder %s47, %s48
    %p57 = scmp.eq.s32.totalorder %s16, 0
    %p58 = por %p56, %p57
    %p59 = scmp.ne.s32.totalorder %s47, %s48
    %p60 = scmp.eq.s32.totalorder %s17, 1
    %p61 = por %p59, %p60
    %p63 = scmp.ne.s32.totalorder %s48, %s62
    %p64 = scmp.eq.s32.totalorder %s17, 0
    %p65 = por %p63, %p64
    %s67 = sadd.s32 %s66, 1
    %p70 = scmp.eq.s32.totalorder %s11, 1
    %p71 = scmp.ne.s32.totalorder %s66, %s68
    %p72 = scmp.eq.s32.totalorder %s11, 0
    %p73 = por %p71, %p72
    %p74 = scmp.ne.s32.totalorder %s66, %s68
    %p75 = scmp.eq.s32.totalorder %s16, 1
    %p76 = por %p74, %p75
    %p77 = scmp.ne.s32.totalorder %s68, %s69
    %p78 = scmp.eq.s32.totalorder %s16, 0
    %p79 = por %p77, %p78
    %p80 = scmp.ne.s32.totalorder %s68, %s69
    %p81 = scmp.eq.s32.totalorder %s17, 1
    %p82 = por %p80, %p81
    %p84 = scmp.ne.s32.totalorder %s69, %s83
    %p85 = scmp.eq.s32.totalorder %s17, 0
    %p86 = por %p84, %p85
    %s88 = sadd.s32 %s87, 1
    %p91 = scmp.eq.s32.totalorder %s11, 1
    %p92 = scmp.ne.s32.totalorder %s87, %s89
    %p93 = scmp.eq.s32.totalorder %s11, 0
    %p94 = por %p92, %p93
    %p95 = scmp.ne.s32.totalorder %s87, %s89
    %p96 = scmp.eq.s32.totalorder %s16, 1
    %p97 = por %p95, %p96
    %p98 = scmp.ne.s32.totalorder %s89, %s90
    %p99 = scmp.eq.s32.totalorder %s16, 0
    %p100 = por %p98, %p99
    %p101 = scmp.ne.s32.totalorder %s89, %s90
    %p102 = scmp.eq.s32.totalorder %s17, 1
    %p103 = por %p101, %p102
    %p105 = scmp.ne.s32.totalorder %s90, %s104
    %p106 = scmp.eq.s32.totalorder %s17, 0
    %p107 = por %p105, %p106
    %s109 = sadd.s32 %s108, 1
    %p112 = scmp.eq.s32.totalorder %s11, 1
    %p113 = scmp.ne.s32.totalorder %s108, %s110
    %p114 = scmp.eq.s32.totalorder %s11, 0
    %p115 = por %p113, %p114
    %p116 = scmp.ne.s32.totalorder %s108, %s110
    %p117 = scmp.eq.s32.totalorder %s16, 1
    %p118 = por %p116, %p117
    %p119 = scmp.ne.s32.totalorder %s110, %s111
    %p120 = scmp.eq.s32.totalorder %s16, 0
    %p121 = por %p119, %p120
    %p122 = scmp.ne.s32.totalorder %s110, %s111
    %p123 = scmp.eq.s32.totalorder %s17, 1
    %p124 = por %p122, %p123
    %p126 = scmp.ne.s32.totalorder %s111, %s125
    %p127 = scmp.eq.s32.totalorder %s17, 0
    %p128 = por %p126, %p127
    %s129 = ssub.s32 %s11, %s18
    %p130 = scmp.eq.s32.totalorder %s129, 0
    %s132 = sadd.s32 %s131, 1
    %s133 = scalar_select %p130, %s131, %s132
    %p136 = pneg %p130
    %p137 = scmp.eq.s32.totalorder %s11, 1
    %p138 = por %p136, %p137
    %p139 = scmp.ne.s32.totalorder %s131, %s134
    %p140 = scmp.eq.s32.totalorder %s11, 0
    %p141 = por %p139, %p140
    %p142 = scmp.ne.s32.totalorder %s131, %s134
    %p143 = scmp.eq.s32.totalorder %s16, 1
    %p144 = por %p142, %p143
    %p145 = scmp.ne.s32.totalorder %s134, %s135
    %p146 = scmp.eq.s32.totalorder %s16, 0
    %p147 = por %p145, %p146
    %p148 = scmp.ne.s32.totalorder %s134, %s135
    %p149 = scmp.eq.s32.totalorder %s17, 1
    %p150 = por %p148, %p149
    %p152 = scmp.ne.s32.totalorder %s135, %s151
    %p153 = scmp.eq.s32.totalorder %s17, 0
    %p154 = por %p152, %p153
    %p155 = scmp.le.s32.totalorder 1, %s11
    %p156 = scmp.lt.s32.totalorder %s11, 3
    %p157 = pnand %p155, %p156
    %p158 = pneg %p157
    // Predicated region
    $region9: #{lenet_pallas_forward.1} parent=5 // pred_check
      _
    $region10: #{lenet_pallas_forward.1} parent=5 // pred_check_branch
      %160 = sbr.rel (%p157) target = $region12
    $region11: #{lenet_pallas_forward.1} parent=5 // pred_region
      %s161 = ssub.s32 %s11, 1
      // Predicated region
      $region13: #{lenet_pallas_forward.1} parent=11 // pred_check
        %p162 = pneg %p58
      $region14: #{lenet_pallas_forward.1} parent=11 // pred_check_branch
        %164 = sbr.rel (%p162) target = $region16
      $region15: #{lenet_pallas_forward.1} parent=11 // pred_region
        _
      $region16: #{lenet_pallas_forward.1} parent=11 // pred_fallthru
        _
      // Predicated region
      $region17: #{lenet_pallas_forward.1} parent=11 // pred_check
        %p165 = pneg %p79
      $region18: #{lenet_pallas_forward.1} parent=11 // pred_check_branch
        %167 = sbr.rel (%p165) target = $region20
      $region19: #{lenet_pallas_forward.1} parent=11 // pred_region
        _
      $region20: #{lenet_pallas_forward.1} parent=11 // pred_fallthru
        _
      // Predicated region
      $region21: #{lenet_pallas_forward.1} parent=11 // pred_check
        %p168 = pneg %p100
      $region22: #{lenet_pallas_forward.1} parent=11 // pred_check_branch
        %170 = sbr.rel (%p168) target = $region24
      $region23: #{lenet_pallas_forward.1} parent=11 // pred_region
        _
      $region24: #{lenet_pallas_forward.1} parent=11 // pred_fallthru
        _
      // Predicated region
      $region25: #{lenet_pallas_forward.1} parent=11 // pred_check
        %p171 = pneg %p121
      $region26: #{lenet_pallas_forward.1} parent=11 // pred_check_branch
        %173 = sbr.rel (%p171) target = $region28
      $region27: #{lenet_pallas_forward.1} parent=11 // pred_region
        _
      $region28: #{lenet_pallas_forward.1} parent=11 // pred_fallthru
        _
    $region12: #{lenet_pallas_forward.1} parent=5 // pred_fallthru
      _
    %p174 = scmp.lt.s32.totalorder %s11, 2
    // Predicated region
    $region29: #{lenet_pallas_forward.1} parent=5 // pred_check
      %p175 = pneg %p174
    $region30: #{lenet_pallas_forward.1} parent=5 // pred_check_branch
      %177 = sbr.rel (%p175) target = $region32
    $region31: #{lenet_pallas_forward.1} parent=5 // pred_region
      // Predicated region
      $region33: #{lenet_pallas_forward.1} parent=31 // pred_check
        %p178 = pneg %p31
      $region34: #{lenet_pallas_forward.1} parent=31 // pred_check_branch
        %180 = sbr.rel (%p178) target = $region36
      $region35: #{lenet_pallas_forward.1} parent=31 // pred_region
        %s181 = smul.u32 32, %s11
        %p182 = scmp.lt.s32.totalorder %s181, 63
        %s183 = scalar_select %p182, %s181, 63
        %s184 = smul.addr %s183, 8
        %s185 = scalar_lea.vmem %s0, %s184
        %s186 = smul.u32 32, %s11
      $region36: #{lenet_pallas_forward.1} parent=31 // pred_fallthru
        _
    $region32: #{lenet_pallas_forward.1} parent=5 // pred_fallthru
      _
    %p187 = scmp.le.s32.totalorder 1, %s11
    %p188 = scmp.lt.s32.totalorder %s11, 3
    %p189 = pnand %p187, %p188
    %p190 = pneg %p189
    // Predicated region
    $region37: #{lenet_pallas_forward.1} parent=5 // pred_check
      _
    $region38: #{lenet_pallas_forward.1} parent=5 // pred_check_branch
      %192 = sbr.rel (%p189) target = $region40
    $region39: #{lenet_pallas_forward.1} parent=5 // pred_region
      %s193 = ssub.s32 %s11, 1
      %s194 = smul.u32 32, %s16
      %p195 = scmp.lt.s32.totalorder %s194, 63
      %s196 = scalar_select %p195, %s194, 63
      %s197 = smul.addr %s196, 8
      %s198 = scalar_lea.vmem %s0, %s197
      %p199 = pneg %p37
      %p200 = pneg %p34
      %p201 = pneg %p58
      %p202 = pneg %p55
      %p203 = pneg %p79
      %p204 = pneg %p76
      %p205 = pneg %p100
      %p206 = pneg %p97
      %p207 = pneg %p121
      %p208 = pneg %p118
      %p209 = pneg %p147
      %p210 = pneg %p144
      %p211 = scmp.lt.s32.totalorder %s16, 1
      %s212 = scalar_select %p211, %s16, 1
      %s213 = smul.addr %s212, 8
      %s214 = scalar_lea.vmem %s5, %s213
      %s215 = smul.u32 32, %s16
      %p216 = scmp.lt.s32.totalorder %s215, 63
      %s217 = scalar_select %p216, %s215, 63
      %s218 = smul.addr %s217, 8
      %s219 = scalar_lea.vmem %s0, %s218
      %s220 = smul.u32 32, %s16
      %p221 = scmp.lt.s32.totalorder %s16, 1
      %s222 = scalar_select %p221, %s16, 1
      %s223 = smul.addr %s222, 8
      %s224 = scalar_lea.vmem %s5, %s223
      %v225 = vld [vmem:[%s219] sm:$0xff]
      %v226 = vld [vmem:[%s219 + $0x8] sm:$0xff]
      %v227 = vld [vmem:[%s219 + $0x10] sm:$0xff]
      %v228 = vld [vmem:[%s219 + $0x18] sm:$0xff]
      %v229 = vld [vmem:[%s219 + $0x20] sm:$0xff]
      %v230 = vld [vmem:[%s219 + $0x28] sm:$0xff]
      %v231 = vld [vmem:[%s219 + $0x30] sm:$0xff]
      %v232 = vld [vmem:[%s219 + $0x38] sm:$0xff]
      %v233 = vld [vmem:[%s219 + $0x40] sm:$0xff]
      %v234 = vld [vmem:[%s219 + $0x48] sm:$0xff]
      %v235 = vld [vmem:[%s219 + $0x50] sm:$0xff]
      %v236 = vld [vmem:[%s219 + $0x58] sm:$0xff]
      %v237 = vld [vmem:[%s219 + $0x60] sm:$0xff]
      %v238 = vld [vmem:[%s219 + $0x68] sm:$0xff]
      %v239 = vld [vmem:[%s219 + $0x70] sm:$0xff]
      %v240 = vld [vmem:[%s219 + $0x78] sm:$0xff]
      %v241 = vld [vmem:[%s219 + $0x80] sm:$0xff]
      %v242 = vld [vmem:[%s219 + $0x88] sm:$0xff]
      %v243 = vld [vmem:[%s219 + $0x90] sm:$0xff]
      %v244 = vld [vmem:[%s219 + $0x98] sm:$0xff]
      %v245 = vld [vmem:[%s219 + $0xa0] sm:$0xff]
      %v246 = vld [vmem:[%s219 + $0xa8] sm:$0xff]
      %v247 = vld [vmem:[%s219 + $0xb0] sm:$0xff]
      %v248 = vld [vmem:[%s219 + $0xb8] sm:$0xff]
      %v249 = vld [vmem:[%s219 + $0xc0] sm:$0xff]
      %v250 = vld [vmem:[%s219 + $0xc8] sm:$0xff]
      %v251 = vld [vmem:[%s219 + $0xd0] sm:$0xff]
      %v252 = vld [vmem:[%s219 + $0xd8] sm:$0xff]
      %v253 = vld [vmem:[%s219 + $0xe0] sm:$0xff]
      %v254 = vld [vmem:[%s219 + $0xe8] sm:$0xff]
      %v255 = vld [vmem:[%s219 + $0xf0] sm:$0xff]
      %v256 = vld [vmem:[%s219 + $0xf8] sm:$0xf]
      %v257 = vld [vmem:[%s219 + $0x1] sm:$0xff]
      %v258 = vld [vmem:[%s219 + $0x9] sm:$0xff]
      %v259 = vld [vmem:[%s219 + $0x11] sm:$0xff]
      %v260 = vld [vmem:[%s219 + $0x19] sm:$0xff]
      %v261 = vld [vmem:[%s219 + $0x21] sm:$0xff]
      %v262 = vld [vmem:[%s219 + $0x29] sm:$0xff]
      %v263 = vld [vmem:[%s219 + $0x31] sm:$0xff]
      %v264 = vld [vmem:[%s219 + $0x39] sm:$0xff]
      %v265 = vld [vmem:[%s219 + $0x41] sm:$0xff]
      %v266 = vld [vmem:[%s219 + $0x49] sm:$0xff]
      %v267 = vld [vmem:[%s219 + $0x51] sm:$0xff]
      %v268 = vld [vmem:[%s219 + $0x59] sm:$0xff]
      %v269 = vld [vmem:[%s219 + $0x61] sm:$0xff]
      %v270 = vld [vmem:[%s219 + $0x69] sm:$0xff]
      %v271 = vld [vmem:[%s219 + $0x71] sm:$0xff]
      %v272 = vld [vmem:[%s219 + $0x79] sm:$0xff]
      %v273 = vld [vmem:[%s219 + $0x81] sm:$0xff]
      %v274 = vld [vmem:[%s219 + $0x89] sm:$0xff]
      %v275 = vld [vmem:[%s219 + $0x91] sm:$0xff]
      %v276 = vld [vmem:[%s219 + $0x99] sm:$0xff]
      %v277 = vld [vmem:[%s219 + $0xa1] sm:$0xff]
      %v278 = vld [vmem:[%s219 + $0xa9] sm:$0xff]
      %v279 = vld [vmem:[%s219 + $0xb1] sm:$0xff]
      %v280 = vld [vmem:[%s219 + $0xb9] sm:$0xff]
      %v281 = vld [vmem:[%s219 + $0xc1] sm:$0xff]
      %v282 = vld [vmem:[%s219 + $0xc9] sm:$0xff]
      %v283 = vld [vmem:[%s219 + $0xd1] sm:$0xff]
      %v284 = vld [vmem:[%s219 + $0xd9] sm:$0xff]
      %v285 = vld [vmem:[%s219 + $0xe1] sm:$0xff]
      %v286 = vld [vmem:[%s219 + $0xe9] sm:$0xff]
      %v287 = vld [vmem:[%s219 + $0xf1] sm:$0xff]
      %v288 = vld [vmem:[%s219 + $0xf9] sm:$0xf]
      %v289 = vld [vmem:[%s219 + $0x2] sm:$0xff]
      %v290 = vld [vmem:[%s219 + $0xa] sm:$0xff]
      %v291 = vld [vmem:[%s219 + $0x12] sm:$0xff]
      %v292 = vld [vmem:[%s219 + $0x1a] sm:$0xff]
      %v293 = vld [vmem:[%s219 + $0x22] sm:$0xff]
      %v294 = vld [vmem:[%s219 + $0x2a] sm:$0xff]
      %v295 = vld [vmem:[%s219 + $0x32] sm:$0xff]
      %v296 = vld [vmem:[%s219 + $0x3a] sm:$0xff]
      %v297 = vld [vmem:[%s219 + $0x42] sm:$0xff]
      %v298 = vld [vmem:[%s219 + $0x4a] sm:$0xff]
      %v299 = vld [vmem:[%s219 + $0x52] sm:$0xff]
      %v300 = vld [vmem:[%s219 + $0x5a] sm:$0xff]
      %v301 = vld [vmem:[%s219 + $0x62] sm:$0xff]
      %v302 = vld [vmem:[%s219 + $0x6a] sm:$0xff]
      %v303 = vld [vmem:[%s219 + $0x72] sm:$0xff]
      %v304 = vld [vmem:[%s219 + $0x7a] sm:$0xff]
      %v305 = vld [vmem:[%s219 + $0x82] sm:$0xff]
      %v306 = vld [vmem:[%s219 + $0x8a] sm:$0xff]
      %v307 = vld [vmem:[%s219 + $0x92] sm:$0xff]
      %v308 = vld [vmem:[%s219 + $0x9a] sm:$0xff]
      %v309 = vld [vmem:[%s219 + $0xa2] sm:$0xff]
      %v310 = vld [vmem:[%s219 + $0xaa] sm:$0xff]
      %v311 = vld [vmem:[%s219 + $0xb2] sm:$0xff]
      %v312 = vld [vmem:[%s219 + $0xba] sm:$0xff]
      %v313 = vld [vmem:[%s219 + $0xc2] sm:$0xff]
      %v314 = vld [vmem:[%s219 + $0xca] sm:$0xff]
      %v315 = vld [vmem:[%s219 + $0xd2] sm:$0xff]
      %v316 = vld [vmem:[%s219 + $0xda] sm:$0xff]
      %v317 = vld [vmem:[%s219 + $0xe2] sm:$0xff]
      %v318 = vld [vmem:[%s219 + $0xea] sm:$0xff]
      %v319 = vld [vmem:[%s219 + $0xf2] sm:$0xff]
      %v320 = vld [vmem:[%s219 + $0xfa] sm:$0xf]
      %v321 = vld [vmem:[%s219 + $0x3] sm:$0xff]
      %v322 = vld [vmem:[%s219 + $0xb] sm:$0xff]
      %v323 = vld [vmem:[%s219 + $0x13] sm:$0xff]
      %v324 = vld [vmem:[%s219 + $0x1b] sm:$0xff]
      %v325 = vld [vmem:[%s219 + $0x23] sm:$0xff]
      %v326 = vld [vmem:[%s219 + $0x2b] sm:$0xff]
      %v327 = vld [vmem:[%s219 + $0x33] sm:$0xff]
      %v328 = vld [vmem:[%s219 + $0x3b] sm:$0xff]
      %v329 = vld [vmem:[%s219 + $0x43] sm:$0xff]
      %v330 = vld [vmem:[%s219 + $0x4b] sm:$0xff]
      %v331 = vld [vmem:[%s219 + $0x53] sm:$0xff]
      %v332 = vld [vmem:[%s219 + $0x5b] sm:$0xff]
      %v333 = vld [vmem:[%s219 + $0x63] sm:$0xff]
      %v334 = vld [vmem:[%s219 + $0x6b] sm:$0xff]
      %v335 = vld [vmem:[%s219 + $0x73] sm:$0xff]
      %v336 = vld [vmem:[%s219 + $0x7b] sm:$0xff]
      %v337 = vld [vmem:[%s219 + $0x83] sm:$0xff]
      %v338 = vld [vmem:[%s219 + $0x8b] sm:$0xff]
      %v339 = vld [vmem:[%s219 + $0x93] sm:$0xff]
      %v340 = vld [vmem:[%s219 + $0x9b] sm:$0xff]
      %v341 = vld [vmem:[%s219 + $0xa3] sm:$0xff]
      %v342 = vld [vmem:[%s219 + $0xab] sm:$0xff]
      %v343 = vld [vmem:[%s219 + $0xb3] sm:$0xff]
      %v344 = vld [vmem:[%s219 + $0xbb] sm:$0xff]
      %v345 = vld [vmem:[%s219 + $0xc3] sm:$0xff]
      %v346 = vld [vmem:[%s219 + $0xcb] sm:$0xff]
      %v347 = vld [vmem:[%s219 + $0xd3] sm:$0xff]
      %v348 = vld [vmem:[%s219 + $0xdb] sm:$0xff]
      %v349 = vld [vmem:[%s219 + $0xe3] sm:$0xff]
      %v350 = vld [vmem:[%s219 + $0xeb] sm:$0xff]
      %v351 = vld [vmem:[%s219 + $0xf3] sm:$0xff]
      %v352 = vld [vmem:[%s219 + $0xfb] sm:$0xf]
      %v353 = vld [vmem:[%s219 + $0x4] sm:$0xff]
      %v354 = vld [vmem:[%s219 + $0xc] sm:$0xff]
      %v355 = vld [vmem:[%s219 + $0x14] sm:$0xff]
      %v356 = vld [vmem:[%s219 + $0x1c] sm:$0xff]
      %v357 = vld [vmem:[%s219 + $0x24] sm:$0xff]
      %v358 = vld [vmem:[%s219 + $0x2c] sm:$0xff]
      %v359 = vld [vmem:[%s219 + $0x34] sm:$0xff]
      %v360 = vld [vmem:[%s219 + $0x3c] sm:$0xff]
      %v361 = vld [vmem:[%s219 + $0x44] sm:$0xff]
      %v362 = vld [vmem:[%s219 + $0x4c] sm:$0xff]
      %v363 = vld [vmem:[%s219 + $0x54] sm:$0xff]
      %v364 = vld [vmem:[%s219 + $0x5c] sm:$0xff]
      %v365 = vld [vmem:[%s219 + $0x64] sm:$0xff]
      %v366 = vld [vmem:[%s219 + $0x6c] sm:$0xff]
      %v367 = vld [vmem:[%s219 + $0x74] sm:$0xff]
      %v368 = vld [vmem:[%s219 + $0x7c] sm:$0xff]
      %v369 = vld [vmem:[%s219 + $0x84] sm:$0xff]
      %v370 = vld [vmem:[%s219 + $0x8c] sm:$0xff]
      %v371 = vld [vmem:[%s219 + $0x94] sm:$0xff]
      %v372 = vld [vmem:[%s219 + $0x9c] sm:$0xff]
      %v373 = vld [vmem:[%s219 + $0xa4] sm:$0xff]
      %v374 = vld [vmem:[%s219 + $0xac] sm:$0xff]
      %v375 = vld [vmem:[%s219 + $0xb4] sm:$0xff]
      %v376 = vld [vmem:[%s219 + $0xbc] sm:$0xff]
      %v377 = vld [vmem:[%s219 + $0xc4] sm:$0xff]
      %v378 = vld [vmem:[%s219 + $0xcc] sm:$0xff]
      %v379 = vld [vmem:[%s219 + $0xd4] sm:$0xff]
      %v380 = vld [vmem:[%s219 + $0xdc] sm:$0xff]
      %v381 = vld [vmem:[%s219 + $0xe4] sm:$0xff]
      %v382 = vld [vmem:[%s219 + $0xec] sm:$0xff]
      %v383 = vld [vmem:[%s219 + $0xf4] sm:$0xff]
      %v384 = vld [vmem:[%s219 + $0xfc] sm:$0xf]
      %v385 = vld [vmem:[%s1] sm:$0xff]
      %v386 = vld [vmem:[%s1 + $0x8] sm:$0xff]
      %v387 = vld [vmem:[%s1 + $0x10] sm:$0xff]
      %v388 = vld [vmem:[%s1 + $0x18] sm:$0xff]
      %v389 = vld [vmem:[%s1 + $0x20] sm:$0xff]
      %v390 = vld [vmem:[%s1 + $0x28] sm:$0xff]
      %v391 = vld [vmem:[%s1 + $0x30] sm:$0xff]
      %v392 = vld [vmem:[%s1 + $0x38] sm:$0xff]
      %v393 = vld [vmem:[%s1 + $0x40] sm:$0xff]
      %v394 = vld [vmem:[%s1 + $0x48] sm:$0xff]
      %v395 = vld [vmem:[%s1 + $0x50] sm:$0xff]
      %v396 = vld [vmem:[%s1 + $0x58] sm:$0xff]
      %v397 = vld [vmem:[%s1 + $0x60] sm:$0xff]
      %v398 = vld [vmem:[%s1 + $0x68] sm:$0xff]
      %v399 = vld [vmem:[%s1 + $0x70] sm:$0xff]
      %v400 = vld [vmem:[%s1 + $0x78] sm:$0xff]
      %v401 = vld [vmem:[%s1 + $0x80] sm:$0xff]
      %v402 = vld [vmem:[%s1 + $0x88] sm:$0xff]
      %v403 = vld [vmem:[%s1 + $0x90] sm:$0xff]
      %v404 = vld [vmem:[%s1 + $0x98] sm:$0xff]
      %v405 = vld [vmem:[%s1 + $0xa0] sm:$0xff]
      %v406 = vld [vmem:[%s1 + $0xa8] sm:$0xff]
      %v407 = vld [vmem:[%s1 + $0xb0] sm:$0xff]
      %v408 = vld [vmem:[%s1 + $0xb8] sm:$0xff]
      %v409 = vld [vmem:[%s1 + $0xc0] sm:$0xff]
      %v410 = vld [vmem:[%s1 + $0xc8] sm:$0xff]
      %v411 = vld [vmem:[%s1 + $0xd0] sm:$0xff]
      %v412 = vld [vmem:[%s1 + $0xd8] sm:$0xff]
      %v413 = vld [vmem:[%s1 + $0xe0] sm:$0xff]
      %v414 = vld [vmem:[%s1 + $0xe8] sm:$0xff]
      %v415 = vld [vmem:[%s1 + $0xf0] sm:$0xff]
      %v416 = vld [vmem:[%s1 + $0xf8] sm:$0xff]
      %v417 = vld [vmem:[%s1 + $0x100] sm:$0xff]
      %v418 = vld [vmem:[%s1 + $0x108] sm:$0xff]
      %v419 = vld [vmem:[%s1 + $0x110] sm:$0xff]
      %v420 = vld [vmem:[%s1 + $0x118] sm:$0xff]
      %v421 = vld [vmem:[%s1 + $0x120] sm:$0xff]
      %v422 = vld [vmem:[%s1 + $0x128] sm:$0xff]
      %v423 = vld [vmem:[%s1 + $0x130] sm:$0xff]
      %v424 = vld [vmem:[%s1 + $0x138] sm:$0xff]
      %v425 = vld [vmem:[%s1 + $0x140] sm:$0xff]
      %v426 = vld [vmem:[%s1 + $0x148] sm:$0xff]
      %v427 = vld [vmem:[%s1 + $0x150] sm:$0xff]
      %v428 = vld [vmem:[%s1 + $0x158] sm:$0xff]
      %v429 = vld [vmem:[%s1 + $0x160] sm:$0xff]
      %v430 = vld [vmem:[%s1 + $0x168] sm:$0xff]
      %v431 = vld [vmem:[%s1 + $0x170] sm:$0xff]
      %v432 = vld [vmem:[%s1 + $0x178] sm:$0xff]
      %v433 = vld [vmem:[%s1 + $0x180] sm:$0xff]
      %v434 = vld [vmem:[%s1 + $0x188] sm:$0xff]
      %v435 = vld [vmem:[%s1 + $0x190] sm:$0xff]
      %v436 = vld [vmem:[%s1 + $0x198] sm:$0xff]
      %v437 = vld [vmem:[%s1 + $0x1a0] sm:$0xff]
      %v438 = vld [vmem:[%s1 + $0x1a8] sm:$0xff]
      %v439 = vld [vmem:[%s1 + $0x1b0] sm:$0xff]
      %v440 = vld [vmem:[%s1 + $0x1b8] sm:$0xff]
      %v441 = vld [vmem:[%s1 + $0x1c0] sm:$0xff]
      %v442 = vld [vmem:[%s1 + $0x1c8] sm:$0xff]
      %v443 = vld [vmem:[%s1 + $0x1d0] sm:$0xff]
      %v444 = vld [vmem:[%s1 + $0x1d8] sm:$0xff]
      %v445 = vld [vmem:[%s1 + $0x1e0] sm:$0xff]
      %v446 = vld [vmem:[%s1 + $0x1e8] sm:$0xff]
      %v447 = vld [vmem:[%s1 + $0x1f0] sm:$0xff]
      %v448 = vld [vmem:[%s1 + $0x1f8] sm:$0xff]
      %v449 = vld [vmem:[%s1 + $0x200] sm:$0xff]
      %v450 = vld [vmem:[%s1 + $0x208] sm:$0xff]
      %v451 = vld [vmem:[%s1 + $0x210] sm:$0xff]
      %v452 = vld [vmem:[%s1 + $0x218] sm:$0xff]
      %v453 = vld [vmem:[%s1 + $0x220] sm:$0xff]
      %v454 = vld [vmem:[%s1 + $0x228] sm:$0xff]
      %v455 = vld [vmem:[%s1 + $0x230] sm:$0xff]
      %v456 = vld [vmem:[%s1 + $0x238] sm:$0xff]
      %v457 = vld [vmem:[%s1 + $0x240] sm:$0xff]
      %v458 = vld [vmem:[%s1 + $0x248] sm:$0xff]
      %v459 = vld [vmem:[%s1 + $0x250] sm:$0xff]
      %v460 = vld [vmem:[%s1 + $0x258] sm:$0xff]
      %v461 = vld [vmem:[%s1 + $0x260] sm:$0xff]
      %v462 = vld [vmem:[%s1 + $0x268] sm:$0xff]
      %v463 = vld [vmem:[%s1 + $0x270] sm:$0xff]
      %v464 = vld [vmem:[%s1 + $0x278] sm:$0xff]
      %v465 = vld [vmem:[%s1 + $0x280] sm:$0xff]
      %v466 = vld [vmem:[%s1 + $0x288] sm:$0xff]
      %v467 = vld [vmem:[%s1 + $0x290] sm:$0xff]
      %v468 = vld [vmem:[%s1 + $0x298] sm:$0xff]
      %v469 = vld [vmem:[%s1 + $0x2a0] sm:$0xff]
      %v470 = vld [vmem:[%s1 + $0x2a8] sm:$0xff]
      %v471 = vld [vmem:[%s1 + $0x2b0] sm:$0xff]
      %v472 = vld [vmem:[%s1 + $0x2b8] sm:$0xff]
      %v473 = vld [vmem:[%s1 + $0x2c0] sm:$0xff]
      %v474 = vld [vmem:[%s1 + $0x2c8] sm:$0xff]
      %v475 = vld [vmem:[%s1 + $0x2d0] sm:$0xff]
      %v476 = vld [vmem:[%s1 + $0x2d8] sm:$0xff]
      %v477 = vld [vmem:[%s1 + $0x2e0] sm:$0xff]
      %v478 = vld [vmem:[%s1 + $0x2e8] sm:$0xff]
      %v479 = vld [vmem:[%s1 + $0x2f0] sm:$0xff]
      %v480 = vld [vmem:[%s1 + $0x2f8] sm:$0xff]
      %v481 = vld [vmem:[%s1 + $0x300] sm:$0xff]
      %v482 = vld [vmem:[%s1 + $0x308] sm:$0xff]
      %v483 = vld [vmem:[%s1 + $0x310] sm:$0xff]
      %v484 = vld [vmem:[%s1 + $0x318] sm:$0xff]
      %v485 = vld [vmem:[%s1 + $0x320] sm:$0xff]
      %v486 = vld [vmem:[%s1 + $0x328] sm:$0xff]
      %v487 = vld [vmem:[%s1 + $0x330] sm:$0xff]
      %v488 = vld [vmem:[%s1 + $0x338] sm:$0xff]
      %v489 = vld [vmem:[%s1 + $0x340] sm:$0xff]
      %v490 = vld [vmem:[%s1 + $0x348] sm:$0xff]
      %v491 = vld [vmem:[%s1 + $0x350] sm:$0xff]
      %v492 = vld [vmem:[%s1 + $0x358] sm:$0xff]
      %v493 = vld [vmem:[%s1 + $0x360] sm:$0xff]
      %v494 = vld [vmem:[%s1 + $0x368] sm:$0xff]
      %v495 = vld [vmem:[%s1 + $0x370] sm:$0xff]
      %v496 = vld [vmem:[%s1 + $0x378] sm:$0xff]
      %v497 = vld [vmem:[%s1 + $0x380] sm:$0xff]
      %v498 = vld [vmem:[%s1 + $0x388] sm:$0xff]
      %v499 = vld [vmem:[%s1 + $0x390] sm:$0xff]
      %v500 = vld [vmem:[%s1 + $0x398] sm:$0xff]
      %v501 = vld [vmem:[%s1 + $0x3a0] sm:$0xff]
      %v502 = vld [vmem:[%s1 + $0x3a8] sm:$0xff]
      %v503 = vld [vmem:[%s1 + $0x3b0] sm:$0xff]
      %v504 = vld [vmem:[%s1 + $0x3b8] sm:$0xff]
      %v505 = vld [vmem:[%s1 + $0x3c0] sm:$0xff]
      %v506 = vld [vmem:[%s1 + $0x3c8] sm:$0xff]
      %v507 = vld [vmem:[%s1 + $0x3d0] sm:$0xff]
      %v508 = vld [vmem:[%s1 + $0x3d8] sm:$0xff]
      %v509 = vld [vmem:[%s1 + $0x3e0] sm:$0xff]
      %v510 = vld [vmem:[%s1 + $0x3e8] sm:$0xff]
      %v511 = vld [vmem:[%s1 + $0x3f0] sm:$0xff]
      %v512 = vld [vmem:[%s1 + $0x3f8] sm:$0xff]
      %v513 = vld [vmem:[%s1 + $0x400] sm:$0xff]
      %v514 = vld [vmem:[%s1 + $0x408] sm:$0xff]
      %v515 = vld [vmem:[%s1 + $0x410] sm:$0xff]
      %v516 = vld [vmem:[%s1 + $0x418] sm:$0xff]
      %v517 = vld [vmem:[%s1 + $0x420] sm:$0xff]
      %v518 = vld [vmem:[%s1 + $0x428] sm:$0xff]
      %v519 = vld [vmem:[%s1 + $0x430] sm:$0xff]
      %v520 = vld [vmem:[%s1 + $0x438] sm:$0xff]
      %v521 = vld [vmem:[%s1 + $0x440] sm:$0xff]
      %v522 = vld [vmem:[%s1 + $0x448] sm:$0xff]
      %v523 = vld [vmem:[%s1 + $0x450] sm:$0xff]
      %v524 = vld [vmem:[%s1 + $0x458] sm:$0xff]
      %v525 = vld [vmem:[%s1 + $0x460] sm:$0xff]
      %v526 = vld [vmem:[%s1 + $0x468] sm:$0xff]
      %v527 = vld [vmem:[%s1 + $0x470] sm:$0xff]
      %v528 = vld [vmem:[%s1 + $0x478] sm:$0xff]
      %v529 = vld [vmem:[%s1 + $0x480] sm:$0xff]
      %v530 = vld [vmem:[%s1 + $0x488] sm:$0xff]
      %v531 = vld [vmem:[%s1 + $0x490] sm:$0xff]
      %v532 = vld [vmem:[%s1 + $0x498] sm:$0xff]
      %v533 = vld [vmem:[%s1 + $0x4a0] sm:$0xff]
      %v534 = vld [vmem:[%s1 + $0x4a8] sm:$0xff]
      %v535 = vld [vmem:[%s1 + $0x4b0] sm:$0xff]
      %v536 = vld [vmem:[%s1 + $0x4b8] sm:$0xff]
      %v537 = vld [vmem:[%s1 + $0x4c0] sm:$0xff]
      %v538 = vld [vmem:[%s1 + $0x4c8] sm:$0xff]
      %v539 = vld [vmem:[%s1 + $0x4d0] sm:$0xff]
      %v540 = vld [vmem:[%s1 + $0x4d8] sm:$0xff]
      %v541 = vld [vmem:[%s1 + $0x4e0] sm:$0xff]
      %v542 = vld [vmem:[%s1 + $0x4e8] sm:$0xff]
      %v543 = vld [vmem:[%s1 + $0x4f0] sm:$0xff]
      %v544 = vld [vmem:[%s1 + $0x4f8] sm:$0xff]
      %545 = vmatpush.msra.mxu0 %v415
      %546 = vmatpush.msra.mxu0 %v413
      %547 = vmatpush.msra.mxu0 %v411
      %548 = vmatpush.msra.mxu0 %v409
      %549 = vmatpush.msra.mxu0 %v407
      %550 = vmatpush.msra.mxu0 %v405
      %551 = vmatpush.msra.mxu0 %v403
      %552 = vmatpush.msra.mxu0 %v401
      %553 = vmatpush.msra.mxu0 %v399
      %554 = vmatpush.msra.mxu0 %v397
      %555 = vmatpush.msra.mxu0 %v395
      %556 = vmatpush.msra.mxu0 %v393
      %557 = vmatpush.msra.mxu0 %v391
      %558 = vmatpush.msra.mxu0 %v389
      %559 = vmatpush.msra.mxu0 %v387
      %560 = vmatpush.msra.mxu0 %v385
      %561 = vmatmul.f32.gmra.mxu0 %v225
      %v562 = vpop.f32.mrf.mxu0
      %v563 = vadd.f32 0.0, %v562
      %564 = vmatmul.f32.gmra.mxu0 %v226
      %v565 = vpop.f32.mrf.mxu0
      %v566 = vadd.f32 0.0, %v565
      %567 = vmatmul.f32.gmra.mxu0 %v227
      %v568 = vpop.f32.mrf.mxu0
      %v569 = vadd.f32 0.0, %v568
      %570 = vmatmul.f32.gmra.mxu0 %v228
      %v571 = vpop.f32.mrf.mxu0
      %v572 = vadd.f32 0.0, %v571
      %573 = vmatmul.f32.gmra.mxu0 %v229
      %v574 = vpop.f32.mrf.mxu0
      %v575 = vadd.f32 0.0, %v574
      %576 = vmatmul.f32.gmra.mxu0 %v230
      %v577 = vpop.f32.mrf.mxu0
      %v578 = vadd.f32 0.0, %v577
      %579 = vmatmul.f32.gmra.mxu0 %v231
      %v580 = vpop.f32.mrf.mxu0
      %v581 = vadd.f32 0.0, %v580
      %582 = vmatmul.f32.gmra.mxu0 %v232
      %v583 = vpop.f32.mrf.mxu0
      %v584 = vadd.f32 0.0, %v583
      %585 = vmatmul.f32.gmra.mxu0 %v233
      %v586 = vpop.f32.mrf.mxu0
      %v587 = vadd.f32 0.0, %v586
      %588 = vmatmul.f32.gmra.mxu0 %v234
      %v589 = vpop.f32.mrf.mxu0
      %v590 = vadd.f32 0.0, %v589
      %591 = vmatmul.f32.gmra.mxu0 %v235
      %v592 = vpop.f32.mrf.mxu0
      %v593 = vadd.f32 0.0, %v592
      %594 = vmatmul.f32.gmra.mxu0 %v236
      %v595 = vpop.f32.mrf.mxu0
      %v596 = vadd.f32 0.0, %v595
      %597 = vmatmul.f32.gmra.mxu0 %v237
      %v598 = vpop.f32.mrf.mxu0
      %v599 = vadd.f32 0.0, %v598
      %600 = vmatmul.f32.gmra.mxu0 %v238
      %v601 = vpop.f32.mrf.mxu0
      %v602 = vadd.f32 0.0, %v601
      %603 = vmatmul.f32.gmra.mxu0 %v239
      %v604 = vpop.f32.mrf.mxu0
      %v605 = vadd.f32 0.0, %v604
      %606 = vmatmul.f32.gmra.mxu0 %v240
      %v607 = vpop.f32.mrf.mxu0
      %v608 = vadd.f32 0.0, %v607
      %609 = vmatmul.f32.gmra.mxu0 %v241
      %v610 = vpop.f32.mrf.mxu0
      %v611 = vadd.f32 0.0, %v610
      %612 = vmatmul.f32.gmra.mxu0 %v242
      %v613 = vpop.f32.mrf.mxu0
      %v614 = vadd.f32 0.0, %v613
      %615 = vmatmul.f32.gmra.mxu0 %v243
      %v616 = vpop.f32.mrf.mxu0
      %v617 = vadd.f32 0.0, %v616
      %618 = vmatmul.f32.gmra.mxu0 %v244
      %v619 = vpop.f32.mrf.mxu0
      %v620 = vadd.f32 0.0, %v619
      %621 = vmatmul.f32.gmra.mxu0 %v245
      %v622 = vpop.f32.mrf.mxu0
      %v623 = vadd.f32 0.0, %v622
      %624 = vmatmul.f32.gmra.mxu0 %v246
      %v625 = vpop.f32.mrf.mxu0
      %v626 = vadd.f32 0.0, %v625
      %627 = vmatmul.f32.gmra.mxu0 %v247
      %v628 = vpop.f32.mrf.mxu0
      %v629 = vadd.f32 0.0, %v628
      %630 = vmatmul.f32.gmra.mxu0 %v248
      %v631 = vpop.f32.mrf.mxu0
      %v632 = vadd.f32 0.0, %v631
      %633 = vmatmul.f32.gmra.mxu0 %v249
      %v634 = vpop.f32.mrf.mxu0
      %v635 = vadd.f32 0.0, %v634
      %636 = vmatmul.f32.gmra.mxu0 %v250
      %v637 = vpop.f32.mrf.mxu0
      %v638 = vadd.f32 0.0, %v637
      %639 = vmatmul.f32.gmra.mxu0 %v251
      %v640 = vpop.f32.mrf.mxu0
      %v641 = vadd.f32 0.0, %v640
      %642 = vmatmul.f32.gmra.mxu0 %v252
      %v643 = vpop.f32.mrf.mxu0
      %v644 = vadd.f32 0.0, %v643
      %645 = vmatmul.f32.gmra.mxu0 %v253
      %v646 = vpop.f32.mrf.mxu0
      %v647 = vadd.f32 0.0, %v646
      %648 = vmatmul.f32.gmra.mxu0 %v254
      %v649 = vpop.f32.mrf.mxu0
      %v650 = vadd.f32 0.0, %v649
      %651 = vmatmul.f32.gmra.mxu0 %v255
      %v652 = vpop.f32.mrf.mxu0
      %v653 = vadd.f32 0.0, %v652
      %654 = vmatmul.f32.gmra.mxu0 %v256
      %v655 = vpop.f32.mrf.mxu0
      %v656 = vadd.f32 0.0, %v655
      %657 = vdwg.mxu0
      %658 = vmatpush.msra.mxu0 %v447
      %659 = vmatpush.msra.mxu0 %v445
      %660 = vmatpush.msra.mxu0 %v443
      %661 = vmatpush.msra.mxu0 %v441
      %662 = vmatpush.msra.mxu0 %v439
      %663 = vmatpush.msra.mxu0 %v437
      %664 = vmatpush.msra.mxu0 %v435
      %665 = vmatpush.msra.mxu0 %v433
      %666 = vmatpush.msra.mxu0 %v431
      %667 = vmatpush.msra.mxu0 %v429
      %668 = vmatpush.msra.mxu0 %v427
      %669 = vmatpush.msra.mxu0 %v425
      %670 = vmatpush.msra.mxu0 %v423
      %671 = vmatpush.msra.mxu0 %v421
      %672 = vmatpush.msra.mxu0 %v419
      %673 = vmatpush.msra.mxu0 %v417
      %674 = vmatmul.f32.gmra.mxu0 %v257
      %v675 = vpop.f32.mrf.mxu0
      %v676 = vadd.f32 %v563, %v675
      %677 = vmatmul.f32.gmra.mxu0 %v258
      %v678 = vpop.f32.mrf.mxu0
      %v679 = vadd.f32 %v566, %v678
      %680 = vmatmul.f32.gmra.mxu0 %v259
      %v681 = vpop.f32.mrf.mxu0
      %v682 = vadd.f32 %v569, %v681
      %683 = vmatmul.f32.gmra.mxu0 %v260
      %v684 = vpop.f32.mrf.mxu0
      %v685 = vadd.f32 %v572, %v684
      %686 = vmatmul.f32.gmra.mxu0 %v261
      %v687 = vpop.f32.mrf.mxu0
      %v688 = vadd.f32 %v575, %v687
      %689 = vmatmul.f32.gmra.mxu0 %v262
      %v690 = vpop.f32.mrf.mxu0
      %v691 = vadd.f32 %v578, %v690
      %692 = vmatmul.f32.gmra.mxu0 %v263
      %v693 = vpop.f32.mrf.mxu0
      %v694 = vadd.f32 %v581, %v693
      %695 = vmatmul.f32.gmra.mxu0 %v264
      %v696 = vpop.f32.mrf.mxu0
      %v697 = vadd.f32 %v584, %v696
      %698 = vmatmul.f32.gmra.mxu0 %v265
      %v699 = vpop.f32.mrf.mxu0
      %v700 = vadd.f32 %v587, %v699
      %701 = vmatmul.f32.gmra.mxu0 %v266
      %v702 = vpop.f32.mrf.mxu0
      %v703 = vadd.f32 %v590, %v702
      %704 = vmatmul.f32.gmra.mxu0 %v267
      %v705 = vpop.f32.mrf.mxu0
      %v706 = vadd.f32 %v593, %v705
      %707 = vmatmul.f32.gmra.mxu0 %v268
      %v708 = vpop.f32.mrf.mxu0
      %v709 = vadd.f32 %v596, %v708
      %710 = vmatmul.f32.gmra.mxu0 %v269
      %v711 = vpop.f32.mrf.mxu0
      %v712 = vadd.f32 %v599, %v711
      %713 = vmatmul.f32.gmra.mxu0 %v270
      %v714 = vpop.f32.mrf.mxu0
      %v715 = vadd.f32 %v602, %v714
      %716 = vmatmul.f32.gmra.mxu0 %v271
      %v717 = vpop.f32.mrf.mxu0
      %v718 = vadd.f32 %v605, %v717
      %719 = vmatmul.f32.gmra.mxu0 %v272
      %v720 = vpop.f32.mrf.mxu0
      %v721 = vadd.f32 %v608, %v720
      %722 = vmatmul.f32.gmra.mxu0 %v273
      %v723 = vpop.f32.mrf.mxu0
      %v724 = vadd.f32 %v611, %v723
      %725 = vmatmul.f32.gmra.mxu0 %v274
      %v726 = vpop.f32.mrf.mxu0
      %v727 = vadd.f32 %v614, %v726
      %728 = vmatmul.f32.gmra.mxu0 %v275
      %v729 = vpop.f32.mrf.mxu0
      %v730 = vadd.f32 %v617, %v729
      %731 = vmatmul.f32.gmra.mxu0 %v276
      %v732 = vpop.f32.mrf.mxu0
      %v733 = vadd.f32 %v620, %v732
      %734 = vmatmul.f32.gmra.mxu0 %v277
      %v735 = vpop.f32.mrf.mxu0
      %v736 = vadd.f32 %v623, %v735
      %737 = vmatmul.f32.gmra.mxu0 %v278
      %v738 = vpop.f32.mrf.mxu0
      %v739 = vadd.f32 %v626, %v738
      %740 = vmatmul.f32.gmra.mxu0 %v279
      %v741 = vpop.f32.mrf.mxu0
      %v742 = vadd.f32 %v629, %v741
      %743 = vmatmul.f32.gmra.mxu0 %v280
      %v744 = vpop.f32.mrf.mxu0
      %v745 = vadd.f32 %v632, %v744
      %746 = vmatmul.f32.gmra.mxu0 %v281
      %v747 = vpop.f32.mrf.mxu0
      %v748 = vadd.f32 %v635, %v747
      %749 = vmatmul.f32.gmra.mxu0 %v282
      %v750 = vpop.f32.mrf.mxu0
      %v751 = vadd.f32 %v638, %v750
      %752 = vmatmul.f32.gmra.mxu0 %v283
      %v753 = vpop.f32.mrf.mxu0
      %v754 = vadd.f32 %v641, %v753
      %755 = vmatmul.f32.gmra.mxu0 %v284
      %v756 = vpop.f32.mrf.mxu0
      %v757 = vadd.f32 %v644, %v756
      %758 = vmatmul.f32.gmra.mxu0 %v285
      %v759 = vpop.f32.mrf.mxu0
      %v760 = vadd.f32 %v647, %v759
      %761 = vmatmul.f32.gmra.mxu0 %v286
      %v762 = vpop.f32.mrf.mxu0
      %v763 = vadd.f32 %v650, %v762
      %764 = vmatmul.f32.gmra.mxu0 %v287
      %v765 = vpop.f32.mrf.mxu0
      %v766 = vadd.f32 %v653, %v765
      %767 = vmatmul.f32.gmra.mxu0 %v288
      %v768 = vpop.f32.mrf.mxu0
      %v769 = vadd.f32 %v656, %v768
      %770 = vdwg.mxu0
      %771 = vmatpush.msra.mxu0 %v479
      %772 = vmatpush.msra.mxu0 %v477
      %773 = vmatpush.msra.mxu0 %v475
      %774 = vmatpush.msra.mxu0 %v473
      %775 = vmatpush.msra.mxu0 %v471
      %776 = vmatpush.msra.mxu0 %v469
      %777 = vmatpush.msra.mxu0 %v467
      %778 = vmatpush.msra.mxu0 %v465
      %779 = vmatpush.msra.mxu0 %v463
      %780 = vmatpush.msra.mxu0 %v461
      %781 = vmatpush.msra.mxu0 %v459
      %782 = vmatpush.msra.mxu0 %v457
      %783 = vmatpush.msra.mxu0 %v455
      %784 = vmatpush.msra.mxu0 %v453
      %785 = vmatpush.msra.mxu0 %v451
      %786 = vmatpush.msra.mxu0 %v449
      %787 = vmatmul.f32.gmra.mxu0 %v289
      %v788 = vpop.f32.mrf.mxu0
      %v789 = vadd.f32 %v676, %v788
      %790 = vmatmul.f32.gmra.mxu0 %v290
      %v791 = vpop.f32.mrf.mxu0
      %v792 = vadd.f32 %v679, %v791
      %793 = vmatmul.f32.gmra.mxu0 %v291
      %v794 = vpop.f32.mrf.mxu0
      %v795 = vadd.f32 %v682, %v794
      %796 = vmatmul.f32.gmra.mxu0 %v292
      %v797 = vpop.f32.mrf.mxu0
      %v798 = vadd.f32 %v685, %v797
      %799 = vmatmul.f32.gmra.mxu0 %v293
      %v800 = vpop.f32.mrf.mxu0
      %v801 = vadd.f32 %v688, %v800
      %802 = vmatmul.f32.gmra.mxu0 %v294
      %v803 = vpop.f32.mrf.mxu0
      %v804 = vadd.f32 %v691, %v803
      %805 = vmatmul.f32.gmra.mxu0 %v295
      %v806 = vpop.f32.mrf.mxu0
      %v807 = vadd.f32 %v694, %v806
      %808 = vmatmul.f32.gmra.mxu0 %v296
      %v809 = vpop.f32.mrf.mxu0
      %v810 = vadd.f32 %v697, %v809
      %811 = vmatmul.f32.gmra.mxu0 %v297
      %v812 = vpop.f32.mrf.mxu0
      %v813 = vadd.f32 %v700, %v812
      %814 = vmatmul.f32.gmra.mxu0 %v298
      %v815 = vpop.f32.mrf.mxu0
      %v816 = vadd.f32 %v703, %v815
      %817 = vmatmul.f32.gmra.mxu0 %v299
      %v818 = vpop.f32.mrf.mxu0
      %v819 = vadd.f32 %v706, %v818
      %820 = vmatmul.f32.gmra.mxu0 %v300
      %v821 = vpop.f32.mrf.mxu0
      %v822 = vadd.f32 %v709, %v821
      %823 = vmatmul.f32.gmra.mxu0 %v301
      %v824 = vpop.f32.mrf.mxu0
      %v825 = vadd.f32 %v712, %v824
      %826 = vmatmul.f32.gmra.mxu0 %v302
      %v827 = vpop.f32.mrf.mxu0
      %v828 = vadd.f32 %v715, %v827
      %829 = vmatmul.f32.gmra.mxu0 %v303
      %v830 = vpop.f32.mrf.mxu0
      %v831 = vadd.f32 %v718, %v830
      %832 = vmatmul.f32.gmra.mxu0 %v304
      %v833 = vpop.f32.mrf.mxu0
      %v834 = vadd.f32 %v721, %v833
      %835 = vmatmul.f32.gmra.mxu0 %v305
      %v836 = vpop.f32.mrf.mxu0
      %v837 = vadd.f32 %v724, %v836
      %838 = vmatmul.f32.gmra.mxu0 %v306
      %v839 = vpop.f32.mrf.mxu0
      %v840 = vadd.f32 %v727, %v839
      %841 = vmatmul.f32.gmra.mxu0 %v307
      %v842 = vpop.f32.mrf.mxu0
      %v843 = vadd.f32 %v730, %v842
      %844 = vmatmul.f32.gmra.mxu0 %v308
      %v845 = vpop.f32.mrf.mxu0
      %v846 = vadd.f32 %v733, %v845
      %847 = vmatmul.f32.gmra.mxu0 %v309
      %v848 = vpop.f32.mrf.mxu0
      %v849 = vadd.f32 %v736, %v848
      %850 = vmatmul.f32.gmra.mxu0 %v310
      %v851 = vpop.f32.mrf.mxu0
      %v852 = vadd.f32 %v739, %v851
      %853 = vmatmul.f32.gmra.mxu0 %v311
      %v854 = vpop.f32.mrf.mxu0
      %v855 = vadd.f32 %v742, %v854
      %856 = vmatmul.f32.gmra.mxu0 %v312
      %v857 = vpop.f32.mrf.mxu0
      %v858 = vadd.f32 %v745, %v857
      %859 = vmatmul.f32.gmra.mxu0 %v313
      %v860 = vpop.f32.mrf.mxu0
      %v861 = vadd.f32 %v748, %v860
      %862 = vmatmul.f32.gmra.mxu0 %v314
      %v863 = vpop.f32.mrf.mxu0
      %v864 = vadd.f32 %v751, %v863
      %865 = vmatmul.f32.gmra.mxu0 %v315
      %v866 = vpop.f32.mrf.mxu0
      %v867 = vadd.f32 %v754, %v866
      %868 = vmatmul.f32.gmra.mxu0 %v316
      %v869 = vpop.f32.mrf.mxu0
      %v870 = vadd.f32 %v757, %v869
      %871 = vmatmul.f32.gmra.mxu0 %v317
      %v872 = vpop.f32.mrf.mxu0
      %v873 = vadd.f32 %v760, %v872
      %874 = vmatmul.f32.gmra.mxu0 %v318
      %v875 = vpop.f32.mrf.mxu0
      %v876 = vadd.f32 %v763, %v875
      %877 = vmatmul.f32.gmra.mxu0 %v319
      %v878 = vpop.f32.mrf.mxu0
      %v879 = vadd.f32 %v766, %v878
      %880 = vmatmul.f32.gmra.mxu0 %v320
      %v881 = vpop.f32.mrf.mxu0
      %v882 = vadd.f32 %v769, %v881
      %883 = vdwg.mxu0
      %884 = vmatpush.msra.mxu0 %v511
      %885 = vmatpush.msra.mxu0 %v509
      %886 = vmatpush.msra.mxu0 %v507
      %887 = vmatpush.msra.mxu0 %v505
      %888 = vmatpush.msra.mxu0 %v503
      %889 = vmatpush.msra.mxu0 %v501
      %890 = vmatpush.msra.mxu0 %v499
      %891 = vmatpush.msra.mxu0 %v497
      %892 = vmatpush.msra.mxu0 %v495
      %893 = vmatpush.msra.mxu0 %v493
      %894 = vmatpush.msra.mxu0 %v491
      %895 = vmatpush.msra.mxu0 %v489
      %896 = vmatpush.msra.mxu0 %v487
      %897 = vmatpush.msra.mxu0 %v485
      %898 = vmatpush.msra.mxu0 %v483
      %899 = vmatpush.msra.mxu0 %v481
      %900 = vmatmul.f32.gmra.mxu0 %v321
      %v901 = vpop.f32.mrf.mxu0
      %v902 = vadd.f32 %v789, %v901
      %903 = vmatmul.f32.gmra.mxu0 %v322
      %v904 = vpop.f32.mrf.mxu0
      %v905 = vadd.f32 %v792, %v904
      %906 = vmatmul.f32.gmra.mxu0 %v323
      %v907 = vpop.f32.mrf.mxu0
      %v908 = vadd.f32 %v795, %v907
      %909 = vmatmul.f32.gmra.mxu0 %v324
      %v910 = vpop.f32.mrf.mxu0
      %v911 = vadd.f32 %v798, %v910
      %912 = vmatmul.f32.gmra.mxu0 %v325
      %v913 = vpop.f32.mrf.mxu0
      %v914 = vadd.f32 %v801, %v913
      %915 = vmatmul.f32.gmra.mxu0 %v326
      %v916 = vpop.f32.mrf.mxu0
      %v917 = vadd.f32 %v804, %v916
      %918 = vmatmul.f32.gmra.mxu0 %v327
      %v919 = vpop.f32.mrf.mxu0
      %v920 = vadd.f32 %v807, %v919
      %921 = vmatmul.f32.gmra.mxu0 %v328
      %v922 = vpop.f32.mrf.mxu0
      %v923 = vadd.f32 %v810, %v922
      %924 = vmatmul.f32.gmra.mxu0 %v329
      %v925 = vpop.f32.mrf.mxu0
      %v926 = vadd.f32 %v813, %v925
      %927 = vmatmul.f32.gmra.mxu0 %v330
      %v928 = vpop.f32.mrf.mxu0
      %v929 = vadd.f32 %v816, %v928
      %930 = vmatmul.f32.gmra.mxu0 %v331
      %v931 = vpop.f32.mrf.mxu0
      %v932 = vadd.f32 %v819, %v931
      %933 = vmatmul.f32.gmra.mxu0 %v332
      %v934 = vpop.f32.mrf.mxu0
      %v935 = vadd.f32 %v822, %v934
      %936 = vmatmul.f32.gmra.mxu0 %v333
      %v937 = vpop.f32.mrf.mxu0
      %v938 = vadd.f32 %v825, %v937
      %939 = vmatmul.f32.gmra.mxu0 %v334
      %v940 = vpop.f32.mrf.mxu0
      %v941 = vadd.f32 %v828, %v940
      %942 = vmatmul.f32.gmra.mxu0 %v335
      %v943 = vpop.f32.mrf.mxu0
      %v944 = vadd.f32 %v831, %v943
      %945 = vmatmul.f32.gmra.mxu0 %v336
      %v946 = vpop.f32.mrf.mxu0
      %v947 = vadd.f32 %v834, %v946
      %948 = vmatmul.f32.gmra.mxu0 %v337
      %v949 = vpop.f32.mrf.mxu0
      %v950 = vadd.f32 %v837, %v949
      %951 = vmatmul.f32.gmra.mxu0 %v338
      %v952 = vpop.f32.mrf.mxu0
      %v953 = vadd.f32 %v840, %v952
      %954 = vmatmul.f32.gmra.mxu0 %v339
      %v955 = vpop.f32.mrf.mxu0
      %v956 = vadd.f32 %v843, %v955
      %957 = vmatmul.f32.gmra.mxu0 %v340
      %v958 = vpop.f32.mrf.mxu0
      %v959 = vadd.f32 %v846, %v958
      %960 = vmatmul.f32.gmra.mxu0 %v341
      %v961 = vpop.f32.mrf.mxu0
      %v962 = vadd.f32 %v849, %v961
      %963 = vmatmul.f32.gmra.mxu0 %v342
      %v964 = vpop.f32.mrf.mxu0
      %v965 = vadd.f32 %v852, %v964
      %966 = vmatmul.f32.gmra.mxu0 %v343
      %v967 = vpop.f32.mrf.mxu0
      %v968 = vadd.f32 %v855, %v967
      %969 = vmatmul.f32.gmra.mxu0 %v344
      %v970 = vpop.f32.mrf.mxu0
      %v971 = vadd.f32 %v858, %v970
      %972 = vmatmul.f32.gmra.mxu0 %v345
      %v973 = vpop.f32.mrf.mxu0
      %v974 = vadd.f32 %v861, %v973
      %975 = vmatmul.f32.gmra.mxu0 %v346
      %v976 = vpop.f32.mrf.mxu0
      %v977 = vadd.f32 %v864, %v976
      %978 = vmatmul.f32.gmra.mxu0 %v347
      %v979 = vpop.f32.mrf.mxu0
      %v980 = vadd.f32 %v867, %v979
      %981 = vmatmul.f32.gmra.mxu0 %v348
      %v982 = vpop.f32.mrf.mxu0
      %v983 = vadd.f32 %v870, %v982
      %984 = vmatmul.f32.gmra.mxu0 %v349
      %v985 = vpop.f32.mrf.mxu0
      %v986 = vadd.f32 %v873, %v985
      %987 = vmatmul.f32.gmra.mxu0 %v350
      %v988 = vpop.f32.mrf.mxu0
      %v989 = vadd.f32 %v876, %v988
      %990 = vmatmul.f32.gmra.mxu0 %v351
      %v991 = vpop.f32.mrf.mxu0
      %v992 = vadd.f32 %v879, %v991
      %993 = vmatmul.f32.gmra.mxu0 %v352
      %v994 = vpop.f32.mrf.mxu0
      %v995 = vadd.f32 %v882, %v994
      %996 = vdwg.mxu0
      %997 = vmatpush.msra.mxu0 %v543
      %998 = vmatpush.msra.mxu0 %v541
      %999 = vmatpush.msra.mxu0 %v539
      %1000 = vmatpush.msra.mxu0 %v537
      %1001 = vmatpush.msra.mxu0 %v535
      %1002 = vmatpush.msra.mxu0 %v533
      %1003 = vmatpush.msra.mxu0 %v531
      %1004 = vmatpush.msra.mxu0 %v529
      %1005 = vmatpush.msra.mxu0 %v527
      %1006 = vmatpush.msra.mxu0 %v525
      %1007 = vmatpush.msra.mxu0 %v523
      %1008 = vmatpush.msra.mxu0 %v521
      %1009 = vmatpush.msra.mxu0 %v519
      %1010 = vmatpush.msra.mxu0 %v517
      %1011 = vmatpush.msra.mxu0 %v515
      %1012 = vmatpush.msra.mxu0 %v513
      %1013 = vmatmul.f32.gmra.mxu0 %v353
      %v1014 = vpop.f32.mrf.mxu0
      %v1015 = vadd.f32 %v902, %v1014
      %1016 = vmatmul.f32.gmra.mxu0 %v354
      %v1017 = vpop.f32.mrf.mxu0
      %v1018 = vadd.f32 %v905, %v1017
      %1019 = vmatmul.f32.gmra.mxu0 %v355
      %v1020 = vpop.f32.mrf.mxu0
      %v1021 = vadd.f32 %v908, %v1020
      %1022 = vmatmul.f32.gmra.mxu0 %v356
      %v1023 = vpop.f32.mrf.mxu0
      %v1024 = vadd.f32 %v911, %v1023
      %1025 = vmatmul.f32.gmra.mxu0 %v357
      %v1026 = vpop.f32.mrf.mxu0
      %v1027 = vadd.f32 %v914, %v1026
      %1028 = vmatmul.f32.gmra.mxu0 %v358
      %v1029 = vpop.f32.mrf.mxu0
      %v1030 = vadd.f32 %v917, %v1029
      %1031 = vmatmul.f32.gmra.mxu0 %v359
      %v1032 = vpop.f32.mrf.mxu0
      %v1033 = vadd.f32 %v920, %v1032
      %1034 = vmatmul.f32.gmra.mxu0 %v360
      %v1035 = vpop.f32.mrf.mxu0
      %v1036 = vadd.f32 %v923, %v1035
      %1037 = vmatmul.f32.gmra.mxu0 %v361
      %v1038 = vpop.f32.mrf.mxu0
      %v1039 = vadd.f32 %v926, %v1038
      %1040 = vmatmul.f32.gmra.mxu0 %v362
      %v1041 = vpop.f32.mrf.mxu0
      %v1042 = vadd.f32 %v929, %v1041
      %1043 = vmatmul.f32.gmra.mxu0 %v363
      %v1044 = vpop.f32.mrf.mxu0
      %v1045 = vadd.f32 %v932, %v1044
      %1046 = vmatmul.f32.gmra.mxu0 %v364
      %v1047 = vpop.f32.mrf.mxu0
      %v1048 = vadd.f32 %v935, %v1047
      %1049 = vmatmul.f32.gmra.mxu0 %v365
      %v1050 = vpop.f32.mrf.mxu0
      %v1051 = vadd.f32 %v938, %v1050
      %1052 = vmatmul.f32.gmra.mxu0 %v366
      %v1053 = vpop.f32.mrf.mxu0
      %v1054 = vadd.f32 %v941, %v1053
      %1055 = vmatmul.f32.gmra.mxu0 %v367
      %v1056 = vpop.f32.mrf.mxu0
      %v1057 = vadd.f32 %v944, %v1056
      %1058 = vmatmul.f32.gmra.mxu0 %v368
      %v1059 = vpop.f32.mrf.mxu0
      %v1060 = vadd.f32 %v947, %v1059
      %1061 = vmatmul.f32.gmra.mxu0 %v369
      %v1062 = vpop.f32.mrf.mxu0
      %v1063 = vadd.f32 %v950, %v1062
      %1064 = vmatmul.f32.gmra.mxu0 %v370
      %v1065 = vpop.f32.mrf.mxu0
      %v1066 = vadd.f32 %v953, %v1065
      %1067 = vmatmul.f32.gmra.mxu0 %v371
      %v1068 = vpop.f32.mrf.mxu0
      %v1069 = vadd.f32 %v956, %v1068
      %1070 = vmatmul.f32.gmra.mxu0 %v372
      %v1071 = vpop.f32.mrf.mxu0
      %v1072 = vadd.f32 %v959, %v1071
      %1073 = vmatmul.f32.gmra.mxu0 %v373
      %v1074 = vpop.f32.mrf.mxu0
      %v1075 = vadd.f32 %v962, %v1074
      %1076 = vmatmul.f32.gmra.mxu0 %v374
      %v1077 = vpop.f32.mrf.mxu0
      %v1078 = vadd.f32 %v965, %v1077
      %1079 = vmatmul.f32.gmra.mxu0 %v375
      %v1080 = vpop.f32.mrf.mxu0
      %v1081 = vadd.f32 %v968, %v1080
      %1082 = vmatmul.f32.gmra.mxu0 %v376
      %v1083 = vpop.f32.mrf.mxu0
      %v1084 = vadd.f32 %v971, %v1083
      %1085 = vmatmul.f32.gmra.mxu0 %v377
      %v1086 = vpop.f32.mrf.mxu0
      %v1087 = vadd.f32 %v974, %v1086
      %1088 = vmatmul.f32.gmra.mxu0 %v378
      %v1089 = vpop.f32.mrf.mxu0
      %v1090 = vadd.f32 %v977, %v1089
      %1091 = vmatmul.f32.gmra.mxu0 %v379
      %v1092 = vpop.f32.mrf.mxu0
      %v1093 = vadd.f32 %v980, %v1092
      %1094 = vmatmul.f32.gmra.mxu0 %v380
      %v1095 = vpop.f32.mrf.mxu0
      %v1096 = vadd.f32 %v983, %v1095
      %1097 = vmatmul.f32.gmra.mxu0 %v381
      %v1098 = vpop.f32.mrf.mxu0
      %v1099 = vadd.f32 %v986, %v1098
      %1100 = vmatmul.f32.gmra.mxu0 %v382
      %v1101 = vpop.f32.mrf.mxu0
      %v1102 = vadd.f32 %v989, %v1101
      %1103 = vmatmul.f32.gmra.mxu0 %v383
      %v1104 = vpop.f32.mrf.mxu0
      %v1105 = vadd.f32 %v992, %v1104
      %1106 = vmatmul.f32.gmra.mxu0 %v384
      %v1107 = vpop.f32.mrf.mxu0
      %v1108 = vadd.f32 %v995, %v1107
      %1109 = vdwg.mxu0
      %1110 = vmatpush.msra.mxu0 %v416
      %1111 = vmatpush.msra.mxu0 %v414
      %1112 = vmatpush.msra.mxu0 %v412
      %1113 = vmatpush.msra.mxu0 %v410
      %1114 = vmatpush.msra.mxu0 %v408
      %1115 = vmatpush.msra.mxu0 %v406
      %1116 = vmatpush.msra.mxu0 %v404
      %1117 = vmatpush.msra.mxu0 %v402
      %1118 = vmatpush.msra.mxu0 %v400
      %1119 = vmatpush.msra.mxu0 %v398
      %1120 = vmatpush.msra.mxu0 %v396
      %1121 = vmatpush.msra.mxu0 %v394
      %1122 = vmatpush.msra.mxu0 %v392
      %1123 = vmatpush.msra.mxu0 %v390
      %1124 = vmatpush.msra.mxu0 %v388
      %1125 = vmatpush.msra.mxu0 %v386
      %1126 = vmatmul.f32.gmra.mxu0 %v225
      %v1127 = vpop.f32.mrf.mxu0
      %v1128 = vadd.f32 0.0, %v1127
      %1129 = vmatmul.f32.gmra.mxu0 %v226
      %v1130 = vpop.f32.mrf.mxu0
      %v1131 = vadd.f32 0.0, %v1130
      %1132 = vmatmul.f32.gmra.mxu0 %v227
      %v1133 = vpop.f32.mrf.mxu0
      %v1134 = vadd.f32 0.0, %v1133
      %1135 = vmatmul.f32.gmra.mxu0 %v228
      %v1136 = vpop.f32.mrf.mxu0
      %v1137 = vadd.f32 0.0, %v1136
      %1138 = vmatmul.f32.gmra.mxu0 %v229
      %v1139 = vpop.f32.mrf.mxu0
      %v1140 = vadd.f32 0.0, %v1139
      %1141 = vmatmul.f32.gmra.mxu0 %v230
      %v1142 = vpop.f32.mrf.mxu0
      %v1143 = vadd.f32 0.0, %v1142
      %1144 = vmatmul.f32.gmra.mxu0 %v231
      %v1145 = vpop.f32.mrf.mxu0
      %v1146 = vadd.f32 0.0, %v1145
      %1147 = vmatmul.f32.gmra.mxu0 %v232
      %v1148 = vpop.f32.mrf.mxu0
      %v1149 = vadd.f32 0.0, %v1148
      %1150 = vmatmul.f32.gmra.mxu0 %v233
      %v1151 = vpop.f32.mrf.mxu0
      %v1152 = vadd.f32 0.0, %v1151
      %1153 = vmatmul.f32.gmra.mxu0 %v234
      %v1154 = vpop.f32.mrf.mxu0
      %v1155 = vadd.f32 0.0, %v1154
      %1156 = vmatmul.f32.gmra.mxu0 %v235
      %v1157 = vpop.f32.mrf.mxu0
      %v1158 = vadd.f32 0.0, %v1157
      %1159 = vmatmul.f32.gmra.mxu0 %v236
      %v1160 = vpop.f32.mrf.mxu0
      %v1161 = vadd.f32 0.0, %v1160
      %1162 = vmatmul.f32.gmra.mxu0 %v237
      %v1163 = vpop.f32.mrf.mxu0
      %v1164 = vadd.f32 0.0, %v1163
      %1165 = vmatmul.f32.gmra.mxu0 %v238
      %v1166 = vpop.f32.mrf.mxu0
      %v1167 = vadd.f32 0.0, %v1166
      %1168 = vmatmul.f32.gmra.mxu0 %v239
      %v1169 = vpop.f32.mrf.mxu0
      %v1170 = vadd.f32 0.0, %v1169
      %1171 = vmatmul.f32.gmra.mxu0 %v240
      %v1172 = vpop.f32.mrf.mxu0
      %v1173 = vadd.f32 0.0, %v1172
      %1174 = vmatmul.f32.gmra.mxu0 %v241
      %v1175 = vpop.f32.mrf.mxu0
      %v1176 = vadd.f32 0.0, %v1175
      %1177 = vmatmul.f32.gmra.mxu0 %v242
      %v1178 = vpop.f32.mrf.mxu0
      %v1179 = vadd.f32 0.0, %v1178
      %1180 = vmatmul.f32.gmra.mxu0 %v243
      %v1181 = vpop.f32.mrf.mxu0
      %v1182 = vadd.f32 0.0, %v1181
      %1183 = vmatmul.f32.gmra.mxu0 %v244
      %v1184 = vpop.f32.mrf.mxu0
      %v1185 = vadd.f32 0.0, %v1184
      %1186 = vmatmul.f32.gmra.mxu0 %v245
      %v1187 = vpop.f32.mrf.mxu0
      %v1188 = vadd.f32 0.0, %v1187
      %1189 = vmatmul.f32.gmra.mxu0 %v246
      %v1190 = vpop.f32.mrf.mxu0
      %v1191 = vadd.f32 0.0, %v1190
      %1192 = vmatmul.f32.gmra.mxu0 %v247
      %v1193 = vpop.f32.mrf.mxu0
      %v1194 = vadd.f32 0.0, %v1193
      %1195 = vmatmul.f32.gmra.mxu0 %v248
      %v1196 = vpop.f32.mrf.mxu0
      %v1197 = vadd.f32 0.0, %v1196
      %1198 = vmatmul.f32.gmra.mxu0 %v249
      %v1199 = vpop.f32.mrf.mxu0
      %v1200 = vadd.f32 0.0, %v1199
      %1201 = vmatmul.f32.gmra.mxu0 %v250
      %v1202 = vpop.f32.mrf.mxu0
      %v1203 = vadd.f32 0.0, %v1202
      %1204 = vmatmul.f32.gmra.mxu0 %v251
      %v1205 = vpop.f32.mrf.mxu0
      %v1206 = vadd.f32 0.0, %v1205
      %1207 = vmatmul.f32.gmra.mxu0 %v252
      %v1208 = vpop.f32.mrf.mxu0
      %v1209 = vadd.f32 0.0, %v1208
      %1210 = vmatmul.f32.gmra.mxu0 %v253
      %v1211 = vpop.f32.mrf.mxu0
      %v1212 = vadd.f32 0.0, %v1211
      %1213 = vmatmul.f32.gmra.mxu0 %v254
      %v1214 = vpop.f32.mrf.mxu0
      %v1215 = vadd.f32 0.0, %v1214
      %1216 = vmatmul.f32.gmra.mxu0 %v255
      %v1217 = vpop.f32.mrf.mxu0
      %v1218 = vadd.f32 0.0, %v1217
      %1219 = vmatmul.f32.gmra.mxu0 %v256
      %v1220 = vpop.f32.mrf.mxu0
      %v1221 = vadd.f32 0.0, %v1220
      %1222 = vdwg.mxu0
      %1223 = vmatpush.msra.mxu0 %v448
      %1224 = vmatpush.msra.mxu0 %v446
      %1225 = vmatpush.msra.mxu0 %v444
      %1226 = vmatpush.msra.mxu0 %v442
      %1227 = vmatpush.msra.mxu0 %v440
      %1228 = vmatpush.msra.mxu0 %v438
      %1229 = vmatpush.msra.mxu0 %v436
      %1230 = vmatpush.msra.mxu0 %v434
      %1231 = vmatpush.msra.mxu0 %v432
      %1232 = vmatpush.msra.mxu0 %v430
      %1233 = vmatpush.msra.mxu0 %v428
      %1234 = vmatpush.msra.mxu0 %v426
      %1235 = vmatpush.msra.mxu0 %v424
      %1236 = vmatpush.msra.mxu0 %v422
      %1237 = vmatpush.msra.mxu0 %v420
      %1238 = vmatpush.msra.mxu0 %v418
      %1239 = vmatmul.f32.gmra.mxu0 %v257
      %v1240 = vpop.f32.mrf.mxu0
      %v1241 = vadd.f32 %v1128, %v1240
      %1242 = vmatmul.f32.gmra.mxu0 %v258
      %v1243 = vpop.f32.mrf.mxu0
      %v1244 = vadd.f32 %v1131, %v1243
      %1245 = vmatmul.f32.gmra.mxu0 %v259
      %v1246 = vpop.f32.mrf.mxu0
      %v1247 = vadd.f32 %v1134, %v1246
      %1248 = vmatmul.f32.gmra.mxu0 %v260
      %v1249 = vpop.f32.mrf.mxu0
      %v1250 = vadd.f32 %v1137, %v1249
      %1251 = vmatmul.f32.gmra.mxu0 %v261
      %v1252 = vpop.f32.mrf.mxu0
      %v1253 = vadd.f32 %v1140, %v1252
      %1254 = vmatmul.f32.gmra.mxu0 %v262
      %v1255 = vpop.f32.mrf.mxu0
      %v1256 = vadd.f32 %v1143, %v1255
      %1257 = vmatmul.f32.gmra.mxu0 %v263
      %v1258 = vpop.f32.mrf.mxu0
      %v1259 = vadd.f32 %v1146, %v1258
      %1260 = vmatmul.f32.gmra.mxu0 %v264
      %v1261 = vpop.f32.mrf.mxu0
      %v1262 = vadd.f32 %v1149, %v1261
      %1263 = vmatmul.f32.gmra.mxu0 %v265
      %v1264 = vpop.f32.mrf.mxu0
      %v1265 = vadd.f32 %v1152, %v1264
      %1266 = vmatmul.f32.gmra.mxu0 %v266
      %v1267 = vpop.f32.mrf.mxu0
      %v1268 = vadd.f32 %v1155, %v1267
      %1269 = vmatmul.f32.gmra.mxu0 %v267
      %v1270 = vpop.f32.mrf.mxu0
      %v1271 = vadd.f32 %v1158, %v1270
      %1272 = vmatmul.f32.gmra.mxu0 %v268
      %v1273 = vpop.f32.mrf.mxu0
      %v1274 = vadd.f32 %v1161, %v1273
      %1275 = vmatmul.f32.gmra.mxu0 %v269
      %v1276 = vpop.f32.mrf.mxu0
      %v1277 = vadd.f32 %v1164, %v1276
      %1278 = vmatmul.f32.gmra.mxu0 %v270
      %v1279 = vpop.f32.mrf.mxu0
      %v1280 = vadd.f32 %v1167, %v1279
      %1281 = vmatmul.f32.gmra.mxu0 %v271
      %v1282 = vpop.f32.mrf.mxu0
      %v1283 = vadd.f32 %v1170, %v1282
      %1284 = vmatmul.f32.gmra.mxu0 %v272
      %v1285 = vpop.f32.mrf.mxu0
      %v1286 = vadd.f32 %v1173, %v1285
      %1287 = vmatmul.f32.gmra.mxu0 %v273
      %v1288 = vpop.f32.mrf.mxu0
      %v1289 = vadd.f32 %v1176, %v1288
      %1290 = vmatmul.f32.gmra.mxu0 %v274
      %v1291 = vpop.f32.mrf.mxu0
      %v1292 = vadd.f32 %v1179, %v1291
      %1293 = vmatmul.f32.gmra.mxu0 %v275
      %v1294 = vpop.f32.mrf.mxu0
      %v1295 = vadd.f32 %v1182, %v1294
      %1296 = vmatmul.f32.gmra.mxu0 %v276
      %v1297 = vpop.f32.mrf.mxu0
      %v1298 = vadd.f32 %v1185, %v1297
      %1299 = vmatmul.f32.gmra.mxu0 %v277
      %v1300 = vpop.f32.mrf.mxu0
      %v1301 = vadd.f32 %v1188, %v1300
      %1302 = vmatmul.f32.gmra.mxu0 %v278
      %v1303 = vpop.f32.mrf.mxu0
      %v1304 = vadd.f32 %v1191, %v1303
      %1305 = vmatmul.f32.gmra.mxu0 %v279
      %v1306 = vpop.f32.mrf.mxu0
      %v1307 = vadd.f32 %v1194, %v1306
      %1308 = vmatmul.f32.gmra.mxu0 %v280
      %v1309 = vpop.f32.mrf.mxu0
      %v1310 = vadd.f32 %v1197, %v1309
      %1311 = vmatmul.f32.gmra.mxu0 %v281
      %v1312 = vpop.f32.mrf.mxu0
      %v1313 = vadd.f32 %v1200, %v1312
      %1314 = vmatmul.f32.gmra.mxu0 %v282
      %v1315 = vpop.f32.mrf.mxu0
      %v1316 = vadd.f32 %v1203, %v1315
      %1317 = vmatmul.f32.gmra.mxu0 %v283
      %v1318 = vpop.f32.mrf.mxu0
      %v1319 = vadd.f32 %v1206, %v1318
      %1320 = vmatmul.f32.gmra.mxu0 %v284
      %v1321 = vpop.f32.mrf.mxu0
      %v1322 = vadd.f32 %v1209, %v1321
      %1323 = vmatmul.f32.gmra.mxu0 %v285
      %v1324 = vpop.f32.mrf.mxu0
      %v1325 = vadd.f32 %v1212, %v1324
      %1326 = vmatmul.f32.gmra.mxu0 %v286
      %v1327 = vpop.f32.mrf.mxu0
      %v1328 = vadd.f32 %v1215, %v1327
      %1329 = vmatmul.f32.gmra.mxu0 %v287
      %v1330 = vpop.f32.mrf.mxu0
      %v1331 = vadd.f32 %v1218, %v1330
      %1332 = vmatmul.f32.gmra.mxu0 %v288
      %v1333 = vpop.f32.mrf.mxu0
      %v1334 = vadd.f32 %v1221, %v1333
      %1335 = vdwg.mxu0
      %1336 = vmatpush.msra.mxu0 %v480
      %1337 = vmatpush.msra.mxu0 %v478
      %1338 = vmatpush.msra.mxu0 %v476
      %1339 = vmatpush.msra.mxu0 %v474
      %1340 = vmatpush.msra.mxu0 %v472
      %1341 = vmatpush.msra.mxu0 %v470
      %1342 = vmatpush.msra.mxu0 %v468
      %1343 = vmatpush.msra.mxu0 %v466
      %1344 = vmatpush.msra.mxu0 %v464
      %1345 = vmatpush.msra.mxu0 %v462
      %1346 = vmatpush.msra.mxu0 %v460
      %1347 = vmatpush.msra.mxu0 %v458
      %1348 = vmatpush.msra.mxu0 %v456
      %1349 = vmatpush.msra.mxu0 %v454
      %1350 = vmatpush.msra.mxu0 %v452
      %1351 = vmatpush.msra.mxu0 %v450
      %1352 = vmatmul.f32.gmra.mxu0 %v289
      %v1353 = vpop.f32.mrf.mxu0
      %v1354 = vadd.f32 %v1241, %v1353
      %1355 = vmatmul.f32.gmra.mxu0 %v290
      %v1356 = vpop.f32.mrf.mxu0
      %v1357 = vadd.f32 %v1244, %v1356
      %1358 = vmatmul.f32.gmra.mxu0 %v291
      %v1359 = vpop.f32.mrf.mxu0
      %v1360 = vadd.f32 %v1247, %v1359
      %1361 = vmatmul.f32.gmra.mxu0 %v292
      %v1362 = vpop.f32.mrf.mxu0
      %v1363 = vadd.f32 %v1250, %v1362
      %1364 = vmatmul.f32.gmra.mxu0 %v293
      %v1365 = vpop.f32.mrf.mxu0
      %v1366 = vadd.f32 %v1253, %v1365
      %1367 = vmatmul.f32.gmra.mxu0 %v294
      %v1368 = vpop.f32.mrf.mxu0
      %v1369 = vadd.f32 %v1256, %v1368
      %1370 = vmatmul.f32.gmra.mxu0 %v295
      %v1371 = vpop.f32.mrf.mxu0
      %v1372 = vadd.f32 %v1259, %v1371
      %1373 = vmatmul.f32.gmra.mxu0 %v296
      %v1374 = vpop.f32.mrf.mxu0
      %v1375 = vadd.f32 %v1262, %v1374
      %1376 = vmatmul.f32.gmra.mxu0 %v297
      %v1377 = vpop.f32.mrf.mxu0
      %v1378 = vadd.f32 %v1265, %v1377
      %1379 = vmatmul.f32.gmra.mxu0 %v298
      %v1380 = vpop.f32.mrf.mxu0
      %v1381 = vadd.f32 %v1268, %v1380
      %1382 = vmatmul.f32.gmra.mxu0 %v299
      %v1383 = vpop.f32.mrf.mxu0
      %v1384 = vadd.f32 %v1271, %v1383
      %1385 = vmatmul.f32.gmra.mxu0 %v300
      %v1386 = vpop.f32.mrf.mxu0
      %v1387 = vadd.f32 %v1274, %v1386
      %1388 = vmatmul.f32.gmra.mxu0 %v301
      %v1389 = vpop.f32.mrf.mxu0
      %v1390 = vadd.f32 %v1277, %v1389
      %1391 = vmatmul.f32.gmra.mxu0 %v302
      %v1392 = vpop.f32.mrf.mxu0
      %v1393 = vadd.f32 %v1280, %v1392
      %1394 = vmatmul.f32.gmra.mxu0 %v303
      %v1395 = vpop.f32.mrf.mxu0
      %v1396 = vadd.f32 %v1283, %v1395
      %1397 = vmatmul.f32.gmra.mxu0 %v304
      %v1398 = vpop.f32.mrf.mxu0
      %v1399 = vadd.f32 %v1286, %v1398
      %1400 = vmatmul.f32.gmra.mxu0 %v305
      %v1401 = vpop.f32.mrf.mxu0
      %v1402 = vadd.f32 %v1289, %v1401
      %1403 = vmatmul.f32.gmra.mxu0 %v306
      %v1404 = vpop.f32.mrf.mxu0
      %v1405 = vadd.f32 %v1292, %v1404
      %1406 = vmatmul.f32.gmra.mxu0 %v307
      %v1407 = vpop.f32.mrf.mxu0
      %v1408 = vadd.f32 %v1295, %v1407
      %1409 = vmatmul.f32.gmra.mxu0 %v308
      %v1410 = vpop.f32.mrf.mxu0
      %v1411 = vadd.f32 %v1298, %v1410
      %1412 = vmatmul.f32.gmra.mxu0 %v309
      %v1413 = vpop.f32.mrf.mxu0
      %v1414 = vadd.f32 %v1301, %v1413
      %1415 = vmatmul.f32.gmra.mxu0 %v310
      %v1416 = vpop.f32.mrf.mxu0
      %v1417 = vadd.f32 %v1304, %v1416
      %1418 = vmatmul.f32.gmra.mxu0 %v311
      %v1419 = vpop.f32.mrf.mxu0
      %v1420 = vadd.f32 %v1307, %v1419
      %1421 = vmatmul.f32.gmra.mxu0 %v312
      %v1422 = vpop.f32.mrf.mxu0
      %v1423 = vadd.f32 %v1310, %v1422
      %1424 = vmatmul.f32.gmra.mxu0 %v313
      %v1425 = vpop.f32.mrf.mxu0
      %v1426 = vadd.f32 %v1313, %v1425
      %1427 = vmatmul.f32.gmra.mxu0 %v314
      %v1428 = vpop.f32.mrf.mxu0
      %v1429 = vadd.f32 %v1316, %v1428
      %1430 = vmatmul.f32.gmra.mxu0 %v315
      %v1431 = vpop.f32.mrf.mxu0
      %v1432 = vadd.f32 %v1319, %v1431
      %1433 = vmatmul.f32.gmra.mxu0 %v316
      %v1434 = vpop.f32.mrf.mxu0
      %v1435 = vadd.f32 %v1322, %v1434
      %1436 = vmatmul.f32.gmra.mxu0 %v317
      %v1437 = vpop.f32.mrf.mxu0
      %v1438 = vadd.f32 %v1325, %v1437
      %1439 = vmatmul.f32.gmra.mxu0 %v318
      %v1440 = vpop.f32.mrf.mxu0
      %v1441 = vadd.f32 %v1328, %v1440
      %1442 = vmatmul.f32.gmra.mxu0 %v319
      %v1443 = vpop.f32.mrf.mxu0
      %v1444 = vadd.f32 %v1331, %v1443
      %1445 = vmatmul.f32.gmra.mxu0 %v320
      %v1446 = vpop.f32.mrf.mxu0
      %v1447 = vadd.f32 %v1334, %v1446
      %1448 = vdwg.mxu0
      %1449 = vmatpush.msra.mxu0 %v512
      %1450 = vmatpush.msra.mxu0 %v510
      %1451 = vmatpush.msra.mxu0 %v508
      %1452 = vmatpush.msra.mxu0 %v506
      %1453 = vmatpush.msra.mxu0 %v504
      %1454 = vmatpush.msra.mxu0 %v502
      %1455 = vmatpush.msra.mxu0 %v500
      %1456 = vmatpush.msra.mxu0 %v498
      %1457 = vmatpush.msra.mxu0 %v496
      %1458 = vmatpush.msra.mxu0 %v494
      %1459 = vmatpush.msra.mxu0 %v492
      %1460 = vmatpush.msra.mxu0 %v490
      %1461 = vmatpush.msra.mxu0 %v488
      %1462 = vmatpush.msra.mxu0 %v486
      %1463 = vmatpush.msra.mxu0 %v484
      %1464 = vmatpush.msra.mxu0 %v482
      %1465 = vmatmul.f32.gmra.mxu0 %v321
      %v1466 = vpop.f32.mrf.mxu0
      %v1467 = vadd.f32 %v1354, %v1466
      %1468 = vmatmul.f32.gmra.mxu0 %v322
      %v1469 = vpop.f32.mrf.mxu0
      %v1470 = vadd.f32 %v1357, %v1469
      %1471 = vmatmul.f32.gmra.mxu0 %v323
      %v1472 = vpop.f32.mrf.mxu0
      %v1473 = vadd.f32 %v1360, %v1472
      %1474 = vmatmul.f32.gmra.mxu0 %v324
      %v1475 = vpop.f32.mrf.mxu0
      %v1476 = vadd.f32 %v1363, %v1475
      %1477 = vmatmul.f32.gmra.mxu0 %v325
      %v1478 = vpop.f32.mrf.mxu0
      %v1479 = vadd.f32 %v1366, %v1478
      %1480 = vmatmul.f32.gmra.mxu0 %v326
      %v1481 = vpop.f32.mrf.mxu0
      %v1482 = vadd.f32 %v1369, %v1481
      %1483 = vmatmul.f32.gmra.mxu0 %v327
      %v1484 = vpop.f32.mrf.mxu0
      %v1485 = vadd.f32 %v1372, %v1484
      %1486 = vmatmul.f32.gmra.mxu0 %v328
      %v1487 = vpop.f32.mrf.mxu0
      %v1488 = vadd.f32 %v1375, %v1487
      %1489 = vmatmul.f32.gmra.mxu0 %v329
      %v1490 = vpop.f32.mrf.mxu0
      %v1491 = vadd.f32 %v1378, %v1490
      %1492 = vmatmul.f32.gmra.mxu0 %v330
      %v1493 = vpop.f32.mrf.mxu0
      %v1494 = vadd.f32 %v1381, %v1493
      %1495 = vmatmul.f32.gmra.mxu0 %v331
      %v1496 = vpop.f32.mrf.mxu0
      %v1497 = vadd.f32 %v1384, %v1496
      %1498 = vmatmul.f32.gmra.mxu0 %v332
      %v1499 = vpop.f32.mrf.mxu0
      %v1500 = vadd.f32 %v1387, %v1499
      %1501 = vmatmul.f32.gmra.mxu0 %v333
      %v1502 = vpop.f32.mrf.mxu0
      %v1503 = vadd.f32 %v1390, %v1502
      %1504 = vmatmul.f32.gmra.mxu0 %v334
      %v1505 = vpop.f32.mrf.mxu0
      %v1506 = vadd.f32 %v1393, %v1505
      %1507 = vmatmul.f32.gmra.mxu0 %v335
      %v1508 = vpop.f32.mrf.mxu0
      %v1509 = vadd.f32 %v1396, %v1508
      %1510 = vmatmul.f32.gmra.mxu0 %v336
      %v1511 = vpop.f32.mrf.mxu0
      %v1512 = vadd.f32 %v1399, %v1511
      %1513 = vmatmul.f32.gmra.mxu0 %v337
      %v1514 = vpop.f32.mrf.mxu0
      %v1515 = vadd.f32 %v1402, %v1514
      %1516 = vmatmul.f32.gmra.mxu0 %v338
      %v1517 = vpop.f32.mrf.mxu0
      %v1518 = vadd.f32 %v1405, %v1517
      %1519 = vmatmul.f32.gmra.mxu0 %v339
      %v1520 = vpop.f32.mrf.mxu0
      %v1521 = vadd.f32 %v1408, %v1520
      %1522 = vmatmul.f32.gmra.mxu0 %v340
      %v1523 = vpop.f32.mrf.mxu0
      %v1524 = vadd.f32 %v1411, %v1523
      %1525 = vmatmul.f32.gmra.mxu0 %v341
      %v1526 = vpop.f32.mrf.mxu0
      %v1527 = vadd.f32 %v1414, %v1526
      %1528 = vmatmul.f32.gmra.mxu0 %v342
      %v1529 = vpop.f32.mrf.mxu0
      %v1530 = vadd.f32 %v1417, %v1529
      %1531 = vmatmul.f32.gmra.mxu0 %v343
      %v1532 = vpop.f32.mrf.mxu0
      %v1533 = vadd.f32 %v1420, %v1532
      %1534 = vmatmul.f32.gmra.mxu0 %v344
      %v1535 = vpop.f32.mrf.mxu0
      %v1536 = vadd.f32 %v1423, %v1535
      %1537 = vmatmul.f32.gmra.mxu0 %v345
      %v1538 = vpop.f32.mrf.mxu0
      %v1539 = vadd.f32 %v1426, %v1538
      %1540 = vmatmul.f32.gmra.mxu0 %v346
      %v1541 = vpop.f32.mrf.mxu0
      %v1542 = vadd.f32 %v1429, %v1541
      %1543 = vmatmul.f32.gmra.mxu0 %v347
      %v1544 = vpop.f32.mrf.mxu0
      %v1545 = vadd.f32 %v1432, %v1544
      %1546 = vmatmul.f32.gmra.mxu0 %v348
      %v1547 = vpop.f32.mrf.mxu0
      %v1548 = vadd.f32 %v1435, %v1547
      %1549 = vmatmul.f32.gmra.mxu0 %v349
      %v1550 = vpop.f32.mrf.mxu0
      %v1551 = vadd.f32 %v1438, %v1550
      %1552 = vmatmul.f32.gmra.mxu0 %v350
      %v1553 = vpop.f32.mrf.mxu0
      %v1554 = vadd.f32 %v1441, %v1553
      %1555 = vmatmul.f32.gmra.mxu0 %v351
      %v1556 = vpop.f32.mrf.mxu0
      %v1557 = vadd.f32 %v1444, %v1556
      %1558 = vmatmul.f32.gmra.mxu0 %v352
      %v1559 = vpop.f32.mrf.mxu0
      %v1560 = vadd.f32 %v1447, %v1559
      %1561 = vdwg.mxu0
      %1562 = vmatpush.msra.mxu0 %v544
      %1563 = vmatpush.msra.mxu0 %v542
      %1564 = vmatpush.msra.mxu0 %v540
      %1565 = vmatpush.msra.mxu0 %v538
      %1566 = vmatpush.msra.mxu0 %v536
      %1567 = vmatpush.msra.mxu0 %v534
      %1568 = vmatpush.msra.mxu0 %v532
      %1569 = vmatpush.msra.mxu0 %v530
      %1570 = vmatpush.msra.mxu0 %v528
      %1571 = vmatpush.msra.mxu0 %v526
      %1572 = vmatpush.msra.mxu0 %v524
      %1573 = vmatpush.msra.mxu0 %v522
      %1574 = vmatpush.msra.mxu0 %v520
      %1575 = vmatpush.msra.mxu0 %v518
      %1576 = vmatpush.msra.mxu0 %v516
      %1577 = vmatpush.msra.mxu0 %v514
      %1578 = vmatmul.f32.gmra.mxu0 %v353
      %v1579 = vpop.f32.mrf.mxu0
      %v1580 = vadd.f32 %v1467, %v1579
      %1581 = vmatmul.f32.gmra.mxu0 %v354
      %v1582 = vpop.f32.mrf.mxu0
      %v1583 = vadd.f32 %v1470, %v1582
      %1584 = vmatmul.f32.gmra.mxu0 %v355
      %v1585 = vpop.f32.mrf.mxu0
      %v1586 = vadd.f32 %v1473, %v1585
      %1587 = vmatmul.f32.gmra.mxu0 %v356
      %v1588 = vpop.f32.mrf.mxu0
      %v1589 = vadd.f32 %v1476, %v1588
      %1590 = vmatmul.f32.gmra.mxu0 %v357
      %v1591 = vpop.f32.mrf.mxu0
      %v1592 = vadd.f32 %v1479, %v1591
      %1593 = vmatmul.f32.gmra.mxu0 %v358
      %v1594 = vpop.f32.mrf.mxu0
      %v1595 = vadd.f32 %v1482, %v1594
      %1596 = vmatmul.f32.gmra.mxu0 %v359
      %v1597 = vpop.f32.mrf.mxu0
      %v1598 = vadd.f32 %v1485, %v1597
      %1599 = vmatmul.f32.gmra.mxu0 %v360
      %v1600 = vpop.f32.mrf.mxu0
      %v1601 = vadd.f32 %v1488, %v1600
      %1602 = vmatmul.f32.gmra.mxu0 %v361
      %v1603 = vpop.f32.mrf.mxu0
      %v1604 = vadd.f32 %v1491, %v1603
      %1605 = vmatmul.f32.gmra.mxu0 %v362
      %v1606 = vpop.f32.mrf.mxu0
      %v1607 = vadd.f32 %v1494, %v1606
      %1608 = vmatmul.f32.gmra.mxu0 %v363
      %v1609 = vpop.f32.mrf.mxu0
      %v1610 = vadd.f32 %v1497, %v1609
      %1611 = vmatmul.f32.gmra.mxu0 %v364
      %v1612 = vpop.f32.mrf.mxu0
      %v1613 = vadd.f32 %v1500, %v1612
      %1614 = vmatmul.f32.gmra.mxu0 %v365
      %v1615 = vpop.f32.mrf.mxu0
      %v1616 = vadd.f32 %v1503, %v1615
      %1617 = vmatmul.f32.gmra.mxu0 %v366
      %v1618 = vpop.f32.mrf.mxu0
      %v1619 = vadd.f32 %v1506, %v1618
      %1620 = vmatmul.f32.gmra.mxu0 %v367
      %v1621 = vpop.f32.mrf.mxu0
      %v1622 = vadd.f32 %v1509, %v1621
      %1623 = vmatmul.f32.gmra.mxu0 %v368
      %v1624 = vpop.f32.mrf.mxu0
      %v1625 = vadd.f32 %v1512, %v1624
      %1626 = vmatmul.f32.gmra.mxu0 %v369
      %v1627 = vpop.f32.mrf.mxu0
      %v1628 = vadd.f32 %v1515, %v1627
      %1629 = vmatmul.f32.gmra.mxu0 %v370
      %v1630 = vpop.f32.mrf.mxu0
      %v1631 = vadd.f32 %v1518, %v1630
      %1632 = vmatmul.f32.gmra.mxu0 %v371
      %v1633 = vpop.f32.mrf.mxu0
      %v1634 = vadd.f32 %v1521, %v1633
      %1635 = vmatmul.f32.gmra.mxu0 %v372
      %v1636 = vpop.f32.mrf.mxu0
      %v1637 = vadd.f32 %v1524, %v1636
      %1638 = vmatmul.f32.gmra.mxu0 %v373
      %v1639 = vpop.f32.mrf.mxu0
      %v1640 = vadd.f32 %v1527, %v1639
      %1641 = vmatmul.f32.gmra.mxu0 %v374
      %v1642 = vpop.f32.mrf.mxu0
      %v1643 = vadd.f32 %v1530, %v1642
      %1644 = vmatmul.f32.gmra.mxu0 %v375
      %v1645 = vpop.f32.mrf.mxu0
      %v1646 = vadd.f32 %v1533, %v1645
      %1647 = vmatmul.f32.gmra.mxu0 %v376
      %v1648 = vpop.f32.mrf.mxu0
      %v1649 = vadd.f32 %v1536, %v1648
      %1650 = vmatmul.f32.gmra.mxu0 %v377
      %v1651 = vpop.f32.mrf.mxu0
      %v1652 = vadd.f32 %v1539, %v1651
      %1653 = vmatmul.f32.gmra.mxu0 %v378
      %v1654 = vpop.f32.mrf.mxu0
      %v1655 = vadd.f32 %v1542, %v1654
      %1656 = vmatmul.f32.gmra.mxu0 %v379
      %v1657 = vpop.f32.mrf.mxu0
      %v1658 = vadd.f32 %v1545, %v1657
      %1659 = vmatmul.f32.gmra.mxu0 %v380
      %v1660 = vpop.f32.mrf.mxu0
      %v1661 = vadd.f32 %v1548, %v1660
      %1662 = vmatmul.f32.gmra.mxu0 %v381
      %v1663 = vpop.f32.mrf.mxu0
      %v1664 = vadd.f32 %v1551, %v1663
      %1665 = vmatmul.f32.gmra.mxu0 %v382
      %v1666 = vpop.f32.mrf.mxu0
      %v1667 = vadd.f32 %v1554, %v1666
      %1668 = vmatmul.f32.gmra.mxu0 %v383
      %v1669 = vpop.f32.mrf.mxu0
      %v1670 = vadd.f32 %v1557, %v1669
      %1671 = vmatmul.f32.gmra.mxu0 %v384
      %v1672 = vpop.f32.mrf.mxu0
      %v1673 = vadd.f32 %v1560, %v1672
      %1674 = vdwg.mxu0
      %v1675 = vld [vmem:[%s4] sm:$0x1]
      %v1676 = vmax.f32 %v1015, %v1580
      %v1677 = vmax.f32 %v1018, %v1583
      %v1678 = vmax.f32 %v1021, %v1586
      %v1679 = vmax.f32 %v1024, %v1589
      %v1680 = vmax.f32 %v1027, %v1592
      %v1681 = vmax.f32 %v1030, %v1595
      %v1682 = vmax.f32 %v1033, %v1598
      %v1683 = vmax.f32 %v1036, %v1601
      %v1684 = vmax.f32 %v1039, %v1604
      %v1685 = vmax.f32 %v1042, %v1607
      %v1686 = vmax.f32 %v1045, %v1610
      %v1687 = vmax.f32 %v1048, %v1613
      %v1688 = vmax.f32 %v1051, %v1616
      %v1689 = vmax.f32 %v1054, %v1619
      %v1690 = vmax.f32 %v1057, %v1622
      %v1691 = vmax.f32 %v1060, %v1625
      %v1692 = vmax.f32 %v1063, %v1628
      %v1693 = vmax.f32 %v1066, %v1631
      %v1694 = vmax.f32 %v1069, %v1634
      %v1695 = vmax.f32 %v1072, %v1637
      %v1696 = vmax.f32 %v1075, %v1640
      %v1697 = vmax.f32 %v1078, %v1643
      %v1698 = vmax.f32 %v1081, %v1646
      %v1699 = vmax.f32 %v1084, %v1649
      %v1700 = vmax.f32 %v1087, %v1652
      %v1701 = vmax.f32 %v1090, %v1655
      %v1702 = vmax.f32 %v1093, %v1658
      %v1703 = vmax.f32 %v1096, %v1661
      %v1704 = vmax.f32 %v1099, %v1664
      %v1705 = vmax.f32 %v1102, %v1667
      %v1706 = vmax.f32 %v1105, %v1670
      %v1707 = vmax.f32 %v1108, %v1673
      %v1708 = vperm.slane %v1675, 0
      %v1709 = vadd.f32 %v1676, %v1708
      %v1710 = vadd.f32 %v1677, %v1708
      %v1711 = vadd.f32 %v1678, %v1708
      %v1712 = vadd.f32 %v1679, %v1708
      %v1713 = vadd.f32 %v1680, %v1708
      %v1714 = vadd.f32 %v1681, %v1708
      %v1715 = vadd.f32 %v1682, %v1708
      %v1716 = vadd.f32 %v1683, %v1708
      %v1717 = vadd.f32 %v1684, %v1708
      %v1718 = vadd.f32 %v1685, %v1708
      %v1719 = vadd.f32 %v1686, %v1708
      %v1720 = vadd.f32 %v1687, %v1708
      %v1721 = vadd.f32 %v1688, %v1708
      %v1722 = vadd.f32 %v1689, %v1708
      %v1723 = vadd.f32 %v1690, %v1708
      %v1724 = vadd.f32 %v1691, %v1708
      %v1725 = vadd.f32 %v1692, %v1708
      %v1726 = vadd.f32 %v1693, %v1708
      %v1727 = vadd.f32 %v1694, %v1708
      %v1728 = vadd.f32 %v1695, %v1708
      %v1729 = vadd.f32 %v1696, %v1708
      %v1730 = vadd.f32 %v1697, %v1708
      %v1731 = vadd.f32 %v1698, %v1708
      %v1732 = vadd.f32 %v1699, %v1708
      %v1733 = vadd.f32 %v1700, %v1708
      %v1734 = vadd.f32 %v1701, %v1708
      %v1735 = vadd.f32 %v1702, %v1708
      %v1736 = vadd.f32 %v1703, %v1708
      %v1737 = vadd.f32 %v1704, %v1708
      %v1738 = vadd.f32 %v1705, %v1708
      %v1739 = vadd.f32 %v1706, %v1708
      %v1740 = vadd.f32 %v1707, %v1708
      %v1741 = vmax.f32 %v1709, 0.0
      %v1742 = vmax.f32 %v1710, 0.0
      %v1743 = vmax.f32 %v1711, 0.0
      %v1744 = vmax.f32 %v1712, 0.0
      %v1745 = vmax.f32 %v1713, 0.0
      %v1746 = vmax.f32 %v1714, 0.0
      %v1747 = vmax.f32 %v1715, 0.0
      %v1748 = vmax.f32 %v1716, 0.0
      %v1749 = vmax.f32 %v1717, 0.0
      %v1750 = vmax.f32 %v1718, 0.0
      %v1751 = vmax.f32 %v1719, 0.0
      %v1752 = vmax.f32 %v1720, 0.0
      %v1753 = vmax.f32 %v1721, 0.0
      %v1754 = vmax.f32 %v1722, 0.0
      %v1755 = vmax.f32 %v1723, 0.0
      %v1756 = vmax.f32 %v1724, 0.0
      %v1757 = vmax.f32 %v1725, 0.0
      %v1758 = vmax.f32 %v1726, 0.0
      %v1759 = vmax.f32 %v1727, 0.0
      %v1760 = vmax.f32 %v1728, 0.0
      %v1761 = vmax.f32 %v1729, 0.0
      %v1762 = vmax.f32 %v1730, 0.0
      %v1763 = vmax.f32 %v1731, 0.0
      %v1764 = vmax.f32 %v1732, 0.0
      %v1765 = vmax.f32 %v1733, 0.0
      %v1766 = vmax.f32 %v1734, 0.0
      %v1767 = vmax.f32 %v1735, 0.0
      %v1768 = vmax.f32 %v1736, 0.0
      %v1769 = vmax.f32 %v1737, 0.0
      %v1770 = vmax.f32 %v1738, 0.0
      %v1771 = vmax.f32 %v1739, 0.0
      %v1772 = vmax.f32 %v1740, 0.0
      %vm1805 = vcmask 1046528
      %v1806 = vrot.slane %v1741, 1
      %v1807 = vrot.slane %v1742, 1
      %v1808 = vsel %vm1805, %v1806, %v1807
      %v1809 = vrot.slane %v1743, 1
      %v1810 = vsel %vm1805, %v1807, %v1809
      %v1811 = vrot.slane %v1744, 1
      %v1812 = vsel %vm1805, %v1809, %v1811
      %v1813 = vrot.slane %v1745, 1
      %v1814 = vsel %vm1805, %v1811, %v1813
      %v1815 = vrot.slane %v1746, 1
      %v1816 = vsel %vm1805, %v1813, %v1815
      %v1817 = vrot.slane %v1747, 1
      %v1818 = vsel %vm1805, %v1815, %v1817
      %v1819 = vrot.slane %v1748, 1
      %v1820 = vsel %vm1805, %v1817, %v1819
      %v1821 = vrot.slane %v1749, 1
      %v1822 = vsel %vm1805, %v1819, %v1821
      %v1823 = vrot.slane %v1750, 1
      %v1824 = vsel %vm1805, %v1821, %v1823
      %v1825 = vrot.slane %v1751, 1
      %v1826 = vsel %vm1805, %v1823, %v1825
      %v1827 = vrot.slane %v1752, 1
      %v1828 = vsel %vm1805, %v1825, %v1827
      %v1829 = vrot.slane %v1753, 1
      %v1830 = vsel %vm1805, %v1827, %v1829
      %v1831 = vrot.slane %v1754, 1
      %v1832 = vsel %vm1805, %v1829, %v1831
      %v1833 = vrot.slane %v1755, 1
      %v1834 = vsel %vm1805, %v1831, %v1833
      %v1835 = vrot.slane %v1756, 1
      %v1836 = vsel %vm1805, %v1833, %v1835
      %v1837 = vrot.slane %v1757, 1
      %v1838 = vsel %vm1805, %v1835, %v1837
      %v1839 = vrot.slane %v1758, 1
      %v1840 = vsel %vm1805, %v1837, %v1839
      %v1841 = vrot.slane %v1759, 1
      %v1842 = vsel %vm1805, %v1839, %v1841
      %v1843 = vrot.slane %v1760, 1
      %v1844 = vsel %vm1805, %v1841, %v1843
      %v1845 = vrot.slane %v1761, 1
      %v1846 = vsel %vm1805, %v1843, %v1845
      %v1847 = vrot.slane %v1762, 1
      %v1848 = vsel %vm1805, %v1845, %v1847
      %v1849 = vrot.slane %v1763, 1
      %v1850 = vsel %vm1805, %v1847, %v1849
      %v1851 = vrot.slane %v1764, 1
      %v1852 = vsel %vm1805, %v1849, %v1851
      %v1853 = vrot.slane %v1765, 1
      %v1854 = vsel %vm1805, %v1851, %v1853
      %v1855 = vrot.slane %v1766, 1
      %v1856 = vsel %vm1805, %v1853, %v1855
      %v1857 = vrot.slane %v1767, 1
      %v1858 = vsel %vm1805, %v1855, %v1857
      %v1859 = vrot.slane %v1768, 1
      %v1860 = vsel %vm1805, %v1857, %v1859
      %v1861 = vrot.slane %v1769, 1
      %v1862 = vsel %vm1805, %v1859, %v1861
      %v1863 = vrot.slane %v1770, 1
      %v1864 = vsel %vm1805, %v1861, %v1863
      %v1865 = vrot.slane %v1771, 1
      %v1866 = vsel %vm1805, %v1863, %v1865
      %v1867 = vrot.slane %v1772, 1
      %v1868 = vsel %vm1805, %v1865, %v1867
      %v1901 = vmax.f32 %v1741, %v1808
      %v1902 = vmax.f32 %v1742, %v1810
      %v1903 = vmax.f32 %v1743, %v1812
      %v1904 = vmax.f32 %v1744, %v1814
      %v1905 = vmax.f32 %v1745, %v1816
      %v1906 = vmax.f32 %v1746, %v1818
      %v1907 = vmax.f32 %v1747, %v1820
      %v1908 = vmax.f32 %v1748, %v1822
      %v1909 = vmax.f32 %v1749, %v1824
      %v1910 = vmax.f32 %v1750, %v1826
      %v1911 = vmax.f32 %v1751, %v1828
      %v1912 = vmax.f32 %v1752, %v1830
      %v1913 = vmax.f32 %v1753, %v1832
      %v1914 = vmax.f32 %v1754, %v1834
      %v1915 = vmax.f32 %v1755, %v1836
      %v1916 = vmax.f32 %v1756, %v1838
      %v1917 = vmax.f32 %v1757, %v1840
      %v1918 = vmax.f32 %v1758, %v1842
      %v1919 = vmax.f32 %v1759, %v1844
      %v1920 = vmax.f32 %v1760, %v1846
      %v1921 = vmax.f32 %v1761, %v1848
      %v1922 = vmax.f32 %v1762, %v1850
      %v1923 = vmax.f32 %v1763, %v1852
      %v1924 = vmax.f32 %v1764, %v1854
      %v1925 = vmax.f32 %v1765, %v1856
      %v1926 = vmax.f32 %v1766, %v1858
      %v1927 = vmax.f32 %v1767, %v1860
      %v1928 = vmax.f32 %v1768, %v1862
      %v1929 = vmax.f32 %v1769, %v1864
      %v1930 = vmax.f32 %v1770, %v1866
      %v1931 = vmax.f32 %v1771, %v1868
      %v1932 = vmax.f32 %v1772, %v1867
      %vm1964 = vcmask 1045504
      %v1965 = vrot.slane %v1901, 2
      %v1966 = vrot.slane %v1902, 2
      %v1967 = vsel %vm1964, %v1965, %v1966
      %v1968 = vrot.slane %v1903, 2
      %v1969 = vsel %vm1964, %v1966, %v1968
      %v1970 = vrot.slane %v1904, 2
      %v1971 = vsel %vm1964, %v1968, %v1970
      %v1972 = vrot.slane %v1905, 2
      %v1973 = vsel %vm1964, %v1970, %v1972
      %v1974 = vrot.slane %v1906, 2
      %v1975 = vsel %vm1964, %v1972, %v1974
      %v1976 = vrot.slane %v1907, 2
      %v1977 = vsel %vm1964, %v1974, %v1976
      %v1978 = vrot.slane %v1908, 2
      %v1979 = vsel %vm1964, %v1976, %v1978
      %v1980 = vrot.slane %v1909, 2
      %v1981 = vsel %vm1964, %v1978, %v1980
      %v1982 = vrot.slane %v1910, 2
      %v1983 = vsel %vm1964, %v1980, %v1982
      %v1984 = vrot.slane %v1911, 2
      %v1985 = vsel %vm1964, %v1982, %v1984
      %v1986 = vrot.slane %v1912, 2
      %v1987 = vsel %vm1964, %v1984, %v1986
      %v1988 = vrot.slane %v1913, 2
      %v1989 = vsel %vm1964, %v1986, %v1988
      %v1990 = vrot.slane %v1914, 2
      %v1991 = vsel %vm1964, %v1988, %v1990
      %v1992 = vrot.slane %v1915, 2
      %v1993 = vsel %vm1964, %v1990, %v1992
      %v1994 = vrot.slane %v1916, 2
      %v1995 = vsel %vm1964, %v1992, %v1994
      %v1996 = vrot.slane %v1917, 2
      %v1997 = vsel %vm1964, %v1994, %v1996
      %v1998 = vrot.slane %v1918, 2
      %v1999 = vsel %vm1964, %v1996, %v1998
      %v2000 = vrot.slane %v1919, 2
      %v2001 = vsel %vm1964, %v1998, %v2000
      %v2002 = vrot.slane %v1920, 2
      %v2003 = vsel %vm1964, %v2000, %v2002
      %v2004 = vrot.slane %v1921, 2
      %v2005 = vsel %vm1964, %v2002, %v2004
      %v2006 = vrot.slane %v1922, 2
      %v2007 = vsel %vm1964, %v2004, %v2006
      %v2008 = vrot.slane %v1923, 2
      %v2009 = vsel %vm1964, %v2006, %v2008
      %v2010 = vrot.slane %v1924, 2
      %v2011 = vsel %vm1964, %v2008, %v2010
      %v2012 = vrot.slane %v1925, 2
      %v2013 = vsel %vm1964, %v2010, %v2012
      %v2014 = vrot.slane %v1926, 2
      %v2015 = vsel %vm1964, %v2012, %v2014
      %v2016 = vrot.slane %v1927, 2
      %v2017 = vsel %vm1964, %v2014, %v2016
      %v2018 = vrot.slane %v1928, 2
      %v2019 = vsel %vm1964, %v2016, %v2018
      %v2020 = vrot.slane %v1929, 2
      %v2021 = vsel %vm1964, %v2018, %v2020
      %v2022 = vrot.slane %v1930, 2
      %v2023 = vsel %vm1964, %v2020, %v2022
      %v2024 = vrot.slane %v1931, 2
      %v2025 = vsel %vm1964, %v2022, %v2024
      %vm2057 = vcmask 1043456
      %v2058 = vrot.slane %v1901, 4
      %v2059 = vrot.slane %v1902, 4
      %v2060 = vsel %vm2057, %v2058, %v2059
      %v2061 = vrot.slane %v1903, 4
      %v2062 = vsel %vm2057, %v2059, %v2061
      %v2063 = vrot.slane %v1904, 4
      %v2064 = vsel %vm2057, %v2061, %v2063
      %v2065 = vrot.slane %v1905, 4
      %v2066 = vsel %vm2057, %v2063, %v2065
      %v2067 = vrot.slane %v1906, 4
      %v2068 = vsel %vm2057, %v2065, %v2067
      %v2069 = vrot.slane %v1907, 4
      %v2070 = vsel %vm2057, %v2067, %v2069
      %v2071 = vrot.slane %v1908, 4
      %v2072 = vsel %vm2057, %v2069, %v2071
      %v2073 = vrot.slane %v1909, 4
      %v2074 = vsel %vm2057, %v2071, %v2073
      %v2075 = vrot.slane %v1910, 4
      %v2076 = vsel %vm2057, %v2073, %v2075
      %v2077 = vrot.slane %v1911, 4
      %v2078 = vsel %vm2057, %v2075, %v2077
      %v2079 = vrot.slane %v1912, 4
      %v2080 = vsel %vm2057, %v2077, %v2079
      %v2081 = vrot.slane %v1913, 4
      %v2082 = vsel %vm2057, %v2079, %v2081
      %v2083 = vrot.slane %v1914, 4
      %v2084 = vsel %vm2057, %v2081, %v2083
      %v2085 = vrot.slane %v1915, 4
      %v2086 = vsel %vm2057, %v2083, %v2085
      %v2087 = vrot.slane %v1916, 4
      %v2088 = vsel %vm2057, %v2085, %v2087
      %v2089 = vrot.slane %v1917, 4
      %v2090 = vsel %vm2057, %v2087, %v2089
      %v2091 = vrot.slane %v1918, 4
      %v2092 = vsel %vm2057, %v2089, %v2091
      %v2093 = vrot.slane %v1919, 4
      %v2094 = vsel %vm2057, %v2091, %v2093
      %v2095 = vrot.slane %v1920, 4
      %v2096 = vsel %vm2057, %v2093, %v2095
      %v2097 = vrot.slane %v1921, 4
      %v2098 = vsel %vm2057, %v2095, %v2097
      %v2099 = vrot.slane %v1922, 4
      %v2100 = vsel %vm2057, %v2097, %v2099
      %v2101 = vrot.slane %v1923, 4
      %v2102 = vsel %vm2057, %v2099, %v2101
      %v2103 = vrot.slane %v1924, 4
      %v2104 = vsel %vm2057, %v2101, %v2103
      %v2105 = vrot.slane %v1925, 4
      %v2106 = vsel %vm2057, %v2103, %v2105
      %v2107 = vrot.slane %v1926, 4
      %v2108 = vsel %vm2057, %v2105, %v2107
      %v2109 = vrot.slane %v1927, 4
      %v2110 = vsel %vm2057, %v2107, %v2109
      %v2111 = vrot.slane %v1928, 4
      %v2112 = vsel %vm2057, %v2109, %v2111
      %v2113 = vrot.slane %v1929, 4
      %v2114 = vsel %vm2057, %v2111, %v2113
      %v2115 = vrot.slane %v1930, 4
      %v2116 = vsel %vm2057, %v2113, %v2115
      %v2117 = vrot.slane %v1931, 4
      %v2118 = vsel %vm2057, %v2115, %v2117
      %vm2151 = vcmask 1041408
      %v2152 = vrot.slane %v1901, 6
      %v2153 = vrot.slane %v1902, 6
      %v2154 = vsel %vm2151, %v2152, %v2153
      %v2155 = vrot.slane %v1903, 6
      %v2156 = vsel %vm2151, %v2153, %v2155
      %v2157 = vrot.slane %v1904, 6
      %v2158 = vsel %vm2151, %v2155, %v2157
      %v2159 = vrot.slane %v1905, 6
      %v2160 = vsel %vm2151, %v2157, %v2159
      %v2161 = vrot.slane %v1906, 6
      %v2162 = vsel %vm2151, %v2159, %v2161
      %v2163 = vrot.slane %v1907, 6
      %v2164 = vsel %vm2151, %v2161, %v2163
      %v2165 = vrot.slane %v1908, 6
      %v2166 = vsel %vm2151, %v2163, %v2165
      %v2167 = vrot.slane %v1909, 6
      %v2168 = vsel %vm2151, %v2165, %v2167
      %v2169 = vrot.slane %v1910, 6
      %v2170 = vsel %vm2151, %v2167, %v2169
      %v2171 = vrot.slane %v1911, 6
      %v2172 = vsel %vm2151, %v2169, %v2171
      %v2173 = vrot.slane %v1912, 6
      %v2174 = vsel %vm2151, %v2171, %v2173
      %v2175 = vrot.slane %v1913, 6
      %v2176 = vsel %vm2151, %v2173, %v2175
      %v2177 = vrot.slane %v1914, 6
      %v2178 = vsel %vm2151, %v2175, %v2177
      %v2179 = vrot.slane %v1915, 6
      %v2180 = vsel %vm2151, %v2177, %v2179
      %v2181 = vrot.slane %v1916, 6
      %v2182 = vsel %vm2151, %v2179, %v2181
      %v2183 = vrot.slane %v1917, 6
      %v2184 = vsel %vm2151, %v2181, %v2183
      %v2185 = vrot.slane %v1918, 6
      %v2186 = vsel %vm2151, %v2183, %v2185
      %v2187 = vrot.slane %v1919, 6
      %v2188 = vsel %vm2151, %v2185, %v2187
      %v2189 = vrot.slane %v1920, 6
      %v2190 = vsel %vm2151, %v2187, %v2189
      %v2191 = vrot.slane %v1921, 6
      %v2192 = vsel %vm2151, %v2189, %v2191
      %v2193 = vrot.slane %v1922, 6
      %v2194 = vsel %vm2151, %v2191, %v2193
      %v2195 = vrot.slane %v1923, 6
      %v2196 = vsel %vm2151, %v2193, %v2195
      %v2197 = vrot.slane %v1924, 6
      %v2198 = vsel %vm2151, %v2195, %v2197
      %v2199 = vrot.slane %v1925, 6
      %v2200 = vsel %vm2151, %v2197, %v2199
      %v2201 = vrot.slane %v1926, 6
      %v2202 = vsel %vm2151, %v2199, %v2201
      %v2203 = vrot.slane %v1927, 6
      %v2204 = vsel %vm2151, %v2201, %v2203
      %v2205 = vrot.slane %v1928, 6
      %v2206 = vsel %vm2151, %v2203, %v2205
      %v2207 = vrot.slane %v1929, 6
      %v2208 = vsel %vm2151, %v2205, %v2207
      %v2209 = vrot.slane %v1930, 6
      %v2210 = vsel %vm2151, %v2207, %v2209
      %v2211 = vrot.slane %v1931, 6
      %v2212 = vsel %vm2151, %v2209, %v2211
      %v2213 = vrot.slane %v1932, 6
      %v2214 = vsel %vm2151, %v2211, %v2213
      %v2246 = vld [vmem:[%s2] sm:$0xff]
      %v2247 = vld [vmem:[%s2 + $0x8] sm:$0xff]
      %v2248 = vld [vmem:[%s2 + $0x10] sm:$0xff]
      %v2249 = vld [vmem:[%s2 + $0x18] sm:$0xff]
      %v2250 = vld [vmem:[%s2 + $0x20] sm:$0xff]
      %v2251 = vld [vmem:[%s2 + $0x28] sm:$0xff]
      %v2252 = vld [vmem:[%s2 + $0x30] sm:$0xff]
      %v2253 = vld [vmem:[%s2 + $0x38] sm:$0xff]
      %v2254 = vld [vmem:[%s2 + $0x40] sm:$0xff]
      %v2255 = vld [vmem:[%s2 + $0x48] sm:$0xff]
      %v2256 = vld [vmem:[%s2 + $0x50] sm:$0xff]
      %v2257 = vld [vmem:[%s2 + $0x58] sm:$0xff]
      %v2258 = vld [vmem:[%s2 + $0x60] sm:$0xff]
      %v2259 = vld [vmem:[%s2 + $0x68] sm:$0xff]
      %v2260 = vld [vmem:[%s2 + $0x70] sm:$0xff]
      %v2261 = vld [vmem:[%s2 + $0x78] sm:$0xff]
      %v2262 = vld [vmem:[%s2 + $0x80] sm:$0xff]
      %v2263 = vld [vmem:[%s2 + $0x88] sm:$0xff]
      %v2264 = vld [vmem:[%s2 + $0x90] sm:$0xff]
      %v2265 = vld [vmem:[%s2 + $0x98] sm:$0xff]
      %v2266 = vld [vmem:[%s2 + $0xa0] sm:$0xff]
      %v2267 = vld [vmem:[%s2 + $0xa8] sm:$0xff]
      %v2268 = vld [vmem:[%s2 + $0xb0] sm:$0xff]
      %v2269 = vld [vmem:[%s2 + $0xb8] sm:$0xff]
      %v2270 = vld [vmem:[%s2 + $0xc0] sm:$0xff]
      %v2271 = vld [vmem:[%s2 + $0xc8] sm:$0xff]
      %v2272 = vld [vmem:[%s2 + $0xd0] sm:$0xff]
      %v2273 = vld [vmem:[%s2 + $0xd8] sm:$0xff]
      %v2274 = vld [vmem:[%s2 + $0xe0] sm:$0xff]
      %v2275 = vld [vmem:[%s2 + $0xe8] sm:$0xff]
      %v2276 = vld [vmem:[%s2 + $0xf0] sm:$0xff]
      %v2277 = vld [vmem:[%s2 + $0xf8] sm:$0xff]
      %v2278 = vld [vmem:[%s2 + $0x100] sm:$0xff]
      %v2279 = vld [vmem:[%s2 + $0x108] sm:$0xff]
      %v2280 = vld [vmem:[%s2 + $0x110] sm:$0xff]
      %v2281 = vld [vmem:[%s2 + $0x118] sm:$0xff]
      %v2282 = vld [vmem:[%s2 + $0x120] sm:$0xff]
      %v2283 = vld [vmem:[%s2 + $0x128] sm:$0xff]
      %v2284 = vld [vmem:[%s2 + $0x130] sm:$0xff]
      %v2285 = vld [vmem:[%s2 + $0x138] sm:$0xff]
      %v2286 = vld [vmem:[%s2 + $0x140] sm:$0xff]
      %v2287 = vld [vmem:[%s2 + $0x148] sm:$0xff]
      %v2288 = vld [vmem:[%s2 + $0x150] sm:$0xff]
      %v2289 = vld [vmem:[%s2 + $0x158] sm:$0xff]
      %v2290 = vld [vmem:[%s2 + $0x160] sm:$0xff]
      %v2291 = vld [vmem:[%s2 + $0x168] sm:$0xff]
      %v2292 = vld [vmem:[%s2 + $0x170] sm:$0xff]
      %v2293 = vld [vmem:[%s2 + $0x178] sm:$0xff]
      %v2294 = vld [vmem:[%s2 + $0x180] sm:$0xff]
      %v2295 = vld [vmem:[%s2 + $0x188] sm:$0xff]
      %v2296 = vld [vmem:[%s2 + $0x190] sm:$0xff]
      %v2297 = vld [vmem:[%s2 + $0x198] sm:$0xff]
      %v2298 = vld [vmem:[%s2 + $0x1a0] sm:$0xff]
      %v2299 = vld [vmem:[%s2 + $0x1a8] sm:$0xff]
      %v2300 = vld [vmem:[%s2 + $0x1b0] sm:$0xff]
      %v2301 = vld [vmem:[%s2 + $0x1b8] sm:$0xff]
      %v2302 = vld [vmem:[%s2 + $0x1c0] sm:$0xff]
      %v2303 = vld [vmem:[%s2 + $0x1c8] sm:$0xff]
      %v2304 = vld [vmem:[%s2 + $0x1d0] sm:$0xff]
      %v2305 = vld [vmem:[%s2 + $0x1d8] sm:$0xff]
      %v2306 = vld [vmem:[%s2 + $0x1e0] sm:$0xff]
      %v2307 = vld [vmem:[%s2 + $0x1e8] sm:$0xff]
      %v2308 = vld [vmem:[%s2 + $0x1f0] sm:$0xff]
      %v2309 = vld [vmem:[%s2 + $0x1f8] sm:$0xff]
      %v2310 = vld [vmem:[%s2 + $0x200] sm:$0xff]
      %v2311 = vld [vmem:[%s2 + $0x208] sm:$0xff]
      %v2312 = vld [vmem:[%s2 + $0x210] sm:$0xff]
      %v2313 = vld [vmem:[%s2 + $0x218] sm:$0xff]
      %v2314 = vld [vmem:[%s2 + $0x220] sm:$0xff]
      %v2315 = vld [vmem:[%s2 + $0x228] sm:$0xff]
      %v2316 = vld [vmem:[%s2 + $0x230] sm:$0xff]
      %v2317 = vld [vmem:[%s2 + $0x238] sm:$0xff]
      %v2318 = vld [vmem:[%s2 + $0x240] sm:$0xff]
      %v2319 = vld [vmem:[%s2 + $0x248] sm:$0xff]
      %v2320 = vld [vmem:[%s2 + $0x250] sm:$0xff]
      %v2321 = vld [vmem:[%s2 + $0x258] sm:$0xff]
      %v2322 = vld [vmem:[%s2 + $0x260] sm:$0xff]
      %v2323 = vld [vmem:[%s2 + $0x268] sm:$0xff]
      %v2324 = vld [vmem:[%s2 + $0x270] sm:$0xff]
      %v2325 = vld [vmem:[%s2 + $0x278] sm:$0xff]
      %v2326 = vld [vmem:[%s2 + $0x280] sm:$0xff]
      %v2327 = vld [vmem:[%s2 + $0x288] sm:$0xff]
      %v2328 = vld [vmem:[%s2 + $0x290] sm:$0xff]
      %v2329 = vld [vmem:[%s2 + $0x298] sm:$0xff]
      %v2330 = vld [vmem:[%s2 + $0x2a0] sm:$0xff]
      %v2331 = vld [vmem:[%s2 + $0x2a8] sm:$0xff]
      %v2332 = vld [vmem:[%s2 + $0x2b0] sm:$0xff]
      %v2333 = vld [vmem:[%s2 + $0x2b8] sm:$0xff]
      %v2334 = vld [vmem:[%s2 + $0x2c0] sm:$0xff]
      %v2335 = vld [vmem:[%s2 + $0x2c8] sm:$0xff]
      %v2336 = vld [vmem:[%s2 + $0x2d0] sm:$0xff]
      %v2337 = vld [vmem:[%s2 + $0x2d8] sm:$0xff]
      %v2338 = vld [vmem:[%s2 + $0x2e0] sm:$0xff]
      %v2339 = vld [vmem:[%s2 + $0x2e8] sm:$0xff]
      %v2340 = vld [vmem:[%s2 + $0x2f0] sm:$0xff]
      %v2341 = vld [vmem:[%s2 + $0x2f8] sm:$0xff]
      %v2342 = vld [vmem:[%s2 + $0x300] sm:$0xff]
      %v2343 = vld [vmem:[%s2 + $0x308] sm:$0xff]
      %v2344 = vld [vmem:[%s2 + $0x310] sm:$0xff]
      %v2345 = vld [vmem:[%s2 + $0x318] sm:$0xff]
      %v2346 = vld [vmem:[%s2 + $0x320] sm:$0xff]
      %v2347 = vld [vmem:[%s2 + $0x328] sm:$0xff]
      %v2348 = vld [vmem:[%s2 + $0x330] sm:$0xff]
      %v2349 = vld [vmem:[%s2 + $0x338] sm:$0xff]
      %v2350 = vld [vmem:[%s2 + $0x340] sm:$0xff]
      %v2351 = vld [vmem:[%s2 + $0x348] sm:$0xff]
      %v2352 = vld [vmem:[%s2 + $0x350] sm:$0xff]
      %v2353 = vld [vmem:[%s2 + $0x358] sm:$0xff]
      %v2354 = vld [vmem:[%s2 + $0x360] sm:$0xff]
      %v2355 = vld [vmem:[%s2 + $0x368] sm:$0xff]
      %v2356 = vld [vmem:[%s2 + $0x370] sm:$0xff]
      %v2357 = vld [vmem:[%s2 + $0x378] sm:$0xff]
      %v2358 = vld [vmem:[%s2 + $0x380] sm:$0xff]
      %v2359 = vld [vmem:[%s2 + $0x388] sm:$0xff]
      %v2360 = vld [vmem:[%s2 + $0x390] sm:$0xff]
      %v2361 = vld [vmem:[%s2 + $0x398] sm:$0xff]
      %v2362 = vld [vmem:[%s2 + $0x3a0] sm:$0xff]
      %v2363 = vld [vmem:[%s2 + $0x3a8] sm:$0xff]
      %v2364 = vld [vmem:[%s2 + $0x3b0] sm:$0xff]
      %v2365 = vld [vmem:[%s2 + $0x3b8] sm:$0xff]
      %v2366 = vld [vmem:[%s2 + $0x3c0] sm:$0xff]
      %v2367 = vld [vmem:[%s2 + $0x3c8] sm:$0xff]
      %v2368 = vld [vmem:[%s2 + $0x3d0] sm:$0xff]
      %v2369 = vld [vmem:[%s2 + $0x3d8] sm:$0xff]
      %v2370 = vld [vmem:[%s2 + $0x3e0] sm:$0xff]
      %v2371 = vld [vmem:[%s2 + $0x3e8] sm:$0xff]
      %v2372 = vld [vmem:[%s2 + $0x3f0] sm:$0xff]
      %v2373 = vld [vmem:[%s2 + $0x3f8] sm:$0xff]
      %v2374 = vld [vmem:[%s2 + $0x400] sm:$0xff]
      %v2375 = vld [vmem:[%s2 + $0x408] sm:$0xff]
      %v2376 = vld [vmem:[%s2 + $0x410] sm:$0xff]
      %v2377 = vld [vmem:[%s2 + $0x418] sm:$0xff]
      %v2378 = vld [vmem:[%s2 + $0x420] sm:$0xff]
      %v2379 = vld [vmem:[%s2 + $0x428] sm:$0xff]
      %v2380 = vld [vmem:[%s2 + $0x430] sm:$0xff]
      %v2381 = vld [vmem:[%s2 + $0x438] sm:$0xff]
      %v2382 = vld [vmem:[%s2 + $0x440] sm:$0xff]
      %v2383 = vld [vmem:[%s2 + $0x448] sm:$0xff]
      %v2384 = vld [vmem:[%s2 + $0x450] sm:$0xff]
      %v2385 = vld [vmem:[%s2 + $0x458] sm:$0xff]
      %v2386 = vld [vmem:[%s2 + $0x460] sm:$0xff]
      %v2387 = vld [vmem:[%s2 + $0x468] sm:$0xff]
      %v2388 = vld [vmem:[%s2 + $0x470] sm:$0xff]
      %v2389 = vld [vmem:[%s2 + $0x478] sm:$0xff]
      %v2390 = vld [vmem:[%s2 + $0x480] sm:$0xff]
      %v2391 = vld [vmem:[%s2 + $0x488] sm:$0xff]
      %v2392 = vld [vmem:[%s2 + $0x490] sm:$0xff]
      %v2393 = vld [vmem:[%s2 + $0x498] sm:$0xff]
      %v2394 = vld [vmem:[%s2 + $0x4a0] sm:$0xff]
      %v2395 = vld [vmem:[%s2 + $0x4a8] sm:$0xff]
      %v2396 = vld [vmem:[%s2 + $0x4b0] sm:$0xff]
      %v2397 = vld [vmem:[%s2 + $0x4b8] sm:$0xff]
      %v2398 = vld [vmem:[%s2 + $0x4c0] sm:$0xff]
      %v2399 = vld [vmem:[%s2 + $0x4c8] sm:$0xff]
      %v2400 = vld [vmem:[%s2 + $0x4d0] sm:$0xff]
      %v2401 = vld [vmem:[%s2 + $0x4d8] sm:$0xff]
      %v2402 = vld [vmem:[%s2 + $0x4e0] sm:$0xff]
      %v2403 = vld [vmem:[%s2 + $0x4e8] sm:$0xff]
      %v2404 = vld [vmem:[%s2 + $0x4f0] sm:$0xff]
      %v2405 = vld [vmem:[%s2 + $0x4f8] sm:$0xff]
      %2406 = vmatpush.msra.mxu0 %v2276
      %2407 = vmatpush.msra.mxu0 %v2274
      %2408 = vmatpush.msra.mxu0 %v2272
      %2409 = vmatpush.msra.mxu0 %v2270
      %2410 = vmatpush.msra.mxu0 %v2268
      %2411 = vmatpush.msra.mxu0 %v2266
      %2412 = vmatpush.msra.mxu0 %v2264
      %2413 = vmatpush.msra.mxu0 %v2262
      %2414 = vmatpush.msra.mxu0 %v2260
      %2415 = vmatpush.msra.mxu0 %v2258
      %2416 = vmatpush.msra.mxu0 %v2256
      %2417 = vmatpush.msra.mxu0 %v2254
      %2418 = vmatpush.msra.mxu0 %v2252
      %2419 = vmatpush.msra.mxu0 %v2250
      %2420 = vmatpush.msra.mxu0 %v2248
      %2421 = vmatpush.msra.mxu0 %v2246
      %2422 = vmatmul.f32.gmra.mxu0 %v1901
      %v2423 = vpop.f32.mrf.mxu0
      %v2424 = vadd.f32 0.0, %v2423
      %2425 = vmatmul.f32.gmra.mxu0 %v1902
      %v2426 = vpop.f32.mrf.mxu0
      %v2427 = vadd.f32 0.0, %v2426
      %2428 = vmatmul.f32.gmra.mxu0 %v1903
      %v2429 = vpop.f32.mrf.mxu0
      %v2430 = vadd.f32 0.0, %v2429
      %2431 = vmatmul.f32.gmra.mxu0 %v1904
      %v2432 = vpop.f32.mrf.mxu0
      %v2433 = vadd.f32 0.0, %v2432
      %2434 = vmatmul.f32.gmra.mxu0 %v1905
      %v2435 = vpop.f32.mrf.mxu0
      %v2436 = vadd.f32 0.0, %v2435
      %2437 = vmatmul.f32.gmra.mxu0 %v1906
      %v2438 = vpop.f32.mrf.mxu0
      %v2439 = vadd.f32 0.0, %v2438
      %2440 = vmatmul.f32.gmra.mxu0 %v1907
      %v2441 = vpop.f32.mrf.mxu0
      %v2442 = vadd.f32 0.0, %v2441
      %2443 = vmatmul.f32.gmra.mxu0 %v1908
      %v2444 = vpop.f32.mrf.mxu0
      %v2445 = vadd.f32 0.0, %v2444
      %2446 = vmatmul.f32.gmra.mxu0 %v1909
      %v2447 = vpop.f32.mrf.mxu0
      %v2448 = vadd.f32 0.0, %v2447
      %2449 = vmatmul.f32.gmra.mxu0 %v1910
      %v2450 = vpop.f32.mrf.mxu0
      %v2451 = vadd.f32 0.0, %v2450
      %2452 = vmatmul.f32.gmra.mxu0 %v1911
      %v2453 = vpop.f32.mrf.mxu0
      %v2454 = vadd.f32 0.0, %v2453
      %2455 = vmatmul.f32.gmra.mxu0 %v1912
      %v2456 = vpop.f32.mrf.mxu0
      %v2457 = vadd.f32 0.0, %v2456
      %2458 = vmatmul.f32.gmra.mxu0 %v1913
      %v2459 = vpop.f32.mrf.mxu0
      %v2460 = vadd.f32 0.0, %v2459
      %2461 = vmatmul.f32.gmra.mxu0 %v1914
      %v2462 = vpop.f32.mrf.mxu0
      %v2463 = vadd.f32 0.0, %v2462
      %2464 = vmatmul.f32.gmra.mxu0 %v1915
      %v2465 = vpop.f32.mrf.mxu0
      %v2466 = vadd.f32 0.0, %v2465
      %2467 = vmatmul.f32.gmra.mxu0 %v1916
      %v2468 = vpop.f32.mrf.mxu0
      %v2469 = vadd.f32 0.0, %v2468
      %2470 = vmatmul.f32.gmra.mxu0 %v1917
      %v2471 = vpop.f32.mrf.mxu0
      %v2472 = vadd.f32 0.0, %v2471
      %2473 = vmatmul.f32.gmra.mxu0 %v1918
      %v2474 = vpop.f32.mrf.mxu0
      %v2475 = vadd.f32 0.0, %v2474
      %2476 = vmatmul.f32.gmra.mxu0 %v1919
      %v2477 = vpop.f32.mrf.mxu0
      %v2478 = vadd.f32 0.0, %v2477
      %2479 = vmatmul.f32.gmra.mxu0 %v1920
      %v2480 = vpop.f32.mrf.mxu0
      %v2481 = vadd.f32 0.0, %v2480
      %2482 = vmatmul.f32.gmra.mxu0 %v1921
      %v2483 = vpop.f32.mrf.mxu0
      %v2484 = vadd.f32 0.0, %v2483
      %2485 = vmatmul.f32.gmra.mxu0 %v1922
      %v2486 = vpop.f32.mrf.mxu0
      %v2487 = vadd.f32 0.0, %v2486
      %2488 = vmatmul.f32.gmra.mxu0 %v1923
      %v2489 = vpop.f32.mrf.mxu0
      %v2490 = vadd.f32 0.0, %v2489
      %2491 = vmatmul.f32.gmra.mxu0 %v1924
      %v2492 = vpop.f32.mrf.mxu0
      %v2493 = vadd.f32 0.0, %v2492
      %2494 = vmatmul.f32.gmra.mxu0 %v1925
      %v2495 = vpop.f32.mrf.mxu0
      %v2496 = vadd.f32 0.0, %v2495
      %2497 = vmatmul.f32.gmra.mxu0 %v1926
      %v2498 = vpop.f32.mrf.mxu0
      %v2499 = vadd.f32 0.0, %v2498
      %2500 = vmatmul.f32.gmra.mxu0 %v1927
      %v2501 = vpop.f32.mrf.mxu0
      %v2502 = vadd.f32 0.0, %v2501
      %2503 = vmatmul.f32.gmra.mxu0 %v1928
      %v2504 = vpop.f32.mrf.mxu0
      %v2505 = vadd.f32 0.0, %v2504
      %2506 = vmatmul.f32.gmra.mxu0 %v1929
      %v2507 = vpop.f32.mrf.mxu0
      %v2508 = vadd.f32 0.0, %v2507
      %2509 = vmatmul.f32.gmra.mxu0 %v1930
      %v2510 = vpop.f32.mrf.mxu0
      %v2511 = vadd.f32 0.0, %v2510
      %2512 = vmatmul.f32.gmra.mxu0 %v1931
      %v2513 = vpop.f32.mrf.mxu0
      %v2514 = vadd.f32 0.0, %v2513
      %2515 = vdwg.mxu0
      %2516 = vmatpush.msra.mxu0 %v2308
      %2517 = vmatpush.msra.mxu0 %v2306
      %2518 = vmatpush.msra.mxu0 %v2304
      %2519 = vmatpush.msra.mxu0 %v2302
      %2520 = vmatpush.msra.mxu0 %v2300
      %2521 = vmatpush.msra.mxu0 %v2298
      %2522 = vmatpush.msra.mxu0 %v2296
      %2523 = vmatpush.msra.mxu0 %v2294
      %2524 = vmatpush.msra.mxu0 %v2292
      %2525 = vmatpush.msra.mxu0 %v2290
      %2526 = vmatpush.msra.mxu0 %v2288
      %2527 = vmatpush.msra.mxu0 %v2286
      %2528 = vmatpush.msra.mxu0 %v2284
      %2529 = vmatpush.msra.mxu0 %v2282
      %2530 = vmatpush.msra.mxu0 %v2280
      %2531 = vmatpush.msra.mxu0 %v2278
      %2532 = vmatmul.f32.gmra.mxu0 %v1967
      %v2533 = vpop.f32.mrf.mxu0
      %v2534 = vadd.f32 %v2424, %v2533
      %2535 = vmatmul.f32.gmra.mxu0 %v1969
      %v2536 = vpop.f32.mrf.mxu0
      %v2537 = vadd.f32 %v2427, %v2536
      %2538 = vmatmul.f32.gmra.mxu0 %v1971
      %v2539 = vpop.f32.mrf.mxu0
      %v2540 = vadd.f32 %v2430, %v2539
      %2541 = vmatmul.f32.gmra.mxu0 %v1973
      %v2542 = vpop.f32.mrf.mxu0
      %v2543 = vadd.f32 %v2433, %v2542
      %2544 = vmatmul.f32.gmra.mxu0 %v1975
      %v2545 = vpop.f32.mrf.mxu0
      %v2546 = vadd.f32 %v2436, %v2545
      %2547 = vmatmul.f32.gmra.mxu0 %v1977
      %v2548 = vpop.f32.mrf.mxu0
      %v2549 = vadd.f32 %v2439, %v2548
      %2550 = vmatmul.f32.gmra.mxu0 %v1979
      %v2551 = vpop.f32.mrf.mxu0
      %v2552 = vadd.f32 %v2442, %v2551
      %2553 = vmatmul.f32.gmra.mxu0 %v1981
      %v2554 = vpop.f32.mrf.mxu0
      %v2555 = vadd.f32 %v2445, %v2554
      %2556 = vmatmul.f32.gmra.mxu0 %v1983
      %v2557 = vpop.f32.mrf.mxu0
      %v2558 = vadd.f32 %v2448, %v2557
      %2559 = vmatmul.f32.gmra.mxu0 %v1985
      %v2560 = vpop.f32.mrf.mxu0
      %v2561 = vadd.f32 %v2451, %v2560
      %2562 = vmatmul.f32.gmra.mxu0 %v1987
      %v2563 = vpop.f32.mrf.mxu0
      %v2564 = vadd.f32 %v2454, %v2563
      %2565 = vmatmul.f32.gmra.mxu0 %v1989
      %v2566 = vpop.f32.mrf.mxu0
      %v2567 = vadd.f32 %v2457, %v2566
      %2568 = vmatmul.f32.gmra.mxu0 %v1991
      %v2569 = vpop.f32.mrf.mxu0
      %v2570 = vadd.f32 %v2460, %v2569
      %2571 = vmatmul.f32.gmra.mxu0 %v1993
      %v2572 = vpop.f32.mrf.mxu0
      %v2573 = vadd.f32 %v2463, %v2572
      %2574 = vmatmul.f32.gmra.mxu0 %v1995
      %v2575 = vpop.f32.mrf.mxu0
      %v2576 = vadd.f32 %v2466, %v2575
      %2577 = vmatmul.f32.gmra.mxu0 %v1997
      %v2578 = vpop.f32.mrf.mxu0
      %v2579 = vadd.f32 %v2469, %v2578
      %2580 = vmatmul.f32.gmra.mxu0 %v1999
      %v2581 = vpop.f32.mrf.mxu0
      %v2582 = vadd.f32 %v2472, %v2581
      %2583 = vmatmul.f32.gmra.mxu0 %v2001
      %v2584 = vpop.f32.mrf.mxu0
      %v2585 = vadd.f32 %v2475, %v2584
      %2586 = vmatmul.f32.gmra.mxu0 %v2003
      %v2587 = vpop.f32.mrf.mxu0
      %v2588 = vadd.f32 %v2478, %v2587
      %2589 = vmatmul.f32.gmra.mxu0 %v2005
      %v2590 = vpop.f32.mrf.mxu0
      %v2591 = vadd.f32 %v2481, %v2590
      %2592 = vmatmul.f32.gmra.mxu0 %v2007
      %v2593 = vpop.f32.mrf.mxu0
      %v2594 = vadd.f32 %v2484, %v2593
      %2595 = vmatmul.f32.gmra.mxu0 %v2009
      %v2596 = vpop.f32.mrf.mxu0
      %v2597 = vadd.f32 %v2487, %v2596
      %2598 = vmatmul.f32.gmra.mxu0 %v2011
      %v2599 = vpop.f32.mrf.mxu0
      %v2600 = vadd.f32 %v2490, %v2599
      %2601 = vmatmul.f32.gmra.mxu0 %v2013
      %v2602 = vpop.f32.mrf.mxu0
      %v2603 = vadd.f32 %v2493, %v2602
      %2604 = vmatmul.f32.gmra.mxu0 %v2015
      %v2605 = vpop.f32.mrf.mxu0
      %v2606 = vadd.f32 %v2496, %v2605
      %2607 = vmatmul.f32.gmra.mxu0 %v2017
      %v2608 = vpop.f32.mrf.mxu0
      %v2609 = vadd.f32 %v2499, %v2608
      %2610 = vmatmul.f32.gmra.mxu0 %v2019
      %v2611 = vpop.f32.mrf.mxu0
      %v2612 = vadd.f32 %v2502, %v2611
      %2613 = vmatmul.f32.gmra.mxu0 %v2021
      %v2614 = vpop.f32.mrf.mxu0
      %v2615 = vadd.f32 %v2505, %v2614
      %2616 = vmatmul.f32.gmra.mxu0 %v2023
      %v2617 = vpop.f32.mrf.mxu0
      %v2618 = vadd.f32 %v2508, %v2617
      %2619 = vmatmul.f32.gmra.mxu0 %v2025
      %v2620 = vpop.f32.mrf.mxu0
      %v2621 = vadd.f32 %v2511, %v2620
      %2622 = vmatmul.f32.gmra.mxu0 %v2024
      %v2623 = vpop.f32.mrf.mxu0
      %v2624 = vadd.f32 %v2514, %v2623
      %2625 = vdwg.mxu0
      %2626 = vmatpush.msra.mxu0 %v2340
      %2627 = vmatpush.msra.mxu0 %v2338
      %2628 = vmatpush.msra.mxu0 %v2336
      %2629 = vmatpush.msra.mxu0 %v2334
      %2630 = vmatpush.msra.mxu0 %v2332
      %2631 = vmatpush.msra.mxu0 %v2330
      %2632 = vmatpush.msra.mxu0 %v2328
      %2633 = vmatpush.msra.mxu0 %v2326
      %2634 = vmatpush.msra.mxu0 %v2324
      %2635 = vmatpush.msra.mxu0 %v2322
      %2636 = vmatpush.msra.mxu0 %v2320
      %2637 = vmatpush.msra.mxu0 %v2318
      %2638 = vmatpush.msra.mxu0 %v2316
      %2639 = vmatpush.msra.mxu0 %v2314
      %2640 = vmatpush.msra.mxu0 %v2312
      %2641 = vmatpush.msra.mxu0 %v2310
      %2642 = vmatmul.f32.gmra.mxu0 %v2060
      %v2643 = vpop.f32.mrf.mxu0
      %v2644 = vadd.f32 %v2534, %v2643
      %2645 = vmatmul.f32.gmra.mxu0 %v2062
      %v2646 = vpop.f32.mrf.mxu0
      %v2647 = vadd.f32 %v2537, %v2646
      %2648 = vmatmul.f32.gmra.mxu0 %v2064
      %v2649 = vpop.f32.mrf.mxu0
      %v2650 = vadd.f32 %v2540, %v2649
      %2651 = vmatmul.f32.gmra.mxu0 %v2066
      %v2652 = vpop.f32.mrf.mxu0
      %v2653 = vadd.f32 %v2543, %v2652
      %2654 = vmatmul.f32.gmra.mxu0 %v2068
      %v2655 = vpop.f32.mrf.mxu0
      %v2656 = vadd.f32 %v2546, %v2655
      %2657 = vmatmul.f32.gmra.mxu0 %v2070
      %v2658 = vpop.f32.mrf.mxu0
      %v2659 = vadd.f32 %v2549, %v2658
      %2660 = vmatmul.f32.gmra.mxu0 %v2072
      %v2661 = vpop.f32.mrf.mxu0
      %v2662 = vadd.f32 %v2552, %v2661
      %2663 = vmatmul.f32.gmra.mxu0 %v2074
      %v2664 = vpop.f32.mrf.mxu0
      %v2665 = vadd.f32 %v2555, %v2664
      %2666 = vmatmul.f32.gmra.mxu0 %v2076
      %v2667 = vpop.f32.mrf.mxu0
      %v2668 = vadd.f32 %v2558, %v2667
      %2669 = vmatmul.f32.gmra.mxu0 %v2078
      %v2670 = vpop.f32.mrf.mxu0
      %v2671 = vadd.f32 %v2561, %v2670
      %2672 = vmatmul.f32.gmra.mxu0 %v2080
      %v2673 = vpop.f32.mrf.mxu0
      %v2674 = vadd.f32 %v2564, %v2673
      %2675 = vmatmul.f32.gmra.mxu0 %v2082
      %v2676 = vpop.f32.mrf.mxu0
      %v2677 = vadd.f32 %v2567, %v2676
      %2678 = vmatmul.f32.gmra.mxu0 %v2084
      %v2679 = vpop.f32.mrf.mxu0
      %v2680 = vadd.f32 %v2570, %v2679
      %2681 = vmatmul.f32.gmra.mxu0 %v2086
      %v2682 = vpop.f32.mrf.mxu0
      %v2683 = vadd.f32 %v2573, %v2682
      %2684 = vmatmul.f32.gmra.mxu0 %v2088
      %v2685 = vpop.f32.mrf.mxu0
      %v2686 = vadd.f32 %v2576, %v2685
      %2687 = vmatmul.f32.gmra.mxu0 %v2090
      %v2688 = vpop.f32.mrf.mxu0
      %v2689 = vadd.f32 %v2579, %v2688
      %2690 = vmatmul.f32.gmra.mxu0 %v2092
      %v2691 = vpop.f32.mrf.mxu0
      %v2692 = vadd.f32 %v2582, %v2691
      %2693 = vmatmul.f32.gmra.mxu0 %v2094
      %v2694 = vpop.f32.mrf.mxu0
      %v2695 = vadd.f32 %v2585, %v2694
      %2696 = vmatmul.f32.gmra.mxu0 %v2096
      %v2697 = vpop.f32.mrf.mxu0
      %v2698 = vadd.f32 %v2588, %v2697
      %2699 = vmatmul.f32.gmra.mxu0 %v2098
      %v2700 = vpop.f32.mrf.mxu0
      %v2701 = vadd.f32 %v2591, %v2700
      %2702 = vmatmul.f32.gmra.mxu0 %v2100
      %v2703 = vpop.f32.mrf.mxu0
      %v2704 = vadd.f32 %v2594, %v2703
      %2705 = vmatmul.f32.gmra.mxu0 %v2102
      %v2706 = vpop.f32.mrf.mxu0
      %v2707 = vadd.f32 %v2597, %v2706
      %2708 = vmatmul.f32.gmra.mxu0 %v2104
      %v2709 = vpop.f32.mrf.mxu0
      %v2710 = vadd.f32 %v2600, %v2709
      %2711 = vmatmul.f32.gmra.mxu0 %v2106
      %v2712 = vpop.f32.mrf.mxu0
      %v2713 = vadd.f32 %v2603, %v2712
      %2714 = vmatmul.f32.gmra.mxu0 %v2108
      %v2715 = vpop.f32.mrf.mxu0
      %v2716 = vadd.f32 %v2606, %v2715
      %2717 = vmatmul.f32.gmra.mxu0 %v2110
      %v2718 = vpop.f32.mrf.mxu0
      %v2719 = vadd.f32 %v2609, %v2718
      %2720 = vmatmul.f32.gmra.mxu0 %v2112
      %v2721 = vpop.f32.mrf.mxu0
      %v2722 = vadd.f32 %v2612, %v2721
      %2723 = vmatmul.f32.gmra.mxu0 %v2114
      %v2724 = vpop.f32.mrf.mxu0
      %v2725 = vadd.f32 %v2615, %v2724
      %2726 = vmatmul.f32.gmra.mxu0 %v2116
      %v2727 = vpop.f32.mrf.mxu0
      %v2728 = vadd.f32 %v2618, %v2727
      %2729 = vmatmul.f32.gmra.mxu0 %v2118
      %v2730 = vpop.f32.mrf.mxu0
      %v2731 = vadd.f32 %v2621, %v2730
      %2732 = vmatmul.f32.gmra.mxu0 %v2117
      %v2733 = vpop.f32.mrf.mxu0
      %v2734 = vadd.f32 %v2624, %v2733
      %2735 = vdwg.mxu0
      %2736 = vmatpush.msra.mxu0 %v2372
      %2737 = vmatpush.msra.mxu0 %v2370
      %2738 = vmatpush.msra.mxu0 %v2368
      %2739 = vmatpush.msra.mxu0 %v2366
      %2740 = vmatpush.msra.mxu0 %v2364
      %2741 = vmatpush.msra.mxu0 %v2362
      %2742 = vmatpush.msra.mxu0 %v2360
      %2743 = vmatpush.msra.mxu0 %v2358
      %2744 = vmatpush.msra.mxu0 %v2356
      %2745 = vmatpush.msra.mxu0 %v2354
      %2746 = vmatpush.msra.mxu0 %v2352
      %2747 = vmatpush.msra.mxu0 %v2350
      %2748 = vmatpush.msra.mxu0 %v2348
      %2749 = vmatpush.msra.mxu0 %v2346
      %2750 = vmatpush.msra.mxu0 %v2344
      %2751 = vmatpush.msra.mxu0 %v2342
      %2752 = vmatmul.f32.gmra.mxu0 %v2154
      %v2753 = vpop.f32.mrf.mxu0
      %v2754 = vadd.f32 %v2644, %v2753
      %2755 = vmatmul.f32.gmra.mxu0 %v2156
      %v2756 = vpop.f32.mrf.mxu0
      %v2757 = vadd.f32 %v2647, %v2756
      %2758 = vmatmul.f32.gmra.mxu0 %v2158
      %v2759 = vpop.f32.mrf.mxu0
      %v2760 = vadd.f32 %v2650, %v2759
      %2761 = vmatmul.f32.gmra.mxu0 %v2160
      %v2762 = vpop.f32.mrf.mxu0
      %v2763 = vadd.f32 %v2653, %v2762
      %2764 = vmatmul.f32.gmra.mxu0 %v2162
      %v2765 = vpop.f32.mrf.mxu0
      %v2766 = vadd.f32 %v2656, %v2765
      %2767 = vmatmul.f32.gmra.mxu0 %v2164
      %v2768 = vpop.f32.mrf.mxu0
      %v2769 = vadd.f32 %v2659, %v2768
      %2770 = vmatmul.f32.gmra.mxu0 %v2166
      %v2771 = vpop.f32.mrf.mxu0
      %v2772 = vadd.f32 %v2662, %v2771
      %2773 = vmatmul.f32.gmra.mxu0 %v2168
      %v2774 = vpop.f32.mrf.mxu0
      %v2775 = vadd.f32 %v2665, %v2774
      %2776 = vmatmul.f32.gmra.mxu0 %v2170
      %v2777 = vpop.f32.mrf.mxu0
      %v2778 = vadd.f32 %v2668, %v2777
      %2779 = vmatmul.f32.gmra.mxu0 %v2172
      %v2780 = vpop.f32.mrf.mxu0
      %v2781 = vadd.f32 %v2671, %v2780
      %2782 = vmatmul.f32.gmra.mxu0 %v2174
      %v2783 = vpop.f32.mrf.mxu0
      %v2784 = vadd.f32 %v2674, %v2783
      %2785 = vmatmul.f32.gmra.mxu0 %v2176
      %v2786 = vpop.f32.mrf.mxu0
      %v2787 = vadd.f32 %v2677, %v2786
      %2788 = vmatmul.f32.gmra.mxu0 %v2178
      %v2789 = vpop.f32.mrf.mxu0
      %v2790 = vadd.f32 %v2680, %v2789
      %2791 = vmatmul.f32.gmra.mxu0 %v2180
      %v2792 = vpop.f32.mrf.mxu0
      %v2793 = vadd.f32 %v2683, %v2792
      %2794 = vmatmul.f32.gmra.mxu0 %v2182
      %v2795 = vpop.f32.mrf.mxu0
      %v2796 = vadd.f32 %v2686, %v2795
      %2797 = vmatmul.f32.gmra.mxu0 %v2184
      %v2798 = vpop.f32.mrf.mxu0
      %v2799 = vadd.f32 %v2689, %v2798
      %2800 = vmatmul.f32.gmra.mxu0 %v2186
      %v2801 = vpop.f32.mrf.mxu0
      %v2802 = vadd.f32 %v2692, %v2801
      %2803 = vmatmul.f32.gmra.mxu0 %v2188
      %v2804 = vpop.f32.mrf.mxu0
      %v2805 = vadd.f32 %v2695, %v2804
      %2806 = vmatmul.f32.gmra.mxu0 %v2190
      %v2807 = vpop.f32.mrf.mxu0
      %v2808 = vadd.f32 %v2698, %v2807
      %2809 = vmatmul.f32.gmra.mxu0 %v2192
      %v2810 = vpop.f32.mrf.mxu0
      %v2811 = vadd.f32 %v2701, %v2810
      %2812 = vmatmul.f32.gmra.mxu0 %v2194
      %v2813 = vpop.f32.mrf.mxu0
      %v2814 = vadd.f32 %v2704, %v2813
      %2815 = vmatmul.f32.gmra.mxu0 %v2196
      %v2816 = vpop.f32.mrf.mxu0
      %v2817 = vadd.f32 %v2707, %v2816
      %2818 = vmatmul.f32.gmra.mxu0 %v2198
      %v2819 = vpop.f32.mrf.mxu0
      %v2820 = vadd.f32 %v2710, %v2819
      %2821 = vmatmul.f32.gmra.mxu0 %v2200
      %v2822 = vpop.f32.mrf.mxu0
      %v2823 = vadd.f32 %v2713, %v2822
      %2824 = vmatmul.f32.gmra.mxu0 %v2202
      %v2825 = vpop.f32.mrf.mxu0
      %v2826 = vadd.f32 %v2716, %v2825
      %2827 = vmatmul.f32.gmra.mxu0 %v2204
      %v2828 = vpop.f32.mrf.mxu0
      %v2829 = vadd.f32 %v2719, %v2828
      %2830 = vmatmul.f32.gmra.mxu0 %v2206
      %v2831 = vpop.f32.mrf.mxu0
      %v2832 = vadd.f32 %v2722, %v2831
      %2833 = vmatmul.f32.gmra.mxu0 %v2208
      %v2834 = vpop.f32.mrf.mxu0
      %v2835 = vadd.f32 %v2725, %v2834
      %2836 = vmatmul.f32.gmra.mxu0 %v2210
      %v2837 = vpop.f32.mrf.mxu0
      %v2838 = vadd.f32 %v2728, %v2837
      %2839 = vmatmul.f32.gmra.mxu0 %v2212
      %v2840 = vpop.f32.mrf.mxu0
      %v2841 = vadd.f32 %v2731, %v2840
      %2842 = vmatmul.f32.gmra.mxu0 %v2214
      %v2843 = vpop.f32.mrf.mxu0
      %v2844 = vadd.f32 %v2734, %v2843
      %2845 = vdwg.mxu0
      %2846 = vmatpush.msra.mxu0 %v2404
      %2847 = vmatpush.msra.mxu0 %v2402
      %2848 = vmatpush.msra.mxu0 %v2400
      %2849 = vmatpush.msra.mxu0 %v2398
      %2850 = vmatpush.msra.mxu0 %v2396
      %2851 = vmatpush.msra.mxu0 %v2394
      %2852 = vmatpush.msra.mxu0 %v2392
      %2853 = vmatpush.msra.mxu0 %v2390
      %2854 = vmatpush.msra.mxu0 %v2388
      %2855 = vmatpush.msra.mxu0 %v2386
      %2856 = vmatpush.msra.mxu0 %v2384
      %2857 = vmatpush.msra.mxu0 %v2382
      %2858 = vmatpush.msra.mxu0 %v2380
      %2859 = vmatpush.msra.mxu0 %v2378
      %2860 = vmatpush.msra.mxu0 %v2376
      %2861 = vmatpush.msra.mxu0 %v2374
      %2862 = vmatmul.f32.gmra.mxu0 %v1902
      %v2863 = vpop.f32.mrf.mxu0
      %v2864 = vadd.f32 %v2754, %v2863
      %2865 = vmatmul.f32.gmra.mxu0 %v1903
      %v2866 = vpop.f32.mrf.mxu0
      %v2867 = vadd.f32 %v2757, %v2866
      %2868 = vmatmul.f32.gmra.mxu0 %v1904
      %v2869 = vpop.f32.mrf.mxu0
      %v2870 = vadd.f32 %v2760, %v2869
      %2871 = vmatmul.f32.gmra.mxu0 %v1905
      %v2872 = vpop.f32.mrf.mxu0
      %v2873 = vadd.f32 %v2763, %v2872
      %2874 = vmatmul.f32.gmra.mxu0 %v1906
      %v2875 = vpop.f32.mrf.mxu0
      %v2876 = vadd.f32 %v2766, %v2875
      %2877 = vmatmul.f32.gmra.mxu0 %v1907
      %v2878 = vpop.f32.mrf.mxu0
      %v2879 = vadd.f32 %v2769, %v2878
      %2880 = vmatmul.f32.gmra.mxu0 %v1908
      %v2881 = vpop.f32.mrf.mxu0
      %v2882 = vadd.f32 %v2772, %v2881
      %2883 = vmatmul.f32.gmra.mxu0 %v1909
      %v2884 = vpop.f32.mrf.mxu0
      %v2885 = vadd.f32 %v2775, %v2884
      %2886 = vmatmul.f32.gmra.mxu0 %v1910
      %v2887 = vpop.f32.mrf.mxu0
      %v2888 = vadd.f32 %v2778, %v2887
      %2889 = vmatmul.f32.gmra.mxu0 %v1911
      %v2890 = vpop.f32.mrf.mxu0
      %v2891 = vadd.f32 %v2781, %v2890
      %2892 = vmatmul.f32.gmra.mxu0 %v1912
      %v2893 = vpop.f32.mrf.mxu0
      %v2894 = vadd.f32 %v2784, %v2893
      %2895 = vmatmul.f32.gmra.mxu0 %v1913
      %v2896 = vpop.f32.mrf.mxu0
      %v2897 = vadd.f32 %v2787, %v2896
      %2898 = vmatmul.f32.gmra.mxu0 %v1914
      %v2899 = vpop.f32.mrf.mxu0
      %v2900 = vadd.f32 %v2790, %v2899
      %2901 = vmatmul.f32.gmra.mxu0 %v1915
      %v2902 = vpop.f32.mrf.mxu0
      %v2903 = vadd.f32 %v2793, %v2902
      %2904 = vmatmul.f32.gmra.mxu0 %v1916
      %v2905 = vpop.f32.mrf.mxu0
      %v2906 = vadd.f32 %v2796, %v2905
      %2907 = vmatmul.f32.gmra.mxu0 %v1917
      %v2908 = vpop.f32.mrf.mxu0
      %v2909 = vadd.f32 %v2799, %v2908
      %2910 = vmatmul.f32.gmra.mxu0 %v1918
      %v2911 = vpop.f32.mrf.mxu0
      %v2912 = vadd.f32 %v2802, %v2911
      %2913 = vmatmul.f32.gmra.mxu0 %v1919
      %v2914 = vpop.f32.mrf.mxu0
      %v2915 = vadd.f32 %v2805, %v2914
      %2916 = vmatmul.f32.gmra.mxu0 %v1920
      %v2917 = vpop.f32.mrf.mxu0
      %v2918 = vadd.f32 %v2808, %v2917
      %2919 = vmatmul.f32.gmra.mxu0 %v1921
      %v2920 = vpop.f32.mrf.mxu0
      %v2921 = vadd.f32 %v2811, %v2920
      %2922 = vmatmul.f32.gmra.mxu0 %v1922
      %v2923 = vpop.f32.mrf.mxu0
      %v2924 = vadd.f32 %v2814, %v2923
      %2925 = vmatmul.f32.gmra.mxu0 %v1923
      %v2926 = vpop.f32.mrf.mxu0
      %v2927 = vadd.f32 %v2817, %v2926
      %2928 = vmatmul.f32.gmra.mxu0 %v1924
      %v2929 = vpop.f32.mrf.mxu0
      %v2930 = vadd.f32 %v2820, %v2929
      %2931 = vmatmul.f32.gmra.mxu0 %v1925
      %v2932 = vpop.f32.mrf.mxu0
      %v2933 = vadd.f32 %v2823, %v2932
      %2934 = vmatmul.f32.gmra.mxu0 %v1926
      %v2935 = vpop.f32.mrf.mxu0
      %v2936 = vadd.f32 %v2826, %v2935
      %2937 = vmatmul.f32.gmra.mxu0 %v1927
      %v2938 = vpop.f32.mrf.mxu0
      %v2939 = vadd.f32 %v2829, %v2938
      %2940 = vmatmul.f32.gmra.mxu0 %v1928
      %v2941 = vpop.f32.mrf.mxu0
      %v2942 = vadd.f32 %v2832, %v2941
      %2943 = vmatmul.f32.gmra.mxu0 %v1929
      %v2944 = vpop.f32.mrf.mxu0
      %v2945 = vadd.f32 %v2835, %v2944
      %2946 = vmatmul.f32.gmra.mxu0 %v1930
      %v2947 = vpop.f32.mrf.mxu0
      %v2948 = vadd.f32 %v2838, %v2947
      %2949 = vmatmul.f32.gmra.mxu0 %v1931
      %v2950 = vpop.f32.mrf.mxu0
      %v2951 = vadd.f32 %v2841, %v2950
      %2952 = vmatmul.f32.gmra.mxu0 %v1932
      %v2953 = vpop.f32.mrf.mxu0
      %v2954 = vadd.f32 %v2844, %v2953
      %2955 = vdwg.mxu0
      %2956 = vmatpush.msra.mxu0 %v2277
      %2957 = vmatpush.msra.mxu0 %v2275
      %2958 = vmatpush.msra.mxu0 %v2273
      %2959 = vmatpush.msra.mxu0 %v2271
      %2960 = vmatpush.msra.mxu0 %v2269
      %2961 = vmatpush.msra.mxu0 %v2267
      %2962 = vmatpush.msra.mxu0 %v2265
      %2963 = vmatpush.msra.mxu0 %v2263
      %2964 = vmatpush.msra.mxu0 %v2261
      %2965 = vmatpush.msra.mxu0 %v2259
      %2966 = vmatpush.msra.mxu0 %v2257
      %2967 = vmatpush.msra.mxu0 %v2255
      %2968 = vmatpush.msra.mxu0 %v2253
      %2969 = vmatpush.msra.mxu0 %v2251
      %2970 = vmatpush.msra.mxu0 %v2249
      %2971 = vmatpush.msra.mxu0 %v2247
      %2972 = vmatmul.f32.gmra.mxu0 %v1901
      %v2973 = vpop.f32.mrf.mxu0
      %v2974 = vadd.f32 0.0, %v2973
      %2975 = vmatmul.f32.gmra.mxu0 %v1902
      %v2976 = vpop.f32.mrf.mxu0
      %v2977 = vadd.f32 0.0, %v2976
      %2978 = vmatmul.f32.gmra.mxu0 %v1903
      %v2979 = vpop.f32.mrf.mxu0
      %v2980 = vadd.f32 0.0, %v2979
      %2981 = vmatmul.f32.gmra.mxu0 %v1904
      %v2982 = vpop.f32.mrf.mxu0
      %v2983 = vadd.f32 0.0, %v2982
      %2984 = vmatmul.f32.gmra.mxu0 %v1905
      %v2985 = vpop.f32.mrf.mxu0
      %v2986 = vadd.f32 0.0, %v2985
      %2987 = vmatmul.f32.gmra.mxu0 %v1906
      %v2988 = vpop.f32.mrf.mxu0
      %v2989 = vadd.f32 0.0, %v2988
      %2990 = vmatmul.f32.gmra.mxu0 %v1907
      %v2991 = vpop.f32.mrf.mxu0
      %v2992 = vadd.f32 0.0, %v2991
      %2993 = vmatmul.f32.gmra.mxu0 %v1908
      %v2994 = vpop.f32.mrf.mxu0
      %v2995 = vadd.f32 0.0, %v2994
      %2996 = vmatmul.f32.gmra.mxu0 %v1909
      %v2997 = vpop.f32.mrf.mxu0
      %v2998 = vadd.f32 0.0, %v2997
      %2999 = vmatmul.f32.gmra.mxu0 %v1910
      %v3000 = vpop.f32.mrf.mxu0
      %v3001 = vadd.f32 0.0, %v3000
      %3002 = vmatmul.f32.gmra.mxu0 %v1911
      %v3003 = vpop.f32.mrf.mxu0
      %v3004 = vadd.f32 0.0, %v3003
      %3005 = vmatmul.f32.gmra.mxu0 %v1912
      %v3006 = vpop.f32.mrf.mxu0
      %v3007 = vadd.f32 0.0, %v3006
      %3008 = vmatmul.f32.gmra.mxu0 %v1913
      %v3009 = vpop.f32.mrf.mxu0
      %v3010 = vadd.f32 0.0, %v3009
      %3011 = vmatmul.f32.gmra.mxu0 %v1914
      %v3012 = vpop.f32.mrf.mxu0
      %v3013 = vadd.f32 0.0, %v3012
      %3014 = vmatmul.f32.gmra.mxu0 %v1915
      %v3015 = vpop.f32.mrf.mxu0
      %v3016 = vadd.f32 0.0, %v3015
      %3017 = vmatmul.f32.gmra.mxu0 %v1916
      %v3018 = vpop.f32.mrf.mxu0
      %v3019 = vadd.f32 0.0, %v3018
      %3020 = vmatmul.f32.gmra.mxu0 %v1917
      %v3021 = vpop.f32.mrf.mxu0
      %v3022 = vadd.f32 0.0, %v3021
      %3023 = vmatmul.f32.gmra.mxu0 %v1918
      %v3024 = vpop.f32.mrf.mxu0
      %v3025 = vadd.f32 0.0, %v3024
      %3026 = vmatmul.f32.gmra.mxu0 %v1919
      %v3027 = vpop.f32.mrf.mxu0
      %v3028 = vadd.f32 0.0, %v3027
      %3029 = vmatmul.f32.gmra.mxu0 %v1920
      %v3030 = vpop.f32.mrf.mxu0
      %v3031 = vadd.f32 0.0, %v3030
      %3032 = vmatmul.f32.gmra.mxu0 %v1921
      %v3033 = vpop.f32.mrf.mxu0
      %v3034 = vadd.f32 0.0, %v3033
      %3035 = vmatmul.f32.gmra.mxu0 %v1922
      %v3036 = vpop.f32.mrf.mxu0
      %v3037 = vadd.f32 0.0, %v3036
      %3038 = vmatmul.f32.gmra.mxu0 %v1923
      %v3039 = vpop.f32.mrf.mxu0
      %v3040 = vadd.f32 0.0, %v3039
      %3041 = vmatmul.f32.gmra.mxu0 %v1924
      %v3042 = vpop.f32.mrf.mxu0
      %v3043 = vadd.f32 0.0, %v3042
      %3044 = vmatmul.f32.gmra.mxu0 %v1925
      %v3045 = vpop.f32.mrf.mxu0
      %v3046 = vadd.f32 0.0, %v3045
      %3047 = vmatmul.f32.gmra.mxu0 %v1926
      %v3048 = vpop.f32.mrf.mxu0
      %v3049 = vadd.f32 0.0, %v3048
      %3050 = vmatmul.f32.gmra.mxu0 %v1927
      %v3051 = vpop.f32.mrf.mxu0
      %v3052 = vadd.f32 0.0, %v3051
      %3053 = vmatmul.f32.gmra.mxu0 %v1928
      %v3054 = vpop.f32.mrf.mxu0
      %v3055 = vadd.f32 0.0, %v3054
      %3056 = vmatmul.f32.gmra.mxu0 %v1929
      %v3057 = vpop.f32.mrf.mxu0
      %v3058 = vadd.f32 0.0, %v3057
      %3059 = vmatmul.f32.gmra.mxu0 %v1930
      %v3060 = vpop.f32.mrf.mxu0
      %v3061 = vadd.f32 0.0, %v3060
      %3062 = vmatmul.f32.gmra.mxu0 %v1931
      %v3063 = vpop.f32.mrf.mxu0
      %v3064 = vadd.f32 0.0, %v3063
      %3065 = vdwg.mxu0
      %3066 = vmatpush.msra.mxu0 %v2309
      %3067 = vmatpush.msra.mxu0 %v2307
      %3068 = vmatpush.msra.mxu0 %v2305
      %3069 = vmatpush.msra.mxu0 %v2303
      %3070 = vmatpush.msra.mxu0 %v2301
      %3071 = vmatpush.msra.mxu0 %v2299
      %3072 = vmatpush.msra.mxu0 %v2297
      %3073 = vmatpush.msra.mxu0 %v2295
      %3074 = vmatpush.msra.mxu0 %v2293
      %3075 = vmatpush.msra.mxu0 %v2291
      %3076 = vmatpush.msra.mxu0 %v2289
      %3077 = vmatpush.msra.mxu0 %v2287
      %3078 = vmatpush.msra.mxu0 %v2285
      %3079 = vmatpush.msra.mxu0 %v2283
      %3080 = vmatpush.msra.mxu0 %v2281
      %3081 = vmatpush.msra.mxu0 %v2279
      %3082 = vmatmul.f32.gmra.mxu0 %v1967
      %v3083 = vpop.f32.mrf.mxu0
      %v3084 = vadd.f32 %v2974, %v3083
      %3085 = vmatmul.f32.gmra.mxu0 %v1969
      %v3086 = vpop.f32.mrf.mxu0
      %v3087 = vadd.f32 %v2977, %v3086
      %3088 = vmatmul.f32.gmra.mxu0 %v1971
      %v3089 = vpop.f32.mrf.mxu0
      %v3090 = vadd.f32 %v2980, %v3089
      %3091 = vmatmul.f32.gmra.mxu0 %v1973
      %v3092 = vpop.f32.mrf.mxu0
      %v3093 = vadd.f32 %v2983, %v3092
      %3094 = vmatmul.f32.gmra.mxu0 %v1975
      %v3095 = vpop.f32.mrf.mxu0
      %v3096 = vadd.f32 %v2986, %v3095
      %3097 = vmatmul.f32.gmra.mxu0 %v1977
      %v3098 = vpop.f32.mrf.mxu0
      %v3099 = vadd.f32 %v2989, %v3098
      %3100 = vmatmul.f32.gmra.mxu0 %v1979
      %v3101 = vpop.f32.mrf.mxu0
      %v3102 = vadd.f32 %v2992, %v3101
      %3103 = vmatmul.f32.gmra.mxu0 %v1981
      %v3104 = vpop.f32.mrf.mxu0
      %v3105 = vadd.f32 %v2995, %v3104
      %3106 = vmatmul.f32.gmra.mxu0 %v1983
      %v3107 = vpop.f32.mrf.mxu0
      %v3108 = vadd.f32 %v2998, %v3107
      %3109 = vmatmul.f32.gmra.mxu0 %v1985
      %v3110 = vpop.f32.mrf.mxu0
      %v3111 = vadd.f32 %v3001, %v3110
      %3112 = vmatmul.f32.gmra.mxu0 %v1987
      %v3113 = vpop.f32.mrf.mxu0
      %v3114 = vadd.f32 %v3004, %v3113
      %3115 = vmatmul.f32.gmra.mxu0 %v1989
      %v3116 = vpop.f32.mrf.mxu0
      %v3117 = vadd.f32 %v3007, %v3116
      %3118 = vmatmul.f32.gmra.mxu0 %v1991
      %v3119 = vpop.f32.mrf.mxu0
      %v3120 = vadd.f32 %v3010, %v3119
      %3121 = vmatmul.f32.gmra.mxu0 %v1993
      %v3122 = vpop.f32.mrf.mxu0
      %v3123 = vadd.f32 %v3013, %v3122
      %3124 = vmatmul.f32.gmra.mxu0 %v1995
      %v3125 = vpop.f32.mrf.mxu0
      %v3126 = vadd.f32 %v3016, %v3125
      %3127 = vmatmul.f32.gmra.mxu0 %v1997
      %v3128 = vpop.f32.mrf.mxu0
      %v3129 = vadd.f32 %v3019, %v3128
      %3130 = vmatmul.f32.gmra.mxu0 %v1999
      %v3131 = vpop.f32.mrf.mxu0
      %v3132 = vadd.f32 %v3022, %v3131
      %3133 = vmatmul.f32.gmra.mxu0 %v2001
      %v3134 = vpop.f32.mrf.mxu0
      %v3135 = vadd.f32 %v3025, %v3134
      %3136 = vmatmul.f32.gmra.mxu0 %v2003
      %v3137 = vpop.f32.mrf.mxu0
      %v3138 = vadd.f32 %v3028, %v3137
      %3139 = vmatmul.f32.gmra.mxu0 %v2005
      %v3140 = vpop.f32.mrf.mxu0
      %v3141 = vadd.f32 %v3031, %v3140
      %3142 = vmatmul.f32.gmra.mxu0 %v2007
      %v3143 = vpop.f32.mrf.mxu0
      %v3144 = vadd.f32 %v3034, %v3143
      %3145 = vmatmul.f32.gmra.mxu0 %v2009
      %v3146 = vpop.f32.mrf.mxu0
      %v3147 = vadd.f32 %v3037, %v3146
      %3148 = vmatmul.f32.gmra.mxu0 %v2011
      %v3149 = vpop.f32.mrf.mxu0
      %v3150 = vadd.f32 %v3040, %v3149
      %3151 = vmatmul.f32.gmra.mxu0 %v2013
      %v3152 = vpop.f32.mrf.mxu0
      %v3153 = vadd.f32 %v3043, %v3152
      %3154 = vmatmul.f32.gmra.mxu0 %v2015
      %v3155 = vpop.f32.mrf.mxu0
      %v3156 = vadd.f32 %v3046, %v3155
      %3157 = vmatmul.f32.gmra.mxu0 %v2017
      %v3158 = vpop.f32.mrf.mxu0
      %v3159 = vadd.f32 %v3049, %v3158
      %3160 = vmatmul.f32.gmra.mxu0 %v2019
      %v3161 = vpop.f32.mrf.mxu0
      %v3162 = vadd.f32 %v3052, %v3161
      %3163 = vmatmul.f32.gmra.mxu0 %v2021
      %v3164 = vpop.f32.mrf.mxu0
      %v3165 = vadd.f32 %v3055, %v3164
      %3166 = vmatmul.f32.gmra.mxu0 %v2023
      %v3167 = vpop.f32.mrf.mxu0
      %v3168 = vadd.f32 %v3058, %v3167
      %3169 = vmatmul.f32.gmra.mxu0 %v2025
      %v3170 = vpop.f32.mrf.mxu0
      %v3171 = vadd.f32 %v3061, %v3170
      %3172 = vmatmul.f32.gmra.mxu0 %v2024
      %v3173 = vpop.f32.mrf.mxu0
      %v3174 = vadd.f32 %v3064, %v3173
      %3175 = vdwg.mxu0
      %3176 = vmatpush.msra.mxu0 %v2341
      %3177 = vmatpush.msra.mxu0 %v2339
      %3178 = vmatpush.msra.mxu0 %v2337
      %3179 = vmatpush.msra.mxu0 %v2335
      %3180 = vmatpush.msra.mxu0 %v2333
      %3181 = vmatpush.msra.mxu0 %v2331
      %3182 = vmatpush.msra.mxu0 %v2329
      %3183 = vmatpush.msra.mxu0 %v2327
      %3184 = vmatpush.msra.mxu0 %v2325
      %3185 = vmatpush.msra.mxu0 %v2323
      %3186 = vmatpush.msra.mxu0 %v2321
      %3187 = vmatpush.msra.mxu0 %v2319
      %3188 = vmatpush.msra.mxu0 %v2317
      %3189 = vmatpush.msra.mxu0 %v2315
      %3190 = vmatpush.msra.mxu0 %v2313
      %3191 = vmatpush.msra.mxu0 %v2311
      %3192 = vmatmul.f32.gmra.mxu0 %v2060
      %v3193 = vpop.f32.mrf.mxu0
      %v3194 = vadd.f32 %v3084, %v3193
      %3195 = vmatmul.f32.gmra.mxu0 %v2062
      %v3196 = vpop.f32.mrf.mxu0
      %v3197 = vadd.f32 %v3087, %v3196
      %3198 = vmatmul.f32.gmra.mxu0 %v2064
      %v3199 = vpop.f32.mrf.mxu0
      %v3200 = vadd.f32 %v3090, %v3199
      %3201 = vmatmul.f32.gmra.mxu0 %v2066
      %v3202 = vpop.f32.mrf.mxu0
      %v3203 = vadd.f32 %v3093, %v3202
      %3204 = vmatmul.f32.gmra.mxu0 %v2068
      %v3205 = vpop.f32.mrf.mxu0
      %v3206 = vadd.f32 %v3096, %v3205
      %3207 = vmatmul.f32.gmra.mxu0 %v2070
      %v3208 = vpop.f32.mrf.mxu0
      %v3209 = vadd.f32 %v3099, %v3208
      %3210 = vmatmul.f32.gmra.mxu0 %v2072
      %v3211 = vpop.f32.mrf.mxu0
      %v3212 = vadd.f32 %v3102, %v3211
      %3213 = vmatmul.f32.gmra.mxu0 %v2074
      %v3214 = vpop.f32.mrf.mxu0
      %v3215 = vadd.f32 %v3105, %v3214
      %3216 = vmatmul.f32.gmra.mxu0 %v2076
      %v3217 = vpop.f32.mrf.mxu0
      %v3218 = vadd.f32 %v3108, %v3217
      %3219 = vmatmul.f32.gmra.mxu0 %v2078
      %v3220 = vpop.f32.mrf.mxu0
      %v3221 = vadd.f32 %v3111, %v3220
      %3222 = vmatmul.f32.gmra.mxu0 %v2080
      %v3223 = vpop.f32.mrf.mxu0
      %v3224 = vadd.f32 %v3114, %v3223
      %3225 = vmatmul.f32.gmra.mxu0 %v2082
      %v3226 = vpop.f32.mrf.mxu0
      %v3227 = vadd.f32 %v3117, %v3226
      %3228 = vmatmul.f32.gmra.mxu0 %v2084
      %v3229 = vpop.f32.mrf.mxu0
      %v3230 = vadd.f32 %v3120, %v3229
      %3231 = vmatmul.f32.gmra.mxu0 %v2086
      %v3232 = vpop.f32.mrf.mxu0
      %v3233 = vadd.f32 %v3123, %v3232
      %3234 = vmatmul.f32.gmra.mxu0 %v2088
      %v3235 = vpop.f32.mrf.mxu0
      %v3236 = vadd.f32 %v3126, %v3235
      %3237 = vmatmul.f32.gmra.mxu0 %v2090
      %v3238 = vpop.f32.mrf.mxu0
      %v3239 = vadd.f32 %v3129, %v3238
      %3240 = vmatmul.f32.gmra.mxu0 %v2092
      %v3241 = vpop.f32.mrf.mxu0
      %v3242 = vadd.f32 %v3132, %v3241
      %3243 = vmatmul.f32.gmra.mxu0 %v2094
      %v3244 = vpop.f32.mrf.mxu0
      %v3245 = vadd.f32 %v3135, %v3244
      %3246 = vmatmul.f32.gmra.mxu0 %v2096
      %v3247 = vpop.f32.mrf.mxu0
      %v3248 = vadd.f32 %v3138, %v3247
      %3249 = vmatmul.f32.gmra.mxu0 %v2098
      %v3250 = vpop.f32.mrf.mxu0
      %v3251 = vadd.f32 %v3141, %v3250
      %3252 = vmatmul.f32.gmra.mxu0 %v2100
      %v3253 = vpop.f32.mrf.mxu0
      %v3254 = vadd.f32 %v3144, %v3253
      %3255 = vmatmul.f32.gmra.mxu0 %v2102
      %v3256 = vpop.f32.mrf.mxu0
      %v3257 = vadd.f32 %v3147, %v3256
      %3258 = vmatmul.f32.gmra.mxu0 %v2104
      %v3259 = vpop.f32.mrf.mxu0
      %v3260 = vadd.f32 %v3150, %v3259
      %3261 = vmatmul.f32.gmra.mxu0 %v2106
      %v3262 = vpop.f32.mrf.mxu0
      %v3263 = vadd.f32 %v3153, %v3262
      %3264 = vmatmul.f32.gmra.mxu0 %v2108
      %v3265 = vpop.f32.mrf.mxu0
      %v3266 = vadd.f32 %v3156, %v3265
      %3267 = vmatmul.f32.gmra.mxu0 %v2110
      %v3268 = vpop.f32.mrf.mxu0
      %v3269 = vadd.f32 %v3159, %v3268
      %3270 = vmatmul.f32.gmra.mxu0 %v2112
      %v3271 = vpop.f32.mrf.mxu0
      %v3272 = vadd.f32 %v3162, %v3271
      %3273 = vmatmul.f32.gmra.mxu0 %v2114
      %v3274 = vpop.f32.mrf.mxu0
      %v3275 = vadd.f32 %v3165, %v3274
      %3276 = vmatmul.f32.gmra.mxu0 %v2116
      %v3277 = vpop.f32.mrf.mxu0
      %v3278 = vadd.f32 %v3168, %v3277
      %3279 = vmatmul.f32.gmra.mxu0 %v2118
      %v3280 = vpop.f32.mrf.mxu0
      %v3281 = vadd.f32 %v3171, %v3280
      %3282 = vmatmul.f32.gmra.mxu0 %v2117
      %v3283 = vpop.f32.mrf.mxu0
      %v3284 = vadd.f32 %v3174, %v3283
      %3285 = vdwg.mxu0
      %3286 = vmatpush.msra.mxu0 %v2373
      %3287 = vmatpush.msra.mxu0 %v2371
      %3288 = vmatpush.msra.mxu0 %v2369
      %3289 = vmatpush.msra.mxu0 %v2367
      %3290 = vmatpush.msra.mxu0 %v2365
      %3291 = vmatpush.msra.mxu0 %v2363
      %3292 = vmatpush.msra.mxu0 %v2361
      %3293 = vmatpush.msra.mxu0 %v2359
      %3294 = vmatpush.msra.mxu0 %v2357
      %3295 = vmatpush.msra.mxu0 %v2355
      %3296 = vmatpush.msra.mxu0 %v2353
      %3297 = vmatpush.msra.mxu0 %v2351
      %3298 = vmatpush.msra.mxu0 %v2349
      %3299 = vmatpush.msra.mxu0 %v2347
      %3300 = vmatpush.msra.mxu0 %v2345
      %3301 = vmatpush.msra.mxu0 %v2343
      %3302 = vmatmul.f32.gmra.mxu0 %v2154
      %v3303 = vpop.f32.mrf.mxu0
      %v3304 = vadd.f32 %v3194, %v3303
      %3305 = vmatmul.f32.gmra.mxu0 %v2156
      %v3306 = vpop.f32.mrf.mxu0
      %v3307 = vadd.f32 %v3197, %v3306
      %3308 = vmatmul.f32.gmra.mxu0 %v2158
      %v3309 = vpop.f32.mrf.mxu0
      %v3310 = vadd.f32 %v3200, %v3309
      %3311 = vmatmul.f32.gmra.mxu0 %v2160
      %v3312 = vpop.f32.mrf.mxu0
      %v3313 = vadd.f32 %v3203, %v3312
      %3314 = vmatmul.f32.gmra.mxu0 %v2162
      %v3315 = vpop.f32.mrf.mxu0
      %v3316 = vadd.f32 %v3206, %v3315
      %3317 = vmatmul.f32.gmra.mxu0 %v2164
      %v3318 = vpop.f32.mrf.mxu0
      %v3319 = vadd.f32 %v3209, %v3318
      %3320 = vmatmul.f32.gmra.mxu0 %v2166
      %v3321 = vpop.f32.mrf.mxu0
      %v3322 = vadd.f32 %v3212, %v3321
      %3323 = vmatmul.f32.gmra.mxu0 %v2168
      %v3324 = vpop.f32.mrf.mxu0
      %v3325 = vadd.f32 %v3215, %v3324
      %3326 = vmatmul.f32.gmra.mxu0 %v2170
      %v3327 = vpop.f32.mrf.mxu0
      %v3328 = vadd.f32 %v3218, %v3327
      %3329 = vmatmul.f32.gmra.mxu0 %v2172
      %v3330 = vpop.f32.mrf.mxu0
      %v3331 = vadd.f32 %v3221, %v3330
      %3332 = vmatmul.f32.gmra.mxu0 %v2174
      %v3333 = vpop.f32.mrf.mxu0
      %v3334 = vadd.f32 %v3224, %v3333
      %3335 = vmatmul.f32.gmra.mxu0 %v2176
      %v3336 = vpop.f32.mrf.mxu0
      %v3337 = vadd.f32 %v3227, %v3336
      %3338 = vmatmul.f32.gmra.mxu0 %v2178
      %v3339 = vpop.f32.mrf.mxu0
      %v3340 = vadd.f32 %v3230, %v3339
      %3341 = vmatmul.f32.gmra.mxu0 %v2180
      %v3342 = vpop.f32.mrf.mxu0
      %v3343 = vadd.f32 %v3233, %v3342
      %3344 = vmatmul.f32.gmra.mxu0 %v2182
      %v3345 = vpop.f32.mrf.mxu0
      %v3346 = vadd.f32 %v3236, %v3345
      %3347 = vmatmul.f32.gmra.mxu0 %v2184
      %v3348 = vpop.f32.mrf.mxu0
      %v3349 = vadd.f32 %v3239, %v3348
      %3350 = vmatmul.f32.gmra.mxu0 %v2186
      %v3351 = vpop.f32.mrf.mxu0
      %v3352 = vadd.f32 %v3242, %v3351
      %3353 = vmatmul.f32.gmra.mxu0 %v2188
      %v3354 = vpop.f32.mrf.mxu0
      %v3355 = vadd.f32 %v3245, %v3354
      %3356 = vmatmul.f32.gmra.mxu0 %v2190
      %v3357 = vpop.f32.mrf.mxu0
      %v3358 = vadd.f32 %v3248, %v3357
      %3359 = vmatmul.f32.gmra.mxu0 %v2192
      %v3360 = vpop.f32.mrf.mxu0
      %v3361 = vadd.f32 %v3251, %v3360
      %3362 = vmatmul.f32.gmra.mxu0 %v2194
      %v3363 = vpop.f32.mrf.mxu0
      %v3364 = vadd.f32 %v3254, %v3363
      %3365 = vmatmul.f32.gmra.mxu0 %v2196
      %v3366 = vpop.f32.mrf.mxu0
      %v3367 = vadd.f32 %v3257, %v3366
      %3368 = vmatmul.f32.gmra.mxu0 %v2198
      %v3369 = vpop.f32.mrf.mxu0
      %v3370 = vadd.f32 %v3260, %v3369
      %3371 = vmatmul.f32.gmra.mxu0 %v2200
      %v3372 = vpop.f32.mrf.mxu0
      %v3373 = vadd.f32 %v3263, %v3372
      %3374 = vmatmul.f32.gmra.mxu0 %v2202
      %v3375 = vpop.f32.mrf.mxu0
      %v3376 = vadd.f32 %v3266, %v3375
      %3377 = vmatmul.f32.gmra.mxu0 %v2204
      %v3378 = vpop.f32.mrf.mxu0
      %v3379 = vadd.f32 %v3269, %v3378
      %3380 = vmatmul.f32.gmra.mxu0 %v2206
      %v3381 = vpop.f32.mrf.mxu0
      %v3382 = vadd.f32 %v3272, %v3381
      %3383 = vmatmul.f32.gmra.mxu0 %v2208
      %v3384 = vpop.f32.mrf.mxu0
      %v3385 = vadd.f32 %v3275, %v3384
      %3386 = vmatmul.f32.gmra.mxu0 %v2210
      %v3387 = vpop.f32.mrf.mxu0
      %v3388 = vadd.f32 %v3278, %v3387
      %3389 = vmatmul.f32.gmra.mxu0 %v2212
      %v3390 = vpop.f32.mrf.mxu0
      %v3391 = vadd.f32 %v3281, %v3390
      %3392 = vmatmul.f32.gmra.mxu0 %v2214
      %v3393 = vpop.f32.mrf.mxu0
      %v3394 = vadd.f32 %v3284, %v3393
      %3395 = vdwg.mxu0
      %3396 = vmatpush.msra.mxu0 %v2405
      %3397 = vmatpush.msra.mxu0 %v2403
      %3398 = vmatpush.msra.mxu0 %v2401
      %3399 = vmatpush.msra.mxu0 %v2399
      %3400 = vmatpush.msra.mxu0 %v2397
      %3401 = vmatpush.msra.mxu0 %v2395
      %3402 = vmatpush.msra.mxu0 %v2393
      %3403 = vmatpush.msra.mxu0 %v2391
      %3404 = vmatpush.msra.mxu0 %v2389
      %3405 = vmatpush.msra.mxu0 %v2387
      %3406 = vmatpush.msra.mxu0 %v2385
      %3407 = vmatpush.msra.mxu0 %v2383
      %3408 = vmatpush.msra.mxu0 %v2381
      %3409 = vmatpush.msra.mxu0 %v2379
      %3410 = vmatpush.msra.mxu0 %v2377
      %3411 = vmatpush.msra.mxu0 %v2375
      %3412 = vmatmul.f32.gmra.mxu0 %v1902
      %v3413 = vpop.f32.mrf.mxu0
      %v3414 = vadd.f32 %v3304, %v3413
      %3415 = vmatmul.f32.gmra.mxu0 %v1903
      %v3416 = vpop.f32.mrf.mxu0
      %v3417 = vadd.f32 %v3307, %v3416
      %3418 = vmatmul.f32.gmra.mxu0 %v1904
      %v3419 = vpop.f32.mrf.mxu0
      %v3420 = vadd.f32 %v3310, %v3419
      %3421 = vmatmul.f32.gmra.mxu0 %v1905
      %v3422 = vpop.f32.mrf.mxu0
      %v3423 = vadd.f32 %v3313, %v3422
      %3424 = vmatmul.f32.gmra.mxu0 %v1906
      %v3425 = vpop.f32.mrf.mxu0
      %v3426 = vadd.f32 %v3316, %v3425
      %3427 = vmatmul.f32.gmra.mxu0 %v1907
      %v3428 = vpop.f32.mrf.mxu0
      %v3429 = vadd.f32 %v3319, %v3428
      %3430 = vmatmul.f32.gmra.mxu0 %v1908
      %v3431 = vpop.f32.mrf.mxu0
      %v3432 = vadd.f32 %v3322, %v3431
      %3433 = vmatmul.f32.gmra.mxu0 %v1909
      %v3434 = vpop.f32.mrf.mxu0
      %v3435 = vadd.f32 %v3325, %v3434
      %3436 = vmatmul.f32.gmra.mxu0 %v1910
      %v3437 = vpop.f32.mrf.mxu0
      %v3438 = vadd.f32 %v3328, %v3437
      %3439 = vmatmul.f32.gmra.mxu0 %v1911
      %v3440 = vpop.f32.mrf.mxu0
      %v3441 = vadd.f32 %v3331, %v3440
      %3442 = vmatmul.f32.gmra.mxu0 %v1912
      %v3443 = vpop.f32.mrf.mxu0
      %v3444 = vadd.f32 %v3334, %v3443
      %3445 = vmatmul.f32.gmra.mxu0 %v1913
      %v3446 = vpop.f32.mrf.mxu0
      %v3447 = vadd.f32 %v3337, %v3446
      %3448 = vmatmul.f32.gmra.mxu0 %v1914
      %v3449 = vpop.f32.mrf.mxu0
      %v3450 = vadd.f32 %v3340, %v3449
      %3451 = vmatmul.f32.gmra.mxu0 %v1915
      %v3452 = vpop.f32.mrf.mxu0
      %v3453 = vadd.f32 %v3343, %v3452
      %3454 = vmatmul.f32.gmra.mxu0 %v1916
      %v3455 = vpop.f32.mrf.mxu0
      %v3456 = vadd.f32 %v3346, %v3455
      %3457 = vmatmul.f32.gmra.mxu0 %v1917
      %v3458 = vpop.f32.mrf.mxu0
      %v3459 = vadd.f32 %v3349, %v3458
      %3460 = vmatmul.f32.gmra.mxu0 %v1918
      %v3461 = vpop.f32.mrf.mxu0
      %v3462 = vadd.f32 %v3352, %v3461
      %3463 = vmatmul.f32.gmra.mxu0 %v1919
      %v3464 = vpop.f32.mrf.mxu0
      %v3465 = vadd.f32 %v3355, %v3464
      %3466 = vmatmul.f32.gmra.mxu0 %v1920
      %v3467 = vpop.f32.mrf.mxu0
      %v3468 = vadd.f32 %v3358, %v3467
      %3469 = vmatmul.f32.gmra.mxu0 %v1921
      %v3470 = vpop.f32.mrf.mxu0
      %v3471 = vadd.f32 %v3361, %v3470
      %3472 = vmatmul.f32.gmra.mxu0 %v1922
      %v3473 = vpop.f32.mrf.mxu0
      %v3474 = vadd.f32 %v3364, %v3473
      %3475 = vmatmul.f32.gmra.mxu0 %v1923
      %v3476 = vpop.f32.mrf.mxu0
      %v3477 = vadd.f32 %v3367, %v3476
      %3478 = vmatmul.f32.gmra.mxu0 %v1924
      %v3479 = vpop.f32.mrf.mxu0
      %v3480 = vadd.f32 %v3370, %v3479
      %3481 = vmatmul.f32.gmra.mxu0 %v1925
      %v3482 = vpop.f32.mrf.mxu0
      %v3483 = vadd.f32 %v3373, %v3482
      %3484 = vmatmul.f32.gmra.mxu0 %v1926
      %v3485 = vpop.f32.mrf.mxu0
      %v3486 = vadd.f32 %v3376, %v3485
      %3487 = vmatmul.f32.gmra.mxu0 %v1927
      %v3488 = vpop.f32.mrf.mxu0
      %v3489 = vadd.f32 %v3379, %v3488
      %3490 = vmatmul.f32.gmra.mxu0 %v1928
      %v3491 = vpop.f32.mrf.mxu0
      %v3492 = vadd.f32 %v3382, %v3491
      %3493 = vmatmul.f32.gmra.mxu0 %v1929
      %v3494 = vpop.f32.mrf.mxu0
      %v3495 = vadd.f32 %v3385, %v3494
      %3496 = vmatmul.f32.gmra.mxu0 %v1930
      %v3497 = vpop.f32.mrf.mxu0
      %v3498 = vadd.f32 %v3388, %v3497
      %3499 = vmatmul.f32.gmra.mxu0 %v1931
      %v3500 = vpop.f32.mrf.mxu0
      %v3501 = vadd.f32 %v3391, %v3500
      %3502 = vmatmul.f32.gmra.mxu0 %v1932
      %v3503 = vpop.f32.mrf.mxu0
      %v3504 = vadd.f32 %v3394, %v3503
      %3505 = vdwg.mxu0
      %v3506 = vld [vmem:[%s4 + $0x1] sm:$0x1]
      %v3507 = vmax.f32 %v2864, %v3414
      %v3508 = vmax.f32 %v2867, %v3417
      %v3509 = vmax.f32 %v2870, %v3420
      %v3510 = vmax.f32 %v2873, %v3423
      %v3511 = vmax.f32 %v2876, %v3426
      %v3512 = vmax.f32 %v2879, %v3429
      %v3513 = vmax.f32 %v2882, %v3432
      %v3514 = vmax.f32 %v2885, %v3435
      %v3515 = vmax.f32 %v2888, %v3438
      %v3516 = vmax.f32 %v2891, %v3441
      %v3517 = vmax.f32 %v2894, %v3444
      %v3518 = vmax.f32 %v2897, %v3447
      %v3519 = vmax.f32 %v2900, %v3450
      %v3520 = vmax.f32 %v2903, %v3453
      %v3521 = vmax.f32 %v2906, %v3456
      %v3522 = vmax.f32 %v2909, %v3459
      %v3523 = vmax.f32 %v2912, %v3462
      %v3524 = vmax.f32 %v2915, %v3465
      %v3525 = vmax.f32 %v2918, %v3468
      %v3526 = vmax.f32 %v2921, %v3471
      %v3527 = vmax.f32 %v2924, %v3474
      %v3528 = vmax.f32 %v2927, %v3477
      %v3529 = vmax.f32 %v2930, %v3480
      %v3530 = vmax.f32 %v2933, %v3483
      %v3531 = vmax.f32 %v2936, %v3486
      %v3532 = vmax.f32 %v2939, %v3489
      %v3533 = vmax.f32 %v2942, %v3492
      %v3534 = vmax.f32 %v2945, %v3495
      %v3535 = vmax.f32 %v2948, %v3498
      %v3536 = vmax.f32 %v2951, %v3501
      %v3537 = vmax.f32 %v2954, %v3504
      %v3538 = vperm.slane %v3506, 0
      %v3539 = vadd.f32 %v3507, %v3538
      %v3540 = vadd.f32 %v3508, %v3538
      %v3541 = vadd.f32 %v3509, %v3538
      %v3542 = vadd.f32 %v3510, %v3538
      %v3543 = vadd.f32 %v3511, %v3538
      %v3544 = vadd.f32 %v3512, %v3538
      %v3545 = vadd.f32 %v3513, %v3538
      %v3546 = vadd.f32 %v3514, %v3538
      %v3547 = vadd.f32 %v3515, %v3538
      %v3548 = vadd.f32 %v3516, %v3538
      %v3549 = vadd.f32 %v3517, %v3538
      %v3550 = vadd.f32 %v3518, %v3538
      %v3551 = vadd.f32 %v3519, %v3538
      %v3552 = vadd.f32 %v3520, %v3538
      %v3553 = vadd.f32 %v3521, %v3538
      %v3554 = vadd.f32 %v3522, %v3538
      %v3555 = vadd.f32 %v3523, %v3538
      %v3556 = vadd.f32 %v3524, %v3538
      %v3557 = vadd.f32 %v3525, %v3538
      %v3558 = vadd.f32 %v3526, %v3538
      %v3559 = vadd.f32 %v3527, %v3538
      %v3560 = vadd.f32 %v3528, %v3538
      %v3561 = vadd.f32 %v3529, %v3538
      %v3562 = vadd.f32 %v3530, %v3538
      %v3563 = vadd.f32 %v3531, %v3538
      %v3564 = vadd.f32 %v3532, %v3538
      %v3565 = vadd.f32 %v3533, %v3538
      %v3566 = vadd.f32 %v3534, %v3538
      %v3567 = vadd.f32 %v3535, %v3538
      %v3568 = vadd.f32 %v3536, %v3538
      %v3569 = vadd.f32 %v3537, %v3538
      %v3570 = vmax.f32 %v3539, 0.0
      %v3571 = vmax.f32 %v3540, 0.0
      %v3572 = vmax.f32 %v3541, 0.0
      %v3573 = vmax.f32 %v3542, 0.0
      %v3574 = vmax.f32 %v3543, 0.0
      %v3575 = vmax.f32 %v3544, 0.0
      %v3576 = vmax.f32 %v3545, 0.0
      %v3577 = vmax.f32 %v3546, 0.0
      %v3578 = vmax.f32 %v3547, 0.0
      %v3579 = vmax.f32 %v3548, 0.0
      %v3580 = vmax.f32 %v3549, 0.0
      %v3581 = vmax.f32 %v3550, 0.0
      %v3582 = vmax.f32 %v3551, 0.0
      %v3583 = vmax.f32 %v3552, 0.0
      %v3584 = vmax.f32 %v3553, 0.0
      %v3585 = vmax.f32 %v3554, 0.0
      %v3586 = vmax.f32 %v3555, 0.0
      %v3587 = vmax.f32 %v3556, 0.0
      %v3588 = vmax.f32 %v3557, 0.0
      %v3589 = vmax.f32 %v3558, 0.0
      %v3590 = vmax.f32 %v3559, 0.0
      %v3591 = vmax.f32 %v3560, 0.0
      %v3592 = vmax.f32 %v3561, 0.0
      %v3593 = vmax.f32 %v3562, 0.0
      %v3594 = vmax.f32 %v3563, 0.0
      %v3595 = vmax.f32 %v3564, 0.0
      %v3596 = vmax.f32 %v3565, 0.0
      %v3597 = vmax.f32 %v3566, 0.0
      %v3598 = vmax.f32 %v3567, 0.0
      %v3599 = vmax.f32 %v3568, 0.0
      %v3600 = vmax.f32 %v3569, 0.0
      %v3632 = vrot.slane %v3570, 2
      %v3633 = vrot.slane %v3571, 2
      %v3634 = vsel %vm1964, %v3632, %v3633
      %v3635 = vrot.slane %v3572, 2
      %v3636 = vsel %vm1964, %v3633, %v3635
      %v3637 = vrot.slane %v3573, 2
      %v3638 = vsel %vm1964, %v3635, %v3637
      %v3639 = vrot.slane %v3574, 2
      %v3640 = vsel %vm1964, %v3637, %v3639
      %v3641 = vrot.slane %v3575, 2
      %v3642 = vsel %vm1964, %v3639, %v3641
      %v3643 = vrot.slane %v3576, 2
      %v3644 = vsel %vm1964, %v3641, %v3643
      %v3645 = vrot.slane %v3577, 2
      %v3646 = vsel %vm1964, %v3643, %v3645
      %v3647 = vrot.slane %v3578, 2
      %v3648 = vsel %vm1964, %v3645, %v3647
      %v3649 = vrot.slane %v3579, 2
      %v3650 = vsel %vm1964, %v3647, %v3649
      %v3651 = vrot.slane %v3580, 2
      %v3652 = vsel %vm1964, %v3649, %v3651
      %v3653 = vrot.slane %v3581, 2
      %v3654 = vsel %vm1964, %v3651, %v3653
      %v3655 = vrot.slane %v3582, 2
      %v3656 = vsel %vm1964, %v3653, %v3655
      %v3657 = vrot.slane %v3583, 2
      %v3658 = vsel %vm1964, %v3655, %v3657
      %v3659 = vrot.slane %v3584, 2
      %v3660 = vsel %vm1964, %v3657, %v3659
      %v3661 = vrot.slane %v3585, 2
      %v3662 = vsel %vm1964, %v3659, %v3661
      %v3663 = vrot.slane %v3586, 2
      %v3664 = vsel %vm1964, %v3661, %v3663
      %v3665 = vrot.slane %v3587, 2
      %v3666 = vsel %vm1964, %v3663, %v3665
      %v3667 = vrot.slane %v3588, 2
      %v3668 = vsel %vm1964, %v3665, %v3667
      %v3669 = vrot.slane %v3589, 2
      %v3670 = vsel %vm1964, %v3667, %v3669
      %v3671 = vrot.slane %v3590, 2
      %v3672 = vsel %vm1964, %v3669, %v3671
      %v3673 = vrot.slane %v3591, 2
      %v3674 = vsel %vm1964, %v3671, %v3673
      %v3675 = vrot.slane %v3592, 2
      %v3676 = vsel %vm1964, %v3673, %v3675
      %v3677 = vrot.slane %v3593, 2
      %v3678 = vsel %vm1964, %v3675, %v3677
      %v3679 = vrot.slane %v3594, 2
      %v3680 = vsel %vm1964, %v3677, %v3679
      %v3681 = vrot.slane %v3595, 2
      %v3682 = vsel %vm1964, %v3679, %v3681
      %v3683 = vrot.slane %v3596, 2
      %v3684 = vsel %vm1964, %v3681, %v3683
      %v3685 = vrot.slane %v3597, 2
      %v3686 = vsel %vm1964, %v3683, %v3685
      %v3687 = vrot.slane %v3598, 2
      %v3688 = vsel %vm1964, %v3685, %v3687
      %v3689 = vrot.slane %v3599, 2
      %v3690 = vsel %vm1964, %v3687, %v3689
      %v3691 = vrot.slane %v3600, 2
      %v3692 = vsel %vm1964, %v3689, %v3691
      %v3724 = vmax.f32 %v3570, %v3634
      %v3725 = vmax.f32 %v3571, %v3636
      %v3726 = vmax.f32 %v3572, %v3638
      %v3727 = vmax.f32 %v3573, %v3640
      %v3728 = vmax.f32 %v3574, %v3642
      %v3729 = vmax.f32 %v3575, %v3644
      %v3730 = vmax.f32 %v3576, %v3646
      %v3731 = vmax.f32 %v3577, %v3648
      %v3732 = vmax.f32 %v3578, %v3650
      %v3733 = vmax.f32 %v3579, %v3652
      %v3734 = vmax.f32 %v3580, %v3654
      %v3735 = vmax.f32 %v3581, %v3656
      %v3736 = vmax.f32 %v3582, %v3658
      %v3737 = vmax.f32 %v3583, %v3660
      %v3738 = vmax.f32 %v3584, %v3662
      %v3739 = vmax.f32 %v3585, %v3664
      %v3740 = vmax.f32 %v3586, %v3666
      %v3741 = vmax.f32 %v3587, %v3668
      %v3742 = vmax.f32 %v3588, %v3670
      %v3743 = vmax.f32 %v3589, %v3672
      %v3744 = vmax.f32 %v3590, %v3674
      %v3745 = vmax.f32 %v3591, %v3676
      %v3746 = vmax.f32 %v3592, %v3678
      %v3747 = vmax.f32 %v3593, %v3680
      %v3748 = vmax.f32 %v3594, %v3682
      %v3749 = vmax.f32 %v3595, %v3684
      %v3750 = vmax.f32 %v3596, %v3686
      %v3751 = vmax.f32 %v3597, %v3688
      %v3752 = vmax.f32 %v3598, %v3690
      %v3753 = vmax.f32 %v3599, %v3692
      %v3754 = vmax.f32 %v3600, %v3691
      %3755 = vst [vmem:[#allocation2] sm:$0xff] %v3724
      %3756 = vst [vmem:[#allocation2 + $0x8] sm:$0xff] %v3725
      %3757 = vst [vmem:[#allocation2 + $0x10] sm:$0xff] %v3726
      %3758 = vst [vmem:[#allocation2 + $0x18] sm:$0xff] %v3727
      %3759 = vst [vmem:[#allocation2 + $0x20] sm:$0xff] %v3728
      %3760 = vst [vmem:[#allocation2 + $0x28] sm:$0xff] %v3729
      %3761 = vst [vmem:[#allocation2 + $0x30] sm:$0xff] %v3730
      %3762 = vst [vmem:[#allocation2 + $0x38] sm:$0xff] %v3731
      %3763 = vst [vmem:[#allocation2 + $0x40] sm:$0xff] %v3732
      %3764 = vst [vmem:[#allocation2 + $0x48] sm:$0xff] %v3733
      %3765 = vst [vmem:[#allocation2 + $0x50] sm:$0xff] %v3734
      %3766 = vst [vmem:[#allocation2 + $0x58] sm:$0xff] %v3735
      %3767 = vst [vmem:[#allocation2 + $0x60] sm:$0xff] %v3736
      %3768 = vst [vmem:[#allocation2 + $0x68] sm:$0xff] %v3737
      %3769 = vst [vmem:[#allocation2 + $0x70] sm:$0xff] %v3738
      %3770 = vst [vmem:[#allocation2 + $0x78] sm:$0xff] %v3739
      %3771 = vst [vmem:[#allocation2 + $0x80] sm:$0xff] %v3740
      %3772 = vst [vmem:[#allocation2 + $0x88] sm:$0xff] %v3741
      %3773 = vst [vmem:[#allocation2 + $0x90] sm:$0xff] %v3742
      %3774 = vst [vmem:[#allocation2 + $0x98] sm:$0xff] %v3743
      %3775 = vst [vmem:[#allocation2 + $0xa0] sm:$0xff] %v3744
      %3776 = vst [vmem:[#allocation2 + $0xa8] sm:$0xff] %v3745
      %3777 = vst [vmem:[#allocation2 + $0xb0] sm:$0xff] %v3746
      %3778 = vst [vmem:[#allocation2 + $0xb8] sm:$0xff] %v3747
      %3779 = vst [vmem:[#allocation2 + $0xc0] sm:$0xff] %v3748
      %3780 = vst [vmem:[#allocation2 + $0xc8] sm:$0xff] %v3749
      %3781 = vst [vmem:[#allocation2 + $0xd0] sm:$0xff] %v3750
      %3782 = vst [vmem:[#allocation2 + $0xd8] sm:$0xff] %v3751
      %3783 = vst [vmem:[#allocation2 + $0xe0] sm:$0xff] %v3752
      %3784 = vst [vmem:[#allocation2 + $0xe8] sm:$0xff] %v3753
      %3785 = vst [vmem:[#allocation2 + $0xf0] sm:$0x1] %v3754
      %v3786 = vld [vmem:[#allocation2] ss:$32 sm:$0x1]
      %v3787 = vld [vmem:[#allocation2] ss:$32 sm:$0x2]
      %v3788 = vor.u32 %v3786, %v3787
      %v3789 = vld [vmem:[#allocation2] ss:$32 sm:$0x4]
      %v3790 = vor.u32 %v3788, %v3789
      %v3791 = vld [vmem:[#allocation2] ss:$32 sm:$0x8]
      %v3792 = vor.u32 %v3790, %v3791
      %v3793 = vld [vmem:[#allocation2] ss:$32 sm:$0x10]
      %v3794 = vor.u32 %v3792, %v3793
      %v3795 = vld [vmem:[#allocation2] ss:$32 sm:$0x20]
      %v3796 = vor.u32 %v3794, %v3795
      %v3797 = vld [vmem:[#allocation2] ss:$32 sm:$0x40]
      %v3798 = vor.u32 %v3796, %v3797
      %v3799 = vld [vmem:[#allocation2] ss:$32 sm:$0x80]
      %v3800 = vor.u32 %v3798, %v3799
      %s3801 = scalar_lea.vmem [#allocation2], 4
      %v3802 = vld [vmem:[%s3801] ss:$32 sm:$0x1]
      %v3803 = vld [vmem:[%s3801] ss:$32 sm:$0x2]
      %v3804 = vor.u32 %v3802, %v3803
      %v3805 = vld [vmem:[%s3801] ss:$32 sm:$0x4]
      %v3806 = vor.u32 %v3804, %v3805
      %v3807 = vld [vmem:[%s3801] ss:$32 sm:$0x8]
      %v3808 = vor.u32 %v3806, %v3807
      %v3809 = vld [vmem:[%s3801] ss:$32 sm:$0x10]
      %v3810 = vor.u32 %v3808, %v3809
      %v3811 = vld [vmem:[%s3801] ss:$32 sm:$0x20]
      %v3812 = vor.u32 %v3810, %v3811
      %v3813 = vld [vmem:[%s3801] ss:$32 sm:$0x40]
      %v3814 = vor.u32 %v3812, %v3813
      %v3815 = vld [vmem:[%s3801] ss:$32 sm:$0x80]
      %v3816 = vor.u32 %v3814, %v3815
      %s3817 = scalar_lea.vmem [#allocation2], 8
      %v3818 = vld [vmem:[%s3817] ss:$32 sm:$0x1]
      %v3819 = vld [vmem:[%s3817] ss:$32 sm:$0x2]
      %v3820 = vor.u32 %v3818, %v3819
      %v3821 = vld [vmem:[%s3817] ss:$32 sm:$0x4]
      %v3822 = vor.u32 %v3820, %v3821
      %v3823 = vld [vmem:[%s3817] ss:$32 sm:$0x8]
      %v3824 = vor.u32 %v3822, %v3823
      %v3825 = vld [vmem:[%s3817] ss:$32 sm:$0x10]
      %v3826 = vor.u32 %v3824, %v3825
      %v3827 = vld [vmem:[%s3817] ss:$32 sm:$0x20]
      %v3828 = vor.u32 %v3826, %v3827
      %v3829 = vld [vmem:[%s3817] ss:$32 sm:$0x40]
      %v3830 = vor.u32 %v3828, %v3829
      %v3831 = vld [vmem:[%s3817] ss:$32 sm:$0x80]
      %v3832 = vor.u32 %v3830, %v3831
      %s3833 = scalar_lea.vmem [#allocation2], 12
      %v3834 = vld [vmem:[%s3833] ss:$32 sm:$0x1]
      %v3835 = vld [vmem:[%s3833] ss:$32 sm:$0x2]
      %v3836 = vor.u32 %v3834, %v3835
      %v3837 = vld [vmem:[%s3833] ss:$32 sm:$0x4]
      %v3838 = vor.u32 %v3836, %v3837
      %v3839 = vld [vmem:[%s3833] ss:$32 sm:$0x8]
      %v3840 = vor.u32 %v3838, %v3839
      %v3841 = vld [vmem:[%s3833] ss:$32 sm:$0x10]
      %v3842 = vor.u32 %v3840, %v3841
      %v3843 = vld [vmem:[%s3833] ss:$32 sm:$0x20]
      %v3844 = vor.u32 %v3842, %v3843
      %v3845 = vld [vmem:[%s3833] ss:$32 sm:$0x40]
      %v3846 = vor.u32 %v3844, %v3845
      %v3847 = vld [vmem:[%s3833] ss:$32 sm:$0x80]
      %v3848 = vor.u32 %v3846, %v3847
      %s3849 = scalar_lea.vmem [#allocation2], 16
      %v3850 = vld [vmem:[%s3849] ss:$32 sm:$0x1]
      %v3851 = vld [vmem:[%s3849] ss:$32 sm:$0x2]
      %v3852 = vor.u32 %v3850, %v3851
      %v3853 = vld [vmem:[%s3849] ss:$32 sm:$0x4]
      %v3854 = vor.u32 %v3852, %v3853
      %v3855 = vld [vmem:[%s3849] ss:$32 sm:$0x8]
      %v3856 = vor.u32 %v3854, %v3855
      %v3857 = vld [vmem:[%s3849] ss:$32 sm:$0x10]
      %v3858 = vor.u32 %v3856, %v3857
      %v3859 = vld [vmem:[%s3849] ss:$32 sm:$0x20]
      %v3860 = vor.u32 %v3858, %v3859
      %v3861 = vld [vmem:[%s3849] ss:$32 sm:$0x40]
      %v3862 = vor.u32 %v3860, %v3861
      %v3863 = vld [vmem:[%s3849] ss:$32 sm:$0x80]
      %v3864 = vor.u32 %v3862, %v3863
      %v3865 = vld [vmem:[%s4 + $0x2] sm:$0x1]
      %v3866 = vld [vmem:[%s3] sm:$0xff]
      %v3867 = vld [vmem:[%s3 + $0x8] sm:$0xff]
      %v3868 = vld [vmem:[%s3 + $0x10] sm:$0xff]
      %v3869 = vld [vmem:[%s3 + $0x18] sm:$0xff]
      %v3870 = vld [vmem:[%s3 + $0x20] sm:$0xff]
      %v3871 = vld [vmem:[%s3 + $0x28] sm:$0xff]
      %v3872 = vld [vmem:[%s3 + $0x30] sm:$0xff]
      %v3873 = vld [vmem:[%s3 + $0x38] sm:$0xff]
      %v3874 = vld [vmem:[%s3 + $0x40] sm:$0xff]
      %v3875 = vld [vmem:[%s3 + $0x48] sm:$0xff]
      %v3876 = vld [vmem:[%s3 + $0x50] sm:$0xff]
      %v3877 = vld [vmem:[%s3 + $0x58] sm:$0xff]
      %v3878 = vld [vmem:[%s3 + $0x60] sm:$0xff]
      %v3879 = vld [vmem:[%s3 + $0x68] sm:$0xff]
      %v3880 = vld [vmem:[%s3 + $0x70] sm:$0xff]
      %v3881 = vld [vmem:[%s3 + $0x78] sm:$0xff]
      %v3882 = vld [vmem:[%s3 + $0x80] sm:$0xff]
      %v3883 = vld [vmem:[%s3 + $0x88] sm:$0xff]
      %v3884 = vld [vmem:[%s3 + $0x90] sm:$0xff]
      %v3885 = vld [vmem:[%s3 + $0x98] sm:$0xff]
      %v3886 = vld [vmem:[%s3 + $0xa0] sm:$0xff]
      %v3887 = vld [vmem:[%s3 + $0xa8] sm:$0xff]
      %v3888 = vld [vmem:[%s3 + $0xb0] sm:$0xff]
      %v3889 = vld [vmem:[%s3 + $0xb8] sm:$0xff]
      %v3890 = vld [vmem:[%s3 + $0xc0] sm:$0xff]
      %v3891 = vld [vmem:[%s3 + $0xc8] sm:$0xff]
      %v3892 = vld [vmem:[%s3 + $0xd0] sm:$0xff]
      %v3893 = vld [vmem:[%s3 + $0xd8] sm:$0xff]
      %v3894 = vld [vmem:[%s3 + $0xe0] sm:$0xff]
      %v3895 = vld [vmem:[%s3 + $0xe8] sm:$0xff]
      %v3896 = vld [vmem:[%s3 + $0xf0] sm:$0xff]
      %v3897 = vld [vmem:[%s3 + $0xf8] sm:$0xff]
      %v3898 = vld [vmem:[%s3 + $0x100] sm:$0xff]
      %v3899 = vld [vmem:[%s3 + $0x108] sm:$0xff]
      %v3900 = vld [vmem:[%s3 + $0x110] sm:$0xff]
      %v3901 = vld [vmem:[%s3 + $0x118] sm:$0xff]
      %v3902 = vld [vmem:[%s3 + $0x120] sm:$0xff]
      %v3903 = vld [vmem:[%s3 + $0x128] sm:$0xff]
      %v3904 = vld [vmem:[%s3 + $0x130] sm:$0xff]
      %v3905 = vld [vmem:[%s3 + $0x138] sm:$0xff]
      %v3906 = vld [vmem:[%s3 + $0x140] sm:$0xff]
      %v3907 = vld [vmem:[%s3 + $0x148] sm:$0xff]
      %v3908 = vld [vmem:[%s3 + $0x150] sm:$0xff]
      %v3909 = vld [vmem:[%s3 + $0x158] sm:$0xff]
      %v3910 = vld [vmem:[%s3 + $0x160] sm:$0xff]
      %v3911 = vld [vmem:[%s3 + $0x168] sm:$0xff]
      %v3912 = vld [vmem:[%s3 + $0x170] sm:$0xff]
      %v3913 = vld [vmem:[%s3 + $0x178] sm:$0xff]
      %v3914 = vld [vmem:[%s3 + $0x180] sm:$0xff]
      %v3915 = vld [vmem:[%s3 + $0x188] sm:$0xff]
      %v3916 = vld [vmem:[%s3 + $0x190] sm:$0xff]
      %v3917 = vld [vmem:[%s3 + $0x198] sm:$0xff]
      %v3918 = vld [vmem:[%s3 + $0x1a0] sm:$0xff]
      %v3919 = vld [vmem:[%s3 + $0x1a8] sm:$0xff]
      %v3920 = vld [vmem:[%s3 + $0x1b0] sm:$0xff]
      %v3921 = vld [vmem:[%s3 + $0x1b8] sm:$0xff]
      %v3922 = vld [vmem:[%s3 + $0x1c0] sm:$0xff]
      %v3923 = vld [vmem:[%s3 + $0x1c8] sm:$0xff]
      %v3924 = vld [vmem:[%s3 + $0x1d0] sm:$0xff]
      %v3925 = vld [vmem:[%s3 + $0x1d8] sm:$0xff]
      %v3926 = vld [vmem:[%s3 + $0x1e0] sm:$0xff]
      %v3927 = vld [vmem:[%s3 + $0x1e8] sm:$0xff]
      %v3928 = vld [vmem:[%s3 + $0x1f0] sm:$0xff]
      %v3929 = vld [vmem:[%s3 + $0x1f8] sm:$0xff]
      %v3930 = vld [vmem:[%s3 + $0x200] sm:$0xff]
      %v3931 = vld [vmem:[%s3 + $0x208] sm:$0xff]
      %v3932 = vld [vmem:[%s3 + $0x210] sm:$0xff]
      %v3933 = vld [vmem:[%s3 + $0x218] sm:$0xff]
      %v3934 = vld [vmem:[%s3 + $0x220] sm:$0xff]
      %v3935 = vld [vmem:[%s3 + $0x228] sm:$0xff]
      %v3936 = vld [vmem:[%s3 + $0x230] sm:$0xff]
      %v3937 = vld [vmem:[%s3 + $0x238] sm:$0xff]
      %v3938 = vld [vmem:[%s3 + $0x240] sm:$0xff]
      %v3939 = vld [vmem:[%s3 + $0x248] sm:$0xff]
      %v3940 = vld [vmem:[%s3 + $0x250] sm:$0xff]
      %v3941 = vld [vmem:[%s3 + $0x258] sm:$0xff]
      %v3942 = vld [vmem:[%s3 + $0x260] sm:$0xff]
      %v3943 = vld [vmem:[%s3 + $0x268] sm:$0xff]
      %v3944 = vld [vmem:[%s3 + $0x270] sm:$0xff]
      %v3945 = vld [vmem:[%s3 + $0x278] sm:$0xff]
      %v3946 = vperm.slane %v3865, 0
      %3947 = vmatpush.msra.mxu0 %v3881
      %3948 = vmatpush.msra.mxu0 %v3880
      %3949 = vmatpush.msra.mxu0 %v3879
      %3950 = vmatpush.msra.mxu0 %v3878
      %3951 = vmatpush.msra.mxu0 %v3877
      %3952 = vmatpush.msra.mxu0 %v3876
      %3953 = vmatpush.msra.mxu0 %v3875
      %3954 = vmatpush.msra.mxu0 %v3874
      %3955 = vmatpush.msra.mxu0 %v3873
      %3956 = vmatpush.msra.mxu0 %v3872
      %3957 = vmatpush.msra.mxu0 %v3871
      %3958 = vmatpush.msra.mxu0 %v3870
      %3959 = vmatpush.msra.mxu0 %v3869
      %3960 = vmatpush.msra.mxu0 %v3868
      %3961 = vmatpush.msra.mxu0 %v3867
      %3962 = vmatpush.msra.mxu0 %v3866
      %3963 = vmatmul.f32.gmra.mxu0 %v3800
      %v3964 = vpop.f32.mrf.mxu0
      %v3965 = vadd.f32 %v3946, %v3964
      %3966 = vdwg.mxu0
      %3967 = vmatpush.msra.mxu0 %v3897
      %3968 = vmatpush.msra.mxu0 %v3896
      %3969 = vmatpush.msra.mxu0 %v3895
      %3970 = vmatpush.msra.mxu0 %v3894
      %3971 = vmatpush.msra.mxu0 %v3893
      %3972 = vmatpush.msra.mxu0 %v3892
      %3973 = vmatpush.msra.mxu0 %v3891
      %3974 = vmatpush.msra.mxu0 %v3890
      %3975 = vmatpush.msra.mxu0 %v3889
      %3976 = vmatpush.msra.mxu0 %v3888
      %3977 = vmatpush.msra.mxu0 %v3887
      %3978 = vmatpush.msra.mxu0 %v3886
      %3979 = vmatpush.msra.mxu0 %v3885
      %3980 = vmatpush.msra.mxu0 %v3884
      %3981 = vmatpush.msra.mxu0 %v3883
      %3982 = vmatpush.msra.mxu0 %v3882
      %3983 = vmatmul.f32.gmra.mxu0 %v3816
      %v3984 = vpop.f32.mrf.mxu0
      %v3985 = vadd.f32 %v3965, %v3984
      %3986 = vdwg.mxu0
      %3987 = vmatpush.msra.mxu0 %v3913
      %3988 = vmatpush.msra.mxu0 %v3912
      %3989 = vmatpush.msra.mxu0 %v3911
      %3990 = vmatpush.msra.mxu0 %v3910
      %3991 = vmatpush.msra.mxu0 %v3909
      %3992 = vmatpush.msra.mxu0 %v3908
      %3993 = vmatpush.msra.mxu0 %v3907
      %3994 = vmatpush.msra.mxu0 %v3906
      %3995 = vmatpush.msra.mxu0 %v3905
      %3996 = vmatpush.msra.mxu0 %v3904
      %3997 = vmatpush.msra.mxu0 %v3903
      %3998 = vmatpush.msra.mxu0 %v3902
      %3999 = vmatpush.msra.mxu0 %v3901
      %4000 = vmatpush.msra.mxu0 %v3900
      %4001 = vmatpush.msra.mxu0 %v3899
      %4002 = vmatpush.msra.mxu0 %v3898
      %4003 = vmatmul.f32.gmra.mxu0 %v3832
      %v4004 = vpop.f32.mrf.mxu0
      %v4005 = vadd.f32 %v3985, %v4004
      %4006 = vdwg.mxu0
      %4007 = vmatpush.msra.mxu0 %v3929
      %4008 = vmatpush.msra.mxu0 %v3928
      %4009 = vmatpush.msra.mxu0 %v3927
      %4010 = vmatpush.msra.mxu0 %v3926
      %4011 = vmatpush.msra.mxu0 %v3925
      %4012 = vmatpush.msra.mxu0 %v3924
      %4013 = vmatpush.msra.mxu0 %v3923
      %4014 = vmatpush.msra.mxu0 %v3922
      %4015 = vmatpush.msra.mxu0 %v3921
      %4016 = vmatpush.msra.mxu0 %v3920
      %4017 = vmatpush.msra.mxu0 %v3919
      %4018 = vmatpush.msra.mxu0 %v3918
      %4019 = vmatpush.msra.mxu0 %v3917
      %4020 = vmatpush.msra.mxu0 %v3916
      %4021 = vmatpush.msra.mxu0 %v3915
      %4022 = vmatpush.msra.mxu0 %v3914
      %4023 = vmatmul.f32.gmra.mxu0 %v3848
      %v4024 = vpop.f32.mrf.mxu0
      %v4025 = vadd.f32 %v4005, %v4024
      %4026 = vdwg.mxu0
      %4027 = vmatpush.msra.mxu0 %v3945
      %4028 = vmatpush.msra.mxu0 %v3944
      %4029 = vmatpush.msra.mxu0 %v3943
      %4030 = vmatpush.msra.mxu0 %v3942
      %4031 = vmatpush.msra.mxu0 %v3941
      %4032 = vmatpush.msra.mxu0 %v3940
      %4033 = vmatpush.msra.mxu0 %v3939
      %4034 = vmatpush.msra.mxu0 %v3938
      %4035 = vmatpush.msra.mxu0 %v3937
      %4036 = vmatpush.msra.mxu0 %v3936
      %4037 = vmatpush.msra.mxu0 %v3935
      %4038 = vmatpush.msra.mxu0 %v3934
      %4039 = vmatpush.msra.mxu0 %v3933
      %4040 = vmatpush.msra.mxu0 %v3932
      %4041 = vmatpush.msra.mxu0 %v3931
      %4042 = vmatpush.msra.mxu0 %v3930
      %4043 = vmatmul.f32.gmra.mxu0 %v3864
      %v4044 = vpop.f32.mrf.mxu0
      %v4045 = vadd.f32 %v4025, %v4044
      %4046 = vdwg.mxu0
      %v4047 = vmax.f32 %v4045, 0.0
      %v4048 = vld [vmem:[%s4 + $0x8] sm:$0xff]
      %v4049 = vld [vmem:[%s4 + $0x10] sm:$0xff]
      %v4050 = vld [vmem:[%s4 + $0x18] sm:$0xff]
      %v4051 = vld [vmem:[%s4 + $0x20] sm:$0xff]
      %v4052 = vld [vmem:[%s4 + $0x28] sm:$0xff]
      %v4053 = vld [vmem:[%s4 + $0x30] sm:$0xff]
      %v4054 = vld [vmem:[%s4 + $0x38] sm:$0xff]
      %v4055 = vld [vmem:[%s4 + $0x40] sm:$0xff]
      %v4056 = vld [vmem:[%s4 + $0x48] sm:$0xff]
      %v4057 = vld [vmem:[%s4 + $0x50] sm:$0xff]
      %v4058 = vld [vmem:[%s4 + $0x58] sm:$0xff]
      %v4059 = vld [vmem:[%s4 + $0x60] sm:$0xff]
      %v4060 = vld [vmem:[%s4 + $0x68] sm:$0xff]
      %v4061 = vld [vmem:[%s4 + $0x70] sm:$0xff]
      %v4062 = vld [vmem:[%s4 + $0x78] sm:$0xff]
      %v4063 = vld [vmem:[%s4 + $0x80] sm:$0xff]
      %v4064 = vld [vmem:[%s4 + $0x3] sm:$0x1]
      %v4065 = vperm.slane %v4064, 0
      %4066 = vmatpush.msra.mxu0 %v4063
      %4067 = vmatpush.msra.mxu0 %v4062
      %4068 = vmatpush.msra.mxu0 %v4061
      %4069 = vmatpush.msra.mxu0 %v4060
      %4070 = vmatpush.msra.mxu0 %v4059
      %4071 = vmatpush.msra.mxu0 %v4058
      %4072 = vmatpush.msra.mxu0 %v4057
      %4073 = vmatpush.msra.mxu0 %v4056
      %4074 = vmatpush.msra.mxu0 %v4055
      %4075 = vmatpush.msra.mxu0 %v4054
      %4076 = vmatpush.msra.mxu0 %v4053
      %4077 = vmatpush.msra.mxu0 %v4052
      %4078 = vmatpush.msra.mxu0 %v4051
      %4079 = vmatpush.msra.mxu0 %v4050
      %4080 = vmatpush.msra.mxu0 %v4049
      %4081 = vmatpush.msra.mxu0 %v4048
      %4082 = vmatmul.f32.gmra.mxu0 %v4047
      %v4083 = vpop.f32.mrf.mxu0
      %v4084 = vadd.f32 %v4065, %v4083
      %4085 = vdwg.mxu0
      %v4086 = vmax.f32 %v4084, 0.0
      %v4087 = vld [vmem:[%s4 + $0x88] sm:$0xff]
      %v4088 = vld [vmem:[%s4 + $0x90] sm:$0xff]
      %v4089 = vld [vmem:[%s4 + $0x98] sm:$0xff]
      %v4090 = vld [vmem:[%s4 + $0xa0] sm:$0xff]
      %v4091 = vld [vmem:[%s4 + $0xa8] sm:$0xff]
      %v4092 = vld [vmem:[%s4 + $0xb0] sm:$0xff]
      %v4093 = vld [vmem:[%s4 + $0xb8] sm:$0xff]
      %v4094 = vld [vmem:[%s4 + $0xc0] sm:$0xff]
      %v4095 = vld [vmem:[%s4 + $0xc8] sm:$0xff]
      %v4096 = vld [vmem:[%s4 + $0xd0] sm:$0xff]
      %v4097 = vld [vmem:[%s4 + $0xd8] sm:$0xff]
      %v4098 = vld [vmem:[%s4 + $0xe0] sm:$0xff]
      %v4099 = vld [vmem:[%s4 + $0xe8] sm:$0xff]
      %v4100 = vld [vmem:[%s4 + $0xf0] sm:$0xff]
      %v4101 = vld [vmem:[%s4 + $0xf8] sm:$0xff]
      %v4102 = vld [vmem:[%s4 + $0x100] sm:$0xff]
      %v4103 = vld [vmem:[%s4 + $0x4] sm:$0x1]
      %v4104 = vperm.slane %v4103, 0
      %4105 = vmatpush.msra.mxu0 %v4102
      %4106 = vmatpush.msra.mxu0 %v4101
      %4107 = vmatpush.msra.mxu0 %v4100
      %4108 = vmatpush.msra.mxu0 %v4099
      %4109 = vmatpush.msra.mxu0 %v4098
      %4110 = vmatpush.msra.mxu0 %v4097
      %4111 = vmatpush.msra.mxu0 %v4096
      %4112 = vmatpush.msra.mxu0 %v4095
      %4113 = vmatpush.msra.mxu0 %v4094
      %4114 = vmatpush.msra.mxu0 %v4093
      %4115 = vmatpush.msra.mxu0 %v4092
      %4116 = vmatpush.msra.mxu0 %v4091
      %4117 = vmatpush.msra.mxu0 %v4090
      %4118 = vmatpush.msra.mxu0 %v4089
      %4119 = vmatpush.msra.mxu0 %v4088
      %4120 = vmatpush.msra.mxu0 %v4087
      %4121 = vmatmul.f32.gmra.mxu0 %v4086
      %v4122 = vpop.f32.mrf.mxu0
      %v4123 = vadd.f32 %v4104, %v4122
      %4124 = vdwg.mxu0
      %vm4125 = vcmask 31744
      %4126 = vst.msk [vmem:[%s224] sm:$0xff] %vm4125, %v4123
      %p4127 = scmp.lt.s32.totalorder %s16, 1
      %s4128 = scalar_select %p4127, %s16, 1
      %s4129 = smul.addr %s4128, 8
      %s4130 = scalar_lea.vmem %s5, %s4129
      // Predicated region
      $region41: #{lenet_pallas_forward.1} parent=39 // pred_check
        %p4131 = pneg %p144
      $region42: #{lenet_pallas_forward.1} parent=39 // pred_check_branch
        %4133 = sbr.rel (%p4131) target = $region44
      $region43: #{lenet_pallas_forward.1} parent=39 // pred_region
        _
      $region44: #{lenet_pallas_forward.1} parent=39 // pred_fallthru
        _
    $region40: #{lenet_pallas_forward.1} parent=5 // pred_fallthru
      _
    %p4134 = scmp.le.s32.totalorder 2, %s11
    // Predicated region
    $region45: #{lenet_pallas_forward.1} parent=5 // pred_check
      %p4135 = pneg %p4134
    $region46: #{lenet_pallas_forward.1} parent=5 // pred_check_branch
      %4137 = sbr.rel (%p4135) target = $region48
    $region47: #{lenet_pallas_forward.1} parent=5 // pred_region
      %s4138 = ssub.s32 %s11, 2
      // Predicated region
      $region49: #{lenet_pallas_forward.1} parent=47 // pred_check
        %p4139 = pneg %p150
      $region50: #{lenet_pallas_forward.1} parent=47 // pred_check_branch
        %4141 = sbr.rel (%p4139) target = $region52
      $region51: #{lenet_pallas_forward.1} parent=47 // pred_region
        %p4142 = scmp.lt.s32.totalorder %s17, 1
        %s4143 = scalar_select %p4142, %s17, 1
        %s4144 = smul.addr %s4143, 8
        %s4145 = scalar_lea.vmem %s5, %s4144
      $region52: #{lenet_pallas_forward.1} parent=47 // pred_fallthru
        _
    $region48: #{lenet_pallas_forward.1} parent=5 // pred_fallthru
      _
  $region6: #{lenet_pallas_forward.1} parent=0 // loop_footer
    %s15 = sadd.s32 1, %s11
  $region7: #{lenet_pallas_forward.1} parent=0 // loop_footer_branch
    %10 = sbr.rel target = $region3
  $region8: #{lenet_pallas_forward.1} parent=0 // loop_exit
    _

</llo_original>
